<compile_context>
chip_gen: v6e
topology: v6e:2x2x1
jax: 0.10.0
libtpu: 0.0.40
codegen_flags: <defaults>
</compile_context>

<pallas_src>
import functools
import math

import jax
import jax.numpy as jnp
import numpy as np
from jax import lax
from jax.experimental import pallas as pl
from jax.experimental.pallas import tpu as pltpu

EPS = 1e-5


# --------------------------------- kernel ------------------------------------

def _masking1_kernel(x_ref, masks_ref,
                     w1a_ref, b1a_ref, w1b_ref, b1b_ref, w1d_ref, b1d_ref,
                     w2a_ref, b2a_ref, w2b_ref, b2b_ref, w2d_ref, b2d_ref,
                     o_ref, taps_ref, *, H, W):
    x = x_ref[0].astype(jnp.float32)          # (C_in, L): sublanes = channels, lanes = batch*H*W
    L = x.shape[-1]

    # Static 3x3 tap shifts (lane rolls).  Any wrap across an image / row boundary lands on a
    # position whose border mask is 0, so roll wrap-around is harmless.
    shifts = [(-(dy * W + dx)) % L for dy in (-1, 0, 1) for dx in (-1, 0, 1)]

    def conv3x3_bn(a, w_ref, b_ref):
        # One fused MXU contraction per conv: stage the 9 shifted+masked taps into the bf16
        # scratch at sublane offset t*Cin, then (Cout, 9*Cin) @ (9*Cin, L), f32 accumulation.
        cin = a.shape[0]
        for t in range(9):
            shifted = pltpu.roll(a, shifts[t], axis=1) if shifts[t] else a
            taps_ref[t * cin:(t + 1) * cin, :] = (shifted * masks_ref[t]).astype(jnp.bfloat16)
        y = jnp.dot(w_ref[...], taps_ref[0:9 * cin, :], preferred_element_type=jnp.float32)
        return y + b_ref[...]                  # folded BN shift (exactly 0 for fresh stats)

    def conv1x1_bn(a, w_ref, b_ref):
        y = jnp.dot(w_ref[...], a.astype(jnp.bfloat16), preferred_element_type=jnp.float32)
        return y + b_ref[...]

    # ---- BasicBlock 1: C -> 2C (downsample = conv1x1 + BN) ----
    idn1 = conv1x1_bn(x, w1d_ref, b1d_ref)
    h1 = jnp.maximum(conv3x3_bn(x, w1a_ref, b1a_ref), 0.0)
    x1 = jnp.maximum(conv3x3_bn(h1, w1b_ref, b1b_ref) + idn1, 0.0)

    # ---- BasicBlock 2: 2C -> C ----
    idn2 = conv1x1_bn(x1, w2d_ref, b2d_ref)
    h2 = jnp.maximum(conv3x3_bn(x1, w2a_ref, b2a_ref), 0.0)
    x2 = jnp.maximum(conv3x3_bn(h2, w2b_ref, b2b_ref) + idn2, 0.0)

    # ---- softmax over channels: cross-sublane (XLU) reductions + exact divide ----
    m = jnp.max(x2, axis=0, keepdims=True)
    e = jnp.exp(x2 - m)
    s = jnp.sum(e, axis=0, keepdims=True)
    o_ref[0] = (e / s).astype(o_ref.dtype)


# -------------------------------- wrapper -------------------------------------

def _const_spec(shape):
    nd = len(shape)
    return pl.BlockSpec(tuple(shape), lambda b, _nd=nd: (0,) * _nd)


def _make_tap_masks(H, W, images_per_block):
    """(9, 1, images_per_block*H*W) f32 border masks; also seal image boundaries in the fused
    lane axis, so lane rolls never leak data between images of the same block."""
    hw = H * W
    L = images_per_block * hw
    pos = np.arange(L) % hw
    yy, xx = pos // W, pos % W
    masks = np.empty((9, 1, L), np.float32)
    t = 0
    for dy in (-1, 0, 1):
        for dx in (-1, 0, 1):
            valid = ((yy + dy >= 0) & (yy + dy < H) & (xx + dx >= 0) & (xx + dx < W))
            masks[t, 0] = valid.astype(np.float32)
            t += 1
    return jnp.asarray(masks)


def _tensorcores_per_chip():
    try:
        kind = jax.devices()[0].device_kind.lower()
    except Exception:
        return 1
    return 2 if ("v7" in kind or "7x" in kind) else 1


def masking1_forward(x_nchw, params, *, num_blocks=None):
    """x_nchw: (N, C, H, W) float32 -> (N, C, H, W), softmax over channels."""
    n, c, h, w = x_nchw.shape
    hw = h * w
    if num_blocks is None:
        # Full batch fusion (1 grid step) on single-TC chips; 2-way parallel split on v7x so
        # both TensorCores get used on this latency-bound kernel.
        num_blocks = 2 if (_tensorcores_per_chip() >= 2 and n >= 2 and n % 2 == 0) else 1
    assert n % num_blocks == 0
    ips = n // num_blocks                       # images fused onto the lane axis per grid step
    l_blk = ips * hw

    # (N, C, H, W) -> (num_blocks, C, ips*HW): lane axis is image-major, pixel-minor.
    xf = (x_nchw.reshape(num_blocks, ips, c, hw)
                .transpose(0, 2, 1, 3)
                .reshape(num_blocks, c, l_blk))
    masks = _make_tap_masks(h, w, ips)

    p1, p2 = params['block1'], params['block2']
    flat = (p1['wa'], p1['ba'], p1['wb'], p1['bb'], p1['wd'], p1['bd'],
            p2['wa'], p2['ba'], p2['wb'], p2['bb'], p2['wd'], p2['bd'])

    data_spec = pl.BlockSpec((1, c, l_blk), lambda b: (b, 0, 0))
    out = pl.pallas_call(
        functools.partial(_masking1_kernel, H=h, W=w),
        out_shape=jax.ShapeDtypeStruct((num_blocks, c, l_blk), x_nchw.dtype),
        grid=(num_blocks,),
        in_specs=[data_spec, _const_spec(masks.shape)] + [_const_spec(a.shape) for a in flat],
        out_specs=data_spec,
        scratch_shapes=[pltpu.VMEM((9 * 2 * c, l_blk), jnp.bfloat16)],   # stacked-tap staging
        compiler_params=pltpu.CompilerParams(dimension_semantics=("parallel",)),
    )(xf, masks, *flat)

    return (out.reshape(num_blocks, c, ips, hw)
               .transpose(0, 2, 1, 3)
               .reshape(n, c, h, w))


# ----------------------------- parameter setup --------------------------------

def make_masking1_params(key, in_channels, *, zero_init_bn2=True):
    """Raw f32 torch-layout parameters matching Masking1.__init__ (kaiming fan_out/relu conv
    weights, BN weight=1 / bias=0, and every BasicBlock's bn2.weight explicitly zeroed)."""
    c0, c1 = in_channels, 2 * in_channels

    def kaiming(k, shape):                       # kaiming_normal_(mode='fan_out', relu)
        fan_out = shape[0] * (shape[2] * shape[3] if len(shape) == 4 else 1)
        return jax.random.normal(k, shape, jnp.float32) * math.sqrt(2.0 / fan_out)

    def block(k, cin, cout):
        k1, k2, k3 = jax.random.split(k, 3)
        g2 = jnp.zeros if zero_init_bn2 else jnp.ones
        return dict(w1=kaiming(k1, (cout, cin, 3, 3)),
                    w2=kaiming(k2, (cout, cout, 3, 3)),
                    wd=kaiming(k3, (cout, cin)),          # conv1x1 weight (Cout, Cin)
                    g1=jnp.ones((cout,), jnp.float32),
                    g2=g2((cout,), jnp.float32),
                    gd=jnp.ones((cout,), jnp.float32))

    kb1, kb2 = jax.random.split(key)
    return dict(block1=block(kb1, c0, c1), block2=block(kb2, c1, c0))


def fold_masking1_params(raw):
    """Fold eval-mode BN (running_mean=0, running_var=1, beta=0) into the conv weights and lay
    3x3 weights out for the fused stacked-tap matmul: (Cout, 9*Cin), column index t*Cin + ci."""
    def scale_shift(gamma):
        s = gamma / jnp.sqrt(1.0 + EPS)
        return s, jnp.zeros_like(gamma)          # shift = beta - mean * scale == 0

    def fuse3x3(w, gamma):
        s, sh = scale_shift(gamma)
        cout, cin = w.shape[0], w.shape[1]
        wf = (w * s[:, None, None, None]).transpose(0, 2, 3, 1).reshape(cout, 9 * cin)
        return wf.astype(jnp.bfloat16), sh[:, None]

    def fuse1x1(w, gamma):
        s, sh = scale_shift(gamma)
        return (w * s[:, None]).astype(jnp.bfloat16), sh[:, None]

    def fold_block(p):
        wa, ba = fuse3x3(p['w1'], p['g1'])
        wb, bb = fuse3x3(p['w2'], p['g2'])
        wd, bd = fuse1x1(p['wd'], p['gd'])
        return dict(wa=wa, ba=ba, wb=wb, bb=bb, wd=wd, bd=bd)

    return dict(block1=fold_block(raw['block1']), block2=fold_block(raw['block2']))


# ------------------------------ pure-JAX reference -----------------------------

def masking1_reference(x, raw):
    """f32 reference for Masking1.forward (eval-mode BN with fresh running stats)."""
    def bn(y, gamma):
        return y * (gamma / jnp.sqrt(1.0 + EPS))[None, :, None, None]

    def conv(y, w):
        return lax.conv_general_dilated(y, w, (1, 1), 'SAME',
                                        dimension_numbers=('NCHW', 'OIHW', 'NCHW'),
                                        precision=lax.Precision.HIGHEST)

    def block(y, p):
        idn = bn(conv(y, p['wd'][:, :, None, None]), p['gd'])
        h = jax.nn.relu(bn(conv(y, p['w1']), p['g1']))
        h = bn(conv(h, p['w2']), p['g2'])
        return jax.nn.relu(h + idn)

    return jax.nn.softmax(block(block(x, raw['block1']), raw['block2']), axis=1)


# ----------------------------------- main --------------------------------------

if __name__ == "__main__":
    key = jax.random.PRNGKey(0)
    k_in, k_par = jax.random.split(key)

    N, C, H, W = 2, 4, 16, 16
    x = jax.random.normal(k_in, (N, C, H, W), jnp.float32)

    fwd = jax.jit(masking1_forward)

    # 1) Faithful module init (bn2.weight explicitly zeroed, as in Masking1.__init__).
    raw = make_masking1_params(k_par, C)
    out = jax.block_until_ready(fwd(x, fold_masking1_params(raw)))
    assert out.shape == (N, C, H, W)
    assert bool(jnp.all(jnp.isfinite(out)))
    assert bool(jnp.allclose(out.sum(axis=1), 1.0, atol=1e-4))          # exact softmax divide
    err = float(jnp.max(jnp.abs(out - masking1_reference(x, raw))))
    assert err < 5e-2, f"faithful-init mismatch vs reference: {err}"

    # 2) Same kernel with bn2.weight = 1 so the fused stacked-tap 3x3 path is exercised too.
    raw2 = make_masking1_params(k_par, C, zero_init_bn2=False)
    out2 = jax.block_until_ready(fwd(x, fold_masking1_params(raw2)))
    err2 = float(jnp.max(jnp.abs(out2 - masking1_reference(x, raw2))))
    assert err2 < 8e-2, f"bn2=1 variant mismatch vs reference: {err2}"

    print("KERNEL_OK")
</pallas_src>

<mosaic_0001>
module attributes {stable_mosaic.version = 11 : i64} {
  func.func @_masking1_kernel(%arg0: i32, %arg1: memref<1x4x512xf32, #tpu.memory_space<vmem>>, %arg2: memref<9x1x512xf32, #tpu.memory_space<vmem>>, %arg3: memref<8x36xbf16, #tpu.memory_space<vmem>>, %arg4: memref<8x1xf32, #tpu.memory_space<vmem>>, %arg5: memref<8x72xbf16, #tpu.memory_space<vmem>>, %arg6: memref<8x1xf32, #tpu.memory_space<vmem>>, %arg7: memref<8x4xbf16, #tpu.memory_space<vmem>>, %arg8: memref<8x1xf32, #tpu.memory_space<vmem>>, %arg9: memref<4x72xbf16, #tpu.memory_space<vmem>>, %arg10: memref<4x1xf32, #tpu.memory_space<vmem>>, %arg11: memref<4x36xbf16, #tpu.memory_space<vmem>>, %arg12: memref<4x1xf32, #tpu.memory_space<vmem>>, %arg13: memref<4x8xbf16, #tpu.memory_space<vmem>>, %arg14: memref<4x1xf32, #tpu.memory_space<vmem>>, %arg15: memref<1x4x512xf32, #tpu.memory_space<vmem>>, %arg16: memref<72x512xbf16, #tpu.memory_space<vmem>>) attributes {dimension_semantics = [#tpu.dimension_semantics<parallel>], iteration_bounds = array<i64: 1>, scalar_prefetch = 0 : i64, scratch_operands = 1 : i64, tpu.core_type = #tpu.core_type<tc>, window_params = [{transform_indices = @transform_0, window_bounds = array<i64: 1, 4, 512>}, {pipeline_mode = #tpu.pipeline_mode<synchronous>, transform_indices = @transform_1, window_bounds = array<i64: 9, 1, 512>}, {pipeline_mode = #tpu.pipeline_mode<synchronous>, transform_indices = @transform_2, window_bounds = array<i64: 8, 36>}, {pipeline_mode = #tpu.pipeline_mode<synchronous>, transform_indices = @transform_3, window_bounds = array<i64: 8, 1>}, {pipeline_mode = #tpu.pipeline_mode<synchronous>, transform_indices = @transform_4, window_bounds = array<i64: 8, 72>}, {pipeline_mode = #tpu.pipeline_mode<synchronous>, transform_indices = @transform_5, window_bounds = array<i64: 8, 1>}, {pipeline_mode = #tpu.pipeline_mode<synchronous>, transform_indices = @transform_6, window_bounds = array<i64: 8, 4>}, {pipeline_mode = #tpu.pipeline_mode<synchronous>, transform_indices = @transform_7, window_bounds = array<i64: 8, 1>}, {pipeline_mode = #tpu.pipeline_mode<synchronous>, transform_indices = @transform_8, window_bounds = array<i64: 4, 72>}, {pipeline_mode = #tpu.pipeline_mode<synchronous>, transform_indices = @transform_9, window_bounds = array<i64: 4, 1>}, {pipeline_mode = #tpu.pipeline_mode<synchronous>, transform_indices = @transform_10, window_bounds = array<i64: 4, 36>}, {pipeline_mode = #tpu.pipeline_mode<synchronous>, transform_indices = @transform_11, window_bounds = array<i64: 4, 1>}, {pipeline_mode = #tpu.pipeline_mode<synchronous>, transform_indices = @transform_12, window_bounds = array<i64: 4, 8>}, {pipeline_mode = #tpu.pipeline_mode<synchronous>, transform_indices = @transform_13, window_bounds = array<i64: 4, 1>}, {transform_indices = @transform_14, window_bounds = array<i64: 1, 4, 512>}]} {
    %c0 = arith.constant 0 : index
    %c0_0 = arith.constant 0 : index
    %c0_1 = arith.constant 0 : index
    %0 = vector.load %arg1[%c0, %c0_0, %c0_1] : memref<1x4x512xf32, #tpu.memory_space<vmem>>, vector<1x4x512xf32>
    %1 = vector.shape_cast %0 : vector<1x4x512xf32> to vector<4x512xf32>
    %c0_2 = arith.constant 0 : index
    %c0_3 = arith.constant 0 : index
    %2 = vector.load %arg7[%c0_2, %c0_3] : memref<8x4xbf16, #tpu.memory_space<vmem>>, vector<8x4xbf16>
    %3 = arith.truncf %1 : vector<4x512xf32> to vector<4x512xbf16>
    %cst = arith.constant dense<0.000000e+00> : vector<8x512xf32>
    %4 = tpu.matmul %2, %3, %cst {dimension_numbers = #tpu.dot_dimension_numbers<[1], [0], [0], [1], [0, 0, 1, 1], [], []>} : vector<8x4xbf16>, vector<4x512xbf16>, vector<8x512xf32> -> vector<8x512xf32>
    %c0_4 = arith.constant 0 : index
    %c0_5 = arith.constant 0 : index
    %5 = vector.load %arg8[%c0_4, %c0_5] : memref<8x1xf32, #tpu.memory_space<vmem>>, vector<8x1xf32>
    %6 = vector.broadcast %5 : vector<8x1xf32> to vector<8x512xf32>
    %7 = arith.addf %4, %6 : vector<8x512xf32>
    %c17_i32 = arith.constant 17 : i32
    %8 = tpu.dynamic_rotate %1 by %c17_i32 dim 1 : vector<4x512xf32>, i32 -> vector<4x512xf32>
    %c0_6 = arith.constant 0 : index
    %c0_7 = arith.constant 0 : index
    %c0_8 = arith.constant 0 : index
    %9 = vector.load %arg2[%c0_6, %c0_7, %c0_8] : memref<9x1x512xf32, #tpu.memory_space<vmem>>, vector<1x1x512xf32>
    %10 = vector.shape_cast %9 : vector<1x1x512xf32> to vector<1x512xf32>
    %11 = vector.broadcast %10 : vector<1x512xf32> to vector<4x512xf32>
    %12 = arith.mulf %8, %11 : vector<4x512xf32>
    %13 = arith.truncf %12 : vector<4x512xf32> to vector<4x512xbf16>
    %c0_9 = arith.constant 0 : index
    %c0_10 = arith.constant 0 : index
    %14 = vector.load %arg16[%c0_9, %c0_10] : memref<72x512xbf16, #tpu.memory_space<vmem>>, vector<4x512xbf16>
    tpu.vector_store %arg16[%c0_9, %c0_10], %13 {strides = array<i32>} : memref<72x512xbf16, #tpu.memory_space<vmem>>, vector<4x512xbf16>,
    %c16_i32 = arith.constant 16 : i32
    %15 = tpu.dynamic_rotate %1 by %c16_i32 dim 1 : vector<4x512xf32>, i32 -> vector<4x512xf32>
    %c1 = arith.constant 1 : index
    %c0_11 = arith.constant 0 : index
    %c0_12 = arith.constant 0 : index
    %16 = vector.load %arg2[%c1, %c0_11, %c0_12] : memref<9x1x512xf32, #tpu.memory_space<vmem>>, vector<1x1x512xf32>
    %17 = vector.shape_cast %16 : vector<1x1x512xf32> to vector<1x512xf32>
    %18 = vector.broadcast %17 : vector<1x512xf32> to vector<4x512xf32>
    %19 = arith.mulf %15, %18 : vector<4x512xf32>
    %20 = arith.truncf %19 : vector<4x512xf32> to vector<4x512xbf16>
    %c4 = arith.constant 4 : index
    %c0_13 = arith.constant 0 : index
    %21 = vector.load %arg16[%c4, %c0_13] : memref<72x512xbf16, #tpu.memory_space<vmem>>, vector<4x512xbf16>
    tpu.vector_store %arg16[%c4, %c0_13], %20 {strides = array<i32>} : memref<72x512xbf16, #tpu.memory_space<vmem>>, vector<4x512xbf16>,
    %c15_i32 = arith.constant 15 : i32
    %22 = tpu.dynamic_rotate %1 by %c15_i32 dim 1 : vector<4x512xf32>, i32 -> vector<4x512xf32>
    %c2 = arith.constant 2 : index
    %c0_14 = arith.constant 0 : index
    %c0_15 = arith.constant 0 : index
    %23 = vector.load %arg2[%c2, %c0_14, %c0_15] : memref<9x1x512xf32, #tpu.memory_space<vmem>>, vector<1x1x512xf32>
    %24 = vector.shape_cast %23 : vector<1x1x512xf32> to vector<1x512xf32>
    %25 = vector.broadcast %24 : vector<1x512xf32> to vector<4x512xf32>
    %26 = arith.mulf %22, %25 : vector<4x512xf32>
    %27 = arith.truncf %26 : vector<4x512xf32> to vector<4x512xbf16>
    %c8 = arith.constant 8 : index
    %c0_16 = arith.constant 0 : index
    %28 = vector.load %arg16[%c8, %c0_16] : memref<72x512xbf16, #tpu.memory_space<vmem>>, vector<4x512xbf16>
    tpu.vector_store %arg16[%c8, %c0_16], %27 {strides = array<i32>} : memref<72x512xbf16, #tpu.memory_space<vmem>>, vector<4x512xbf16>,
    %c1_i32 = arith.constant 1 : i32
    %29 = tpu.dynamic_rotate %1 by %c1_i32 dim 1 : vector<4x512xf32>, i32 -> vector<4x512xf32>
    %c3 = arith.constant 3 : index
    %c0_17 = arith.constant 0 : index
    %c0_18 = arith.constant 0 : index
    %30 = vector.load %arg2[%c3, %c0_17, %c0_18] : memref<9x1x512xf32, #tpu.memory_space<vmem>>, vector<1x1x512xf32>
    %31 = vector.shape_cast %30 : vector<1x1x512xf32> to vector<1x512xf32>
    %32 = vector.broadcast %31 : vector<1x512xf32> to vector<4x512xf32>
    %33 = arith.mulf %29, %32 : vector<4x512xf32>
    %34 = arith.truncf %33 : vector<4x512xf32> to vector<4x512xbf16>
    %c12 = arith.constant 12 : index
    %c0_19 = arith.constant 0 : index
    %35 = vector.load %arg16[%c12, %c0_19] : memref<72x512xbf16, #tpu.memory_space<vmem>>, vector<4x512xbf16>
    tpu.vector_store %arg16[%c12, %c0_19], %34 {strides = array<i32>} : memref<72x512xbf16, #tpu.memory_space<vmem>>, vector<4x512xbf16>,
    %c4_20 = arith.constant 4 : index
    %c0_21 = arith.constant 0 : index
    %c0_22 = arith.constant 0 : index
    %36 = vector.load %arg2[%c4_20, %c0_21, %c0_22] : memref<9x1x512xf32, #tpu.memory_space<vmem>>, vector<1x1x512xf32>
    %37 = vector.shape_cast %36 : vector<1x1x512xf32> to vector<1x512xf32>
    %38 = vector.broadcast %37 : vector<1x512xf32> to vector<4x512xf32>
    %39 = arith.mulf %1, %38 : vector<4x512xf32>
    %40 = arith.truncf %39 : vector<4x512xf32> to vector<4x512xbf16>
    %c16 = arith.constant 16 : index
    %c0_23 = arith.constant 0 : index
    %41 = vector.load %arg16[%c16, %c0_23] : memref<72x512xbf16, #tpu.memory_space<vmem>>, vector<4x512xbf16>
    tpu.vector_store %arg16[%c16, %c0_23], %40 {strides = array<i32>} : memref<72x512xbf16, #tpu.memory_space<vmem>>, vector<4x512xbf16>,
    %c511_i32 = arith.constant 511 : i32
    %42 = tpu.dynamic_rotate %1 by %c511_i32 dim 1 : vector<4x512xf32>, i32 -> vector<4x512xf32>
    %c5 = arith.constant 5 : index
    %c0_24 = arith.constant 0 : index
    %c0_25 = arith.constant 0 : index
    %43 = vector.load %arg2[%c5, %c0_24, %c0_25] : memref<9x1x512xf32, #tpu.memory_space<vmem>>, vector<1x1x512xf32>
    %44 = vector.shape_cast %43 : vector<1x1x512xf32> to vector<1x512xf32>
    %45 = vector.broadcast %44 : vector<1x512xf32> to vector<4x512xf32>
    %46 = arith.mulf %42, %45 : vector<4x512xf32>
    %47 = arith.truncf %46 : vector<4x512xf32> to vector<4x512xbf16>
    %c20 = arith.constant 20 : index
    %c0_26 = arith.constant 0 : index
    %48 = vector.load %arg16[%c20, %c0_26] : memref<72x512xbf16, #tpu.memory_space<vmem>>, vector<4x512xbf16>
    tpu.vector_store %arg16[%c20, %c0_26], %47 {strides = array<i32>} : memref<72x512xbf16, #tpu.memory_space<vmem>>, vector<4x512xbf16>,
    %c497_i32 = arith.constant 497 : i32
    %49 = tpu.dynamic_rotate %1 by %c497_i32 dim 1 : vector<4x512xf32>, i32 -> vector<4x512xf32>
    %c6 = arith.constant 6 : index
    %c0_27 = arith.constant 0 : index
    %c0_28 = arith.constant 0 : index
    %50 = vector.load %arg2[%c6, %c0_27, %c0_28] : memref<9x1x512xf32, #tpu.memory_space<vmem>>, vector<1x1x512xf32>
    %51 = vector.shape_cast %50 : vector<1x1x512xf32> to vector<1x512xf32>
    %52 = vector.broadcast %51 : vector<1x512xf32> to vector<4x512xf32>
    %53 = arith.mulf %49, %52 : vector<4x512xf32>
    %54 = arith.truncf %53 : vector<4x512xf32> to vector<4x512xbf16>
    %c24 = arith.constant 24 : index
    %c0_29 = arith.constant 0 : index
    %55 = vector.load %arg16[%c24, %c0_29] : memref<72x512xbf16, #tpu.memory_space<vmem>>, vector<4x512xbf16>
    tpu.vector_store %arg16[%c24, %c0_29], %54 {strides = array<i32>} : memref<72x512xbf16, #tpu.memory_space<vmem>>, vector<4x512xbf16>,
    %c496_i32 = arith.constant 496 : i32
    %56 = tpu.dynamic_rotate %1 by %c496_i32 dim 1 : vector<4x512xf32>, i32 -> vector<4x512xf32>
    %c7 = arith.constant 7 : index
    %c0_30 = arith.constant 0 : index
    %c0_31 = arith.constant 0 : index
    %57 = vector.load %arg2[%c7, %c0_30, %c0_31] : memref<9x1x512xf32, #tpu.memory_space<vmem>>, vector<1x1x512xf32>
    %58 = vector.shape_cast %57 : vector<1x1x512xf32> to vector<1x512xf32>
    %59 = vector.broadcast %58 : vector<1x512xf32> to vector<4x512xf32>
    %60 = arith.mulf %56, %59 : vector<4x512xf32>
    %61 = arith.truncf %60 : vector<4x512xf32> to vector<4x512xbf16>
    %c28 = arith.constant 28 : index
    %c0_32 = arith.constant 0 : index
    %62 = vector.load %arg16[%c28, %c0_32] : memref<72x512xbf16, #tpu.memory_space<vmem>>, vector<4x512xbf16>
    tpu.vector_store %arg16[%c28, %c0_32], %61 {strides = array<i32>} : memref<72x512xbf16, #tpu.memory_space<vmem>>, vector<4x512xbf16>,
    %c495_i32 = arith.constant 495 : i32
    %63 = tpu.dynamic_rotate %1 by %c495_i32 dim 1 : vector<4x512xf32>, i32 -> vector<4x512xf32>
    %c8_33 = arith.constant 8 : index
    %c0_34 = arith.constant 0 : index
    %c0_35 = arith.constant 0 : index
    %64 = vector.load %arg2[%c8_33, %c0_34, %c0_35] : memref<9x1x512xf32, #tpu.memory_space<vmem>>, vector<1x1x512xf32>
    %65 = vector.shape_cast %64 : vector<1x1x512xf32> to vector<1x512xf32>
    %66 = vector.broadcast %65 : vector<1x512xf32> to vector<4x512xf32>
    %67 = arith.mulf %63, %66 : vector<4x512xf32>
    %68 = arith.truncf %67 : vector<4x512xf32> to vector<4x512xbf16>
    %c32 = arith.constant 32 : index
    %c0_36 = arith.constant 0 : index
    %69 = vector.load %arg16[%c32, %c0_36] : memref<72x512xbf16, #tpu.memory_space<vmem>>, vector<4x512xbf16>
    tpu.vector_store %arg16[%c32, %c0_36], %68 {strides = array<i32>} : memref<72x512xbf16, #tpu.memory_space<vmem>>, vector<4x512xbf16>,
    %c0_37 = arith.constant 0 : index
    %c0_38 = arith.constant 0 : index
    %70 = vector.load %arg3[%c0_37, %c0_38] : memref<8x36xbf16, #tpu.memory_space<vmem>>, vector<8x36xbf16>
    %c0_39 = arith.constant 0 : index
    %c0_40 = arith.constant 0 : index
    %71 = vector.load %arg16[%c0_39, %c0_40] : memref<72x512xbf16, #tpu.memory_space<vmem>>, vector<36x512xbf16>
    %cst_41 = arith.constant dense<0.000000e+00> : vector<8x512xf32>
    %72 = tpu.matmul %70, %71, %cst_41 {dimension_numbers = #tpu.dot_dimension_numbers<[1], [0], [0], [1], [0, 0, 1, 1], [], []>} : vector<8x36xbf16>, vector<36x512xbf16>, vector<8x512xf32> -> vector<8x512xf32>
    %c0_42 = arith.constant 0 : index
    %c0_43 = arith.constant 0 : index
    %73 = vector.load %arg4[%c0_42, %c0_43] : memref<8x1xf32, #tpu.memory_space<vmem>>, vector<8x1xf32>
    %74 = vector.broadcast %73 : vector<8x1xf32> to vector<8x512xf32>
    %75 = arith.addf %72, %74 : vector<8x512xf32>
    %cst_44 = arith.constant 0.000000e+00 : f32
    %76 = vector.broadcast %cst_44 : f32 to vector<8x512xf32>
    %77 = arith.maximumf %75, %76 : vector<8x512xf32>
    %c17_i32_45 = arith.constant 17 : i32
    %78 = tpu.dynamic_rotate %77 by %c17_i32_45 dim 1 : vector<8x512xf32>, i32 -> vector<8x512xf32>
    %c0_46 = arith.constant 0 : index
    %c0_47 = arith.constant 0 : index
    %c0_48 = arith.constant 0 : index
    %79 = vector.load %arg2[%c0_46, %c0_47, %c0_48] : memref<9x1x512xf32, #tpu.memory_space<vmem>>, vector<1x1x512xf32>
    %80 = vector.shape_cast %79 : vector<1x1x512xf32> to vector<1x512xf32>
    %81 = vector.broadcast %80 : vector<1x512xf32> to vector<8x512xf32>
    %82 = arith.mulf %78, %81 : vector<8x512xf32>
    %83 = arith.truncf %82 : vector<8x512xf32> to vector<8x512xbf16>
    %c0_49 = arith.constant 0 : index
    %c0_50 = arith.constant 0 : index
    %84 = vector.load %arg16[%c0_49, %c0_50] : memref<72x512xbf16, #tpu.memory_space<vmem>>, vector<8x512xbf16>
    tpu.vector_store %arg16[%c0_49, %c0_50], %83 {strides = array<i32>} : memref<72x512xbf16, #tpu.memory_space<vmem>>, vector<8x512xbf16>,
    %c16_i32_51 = arith.constant 16 : i32
    %85 = tpu.dynamic_rotate %77 by %c16_i32_51 dim 1 : vector<8x512xf32>, i32 -> vector<8x512xf32>
    %c1_52 = arith.constant 1 : index
    %c0_53 = arith.constant 0 : index
    %c0_54 = arith.constant 0 : index
    %86 = vector.load %arg2[%c1_52, %c0_53, %c0_54] : memref<9x1x512xf32, #tpu.memory_space<vmem>>, vector<1x1x512xf32>
    %87 = vector.shape_cast %86 : vector<1x1x512xf32> to vector<1x512xf32>
    %88 = vector.broadcast %87 : vector<1x512xf32> to vector<8x512xf32>
    %89 = arith.mulf %85, %88 : vector<8x512xf32>
    %90 = arith.truncf %89 : vector<8x512xf32> to vector<8x512xbf16>
    %c8_55 = arith.constant 8 : index
    %c0_56 = arith.constant 0 : index
    %91 = vector.load %arg16[%c8_55, %c0_56] : memref<72x512xbf16, #tpu.memory_space<vmem>>, vector<8x512xbf16>
    tpu.vector_store %arg16[%c8_55, %c0_56], %90 {strides = array<i32>} : memref<72x512xbf16, #tpu.memory_space<vmem>>, vector<8x512xbf16>,
    %c15_i32_57 = arith.constant 15 : i32
    %92 = tpu.dynamic_rotate %77 by %c15_i32_57 dim 1 : vector<8x512xf32>, i32 -> vector<8x512xf32>
    %c2_58 = arith.constant 2 : index
    %c0_59 = arith.constant 0 : index
    %c0_60 = arith.constant 0 : index
    %93 = vector.load %arg2[%c2_58, %c0_59, %c0_60] : memref<9x1x512xf32, #tpu.memory_space<vmem>>, vector<1x1x512xf32>
    %94 = vector.shape_cast %93 : vector<1x1x512xf32> to vector<1x512xf32>
    %95 = vector.broadcast %94 : vector<1x512xf32> to vector<8x512xf32>
    %96 = arith.mulf %92, %95 : vector<8x512xf32>
    %97 = arith.truncf %96 : vector<8x512xf32> to vector<8x512xbf16>
    %c16_61 = arith.constant 16 : index
    %c0_62 = arith.constant 0 : index
    %98 = vector.load %arg16[%c16_61, %c0_62] : memref<72x512xbf16, #tpu.memory_space<vmem>>, vector<8x512xbf16>
    tpu.vector_store %arg16[%c16_61, %c0_62], %97 {strides = array<i32>} : memref<72x512xbf16, #tpu.memory_space<vmem>>, vector<8x512xbf16>,
    %c1_i32_63 = arith.constant 1 : i32
    %99 = tpu.dynamic_rotate %77 by %c1_i32_63 dim 1 : vector<8x512xf32>, i32 -> vector<8x512xf32>
    %c3_64 = arith.constant 3 : index
    %c0_65 = arith.constant 0 : index
    %c0_66 = arith.constant 0 : index
    %100 = vector.load %arg2[%c3_64, %c0_65, %c0_66] : memref<9x1x512xf32, #tpu.memory_space<vmem>>, vector<1x1x512xf32>
    %101 = vector.shape_cast %100 : vector<1x1x512xf32> to vector<1x512xf32>
    %102 = vector.broadcast %101 : vector<1x512xf32> to vector<8x512xf32>
    %103 = arith.mulf %99, %102 : vector<8x512xf32>
    %104 = arith.truncf %103 : vector<8x512xf32> to vector<8x512xbf16>
    %c24_67 = arith.constant 24 : index
    %c0_68 = arith.constant 0 : index
    %105 = vector.load %arg16[%c24_67, %c0_68] : memref<72x512xbf16, #tpu.memory_space<vmem>>, vector<8x512xbf16>
    tpu.vector_store %arg16[%c24_67, %c0_68], %104 {strides = array<i32>} : memref<72x512xbf16, #tpu.memory_space<vmem>>, vector<8x512xbf16>,
    %c4_69 = arith.constant 4 : index
    %c0_70 = arith.constant 0 : index
    %c0_71 = arith.constant 0 : index
    %106 = vector.load %arg2[%c4_69, %c0_70, %c0_71] : memref<9x1x512xf32, #tpu.memory_space<vmem>>, vector<1x1x512xf32>
    %107 = vector.shape_cast %106 : vector<1x1x512xf32> to vector<1x512xf32>
    %108 = vector.broadcast %107 : vector<1x512xf32> to vector<8x512xf32>
    %109 = arith.mulf %77, %108 : vector<8x512xf32>
    %110 = arith.truncf %109 : vector<8x512xf32> to vector<8x512xbf16>
    %c32_72 = arith.constant 32 : index
    %c0_73 = arith.constant 0 : index
    %111 = vector.load %arg16[%c32_72, %c0_73] : memref<72x512xbf16, #tpu.memory_space<vmem>>, vector<8x512xbf16>
    tpu.vector_store %arg16[%c32_72, %c0_73], %110 {strides = array<i32>} : memref<72x512xbf16, #tpu.memory_space<vmem>>, vector<8x512xbf16>,
    %c511_i32_74 = arith.constant 511 : i32
    %112 = tpu.dynamic_rotate %77 by %c511_i32_74 dim 1 : vector<8x512xf32>, i32 -> vector<8x512xf32>
    %c5_75 = arith.constant 5 : index
    %c0_76 = arith.constant 0 : index
    %c0_77 = arith.constant 0 : index
    %113 = vector.load %arg2[%c5_75, %c0_76, %c0_77] : memref<9x1x512xf32, #tpu.memory_space<vmem>>, vector<1x1x512xf32>
    %114 = vector.shape_cast %113 : vector<1x1x512xf32> to vector<1x512xf32>
    %115 = vector.broadcast %114 : vector<1x512xf32> to vector<8x512xf32>
    %116 = arith.mulf %112, %115 : vector<8x512xf32>
    %117 = arith.truncf %116 : vector<8x512xf32> to vector<8x512xbf16>
    %c40 = arith.constant 40 : index
    %c0_78 = arith.constant 0 : index
    %118 = vector.load %arg16[%c40, %c0_78] : memref<72x512xbf16, #tpu.memory_space<vmem>>, vector<8x512xbf16>
    tpu.vector_store %arg16[%c40, %c0_78], %117 {strides = array<i32>} : memref<72x512xbf16, #tpu.memory_space<vmem>>, vector<8x512xbf16>,
    %c497_i32_79 = arith.constant 497 : i32
    %119 = tpu.dynamic_rotate %77 by %c497_i32_79 dim 1 : vector<8x512xf32>, i32 -> vector<8x512xf32>
    %c6_80 = arith.constant 6 : index
    %c0_81 = arith.constant 0 : index
    %c0_82 = arith.constant 0 : index
    %120 = vector.load %arg2[%c6_80, %c0_81, %c0_82] : memref<9x1x512xf32, #tpu.memory_space<vmem>>, vector<1x1x512xf32>
    %121 = vector.shape_cast %120 : vector<1x1x512xf32> to vector<1x512xf32>
    %122 = vector.broadcast %121 : vector<1x512xf32> to vector<8x512xf32>
    %123 = arith.mulf %119, %122 : vector<8x512xf32>
    %124 = arith.truncf %123 : vector<8x512xf32> to vector<8x512xbf16>
    %c48 = arith.constant 48 : index
    %c0_83 = arith.constant 0 : index
    %125 = vector.load %arg16[%c48, %c0_83] : memref<72x512xbf16, #tpu.memory_space<vmem>>, vector<8x512xbf16>
    tpu.vector_store %arg16[%c48, %c0_83], %124 {strides = array<i32>} : memref<72x512xbf16, #tpu.memory_space<vmem>>, vector<8x512xbf16>,
    %c496_i32_84 = arith.constant 496 : i32
    %126 = tpu.dynamic_rotate %77 by %c496_i32_84 dim 1 : vector<8x512xf32>, i32 -> vector<8x512xf32>
    %c7_85 = arith.constant 7 : index
    %c0_86 = arith.constant 0 : index
    %c0_87 = arith.constant 0 : index
    %127 = vector.load %arg2[%c7_85, %c0_86, %c0_87] : memref<9x1x512xf32, #tpu.memory_space<vmem>>, vector<1x1x512xf32>
    %128 = vector.shape_cast %127 : vector<1x1x512xf32> to vector<1x512xf32>
    %129 = vector.broadcast %128 : vector<1x512xf32> to vector<8x512xf32>
    %130 = arith.mulf %126, %129 : vector<8x512xf32>
    %131 = arith.truncf %130 : vector<8x512xf32> to vector<8x512xbf16>
    %c56 = arith.constant 56 : index
    %c0_88 = arith.constant 0 : index
    %132 = vector.load %arg16[%c56, %c0_88] : memref<72x512xbf16, #tpu.memory_space<vmem>>, vector<8x512xbf16>
    tpu.vector_store %arg16[%c56, %c0_88], %131 {strides = array<i32>} : memref<72x512xbf16, #tpu.memory_space<vmem>>, vector<8x512xbf16>,
    %c495_i32_89 = arith.constant 495 : i32
    %133 = tpu.dynamic_rotate %77 by %c495_i32_89 dim 1 : vector<8x512xf32>, i32 -> vector<8x512xf32>
    %c8_90 = arith.constant 8 : index
    %c0_91 = arith.constant 0 : index
    %c0_92 = arith.constant 0 : index
    %134 = vector.load %arg2[%c8_90, %c0_91, %c0_92] : memref<9x1x512xf32, #tpu.memory_space<vmem>>, vector<1x1x512xf32>
    %135 = vector.shape_cast %134 : vector<1x1x512xf32> to vector<1x512xf32>
    %136 = vector.broadcast %135 : vector<1x512xf32> to vector<8x512xf32>
    %137 = arith.mulf %133, %136 : vector<8x512xf32>
    %138 = arith.truncf %137 : vector<8x512xf32> to vector<8x512xbf16>
    %c64 = arith.constant 64 : index
    %c0_93 = arith.constant 0 : index
    %139 = vector.load %arg16[%c64, %c0_93] : memref<72x512xbf16, #tpu.memory_space<vmem>>, vector<8x512xbf16>
    tpu.vector_store %arg16[%c64, %c0_93], %138 {strides = array<i32>} : memref<72x512xbf16, #tpu.memory_space<vmem>>, vector<8x512xbf16>,
    %c0_94 = arith.constant 0 : index
    %c0_95 = arith.constant 0 : index
    %140 = vector.load %arg5[%c0_94, %c0_95] : memref<8x72xbf16, #tpu.memory_space<vmem>>, vector<8x72xbf16>
    %c0_96 = arith.constant 0 : index
    %c0_97 = arith.constant 0 : index
    %141 = vector.load %arg16[%c0_96, %c0_97] : memref<72x512xbf16, #tpu.memory_space<vmem>>, vector<72x512xbf16>
    %cst_98 = arith.constant dense<0.000000e+00> : vector<8x512xf32>
    %142 = tpu.matmul %140, %141, %cst_98 {dimension_numbers = #tpu.dot_dimension_numbers<[1], [0], [0], [1], [0, 0, 1, 1], [], []>} : vector<8x72xbf16>, vector<72x512xbf16>, vector<8x512xf32> -> vector<8x512xf32>
    %c0_99 = arith.constant 0 : index
    %c0_100 = arith.constant 0 : index
    %143 = vector.load %arg6[%c0_99, %c0_100] : memref<8x1xf32, #tpu.memory_space<vmem>>, vector<8x1xf32>
    %144 = vector.broadcast %143 : vector<8x1xf32> to vector<8x512xf32>
    %145 = arith.addf %142, %144 : vector<8x512xf32>
    %146 = arith.addf %145, %7 : vector<8x512xf32>
    %cst_101 = arith.constant 0.000000e+00 : f32
    %147 = vector.broadcast %cst_101 : f32 to vector<8x512xf32>
    %148 = arith.maximumf %146, %147 : vector<8x512xf32>
    %c0_102 = arith.constant 0 : index
    %c0_103 = arith.constant 0 : index
    %149 = vector.load %arg13[%c0_102, %c0_103] : memref<4x8xbf16, #tpu.memory_space<vmem>>, vector<4x8xbf16>
    %150 = arith.truncf %148 : vector<8x512xf32> to vector<8x512xbf16>
    %cst_104 = arith.constant dense<0.000000e+00> : vector<4x512xf32>
    %151 = tpu.matmul %149, %150, %cst_104 {dimension_numbers = #tpu.dot_dimension_numbers<[1], [0], [0], [1], [0, 0, 1, 1], [], []>} : vector<4x8xbf16>, vector<8x512xbf16>, vector<4x512xf32> -> vector<4x512xf32>
    %c0_105 = arith.constant 0 : index
    %c0_106 = arith.constant 0 : index
    %152 = vector.load %arg14[%c0_105, %c0_106] : memref<4x1xf32, #tpu.memory_space<vmem>>, vector<4x1xf32>
    %153 = vector.broadcast %152 : vector<4x1xf32> to vector<4x512xf32>
    %154 = arith.addf %151, %153 : vector<4x512xf32>
    %c17_i32_107 = arith.constant 17 : i32
    %155 = tpu.dynamic_rotate %148 by %c17_i32_107 dim 1 : vector<8x512xf32>, i32 -> vector<8x512xf32>
    %c0_108 = arith.constant 0 : index
    %c0_109 = arith.constant 0 : index
    %c0_110 = arith.constant 0 : index
    %156 = vector.load %arg2[%c0_108, %c0_109, %c0_110] : memref<9x1x512xf32, #tpu.memory_space<vmem>>, vector<1x1x512xf32>
    %157 = vector.shape_cast %156 : vector<1x1x512xf32> to vector<1x512xf32>
    %158 = vector.broadcast %157 : vector<1x512xf32> to vector<8x512xf32>
    %159 = arith.mulf %155, %158 : vector<8x512xf32>
    %160 = arith.truncf %159 : vector<8x512xf32> to vector<8x512xbf16>
    %c0_111 = arith.constant 0 : index
    %c0_112 = arith.constant 0 : index
    %161 = vector.load %arg16[%c0_111, %c0_112] : memref<72x512xbf16, #tpu.memory_space<vmem>>, vector<8x512xbf16>
    tpu.vector_store %arg16[%c0_111, %c0_112], %160 {strides = array<i32>} : memref<72x512xbf16, #tpu.memory_space<vmem>>, vector<8x512xbf16>,
    %c16_i32_113 = arith.constant 16 : i32
    %162 = tpu.dynamic_rotate %148 by %c16_i32_113 dim 1 : vector<8x512xf32>, i32 -> vector<8x512xf32>
    %c1_114 = arith.constant 1 : index
    %c0_115 = arith.constant 0 : index
    %c0_116 = arith.constant 0 : index
    %163 = vector.load %arg2[%c1_114, %c0_115, %c0_116] : memref<9x1x512xf32, #tpu.memory_space<vmem>>, vector<1x1x512xf32>
    %164 = vector.shape_cast %163 : vector<1x1x512xf32> to vector<1x512xf32>
    %165 = vector.broadcast %164 : vector<1x512xf32> to vector<8x512xf32>
    %166 = arith.mulf %162, %165 : vector<8x512xf32>
    %167 = arith.truncf %166 : vector<8x512xf32> to vector<8x512xbf16>
    %c8_117 = arith.constant 8 : index
    %c0_118 = arith.constant 0 : index
    %168 = vector.load %arg16[%c8_117, %c0_118] : memref<72x512xbf16, #tpu.memory_space<vmem>>, vector<8x512xbf16>
    tpu.vector_store %arg16[%c8_117, %c0_118], %167 {strides = array<i32>} : memref<72x512xbf16, #tpu.memory_space<vmem>>, vector<8x512xbf16>,
    %c15_i32_119 = arith.constant 15 : i32
    %169 = tpu.dynamic_rotate %148 by %c15_i32_119 dim 1 : vector<8x512xf32>, i32 -> vector<8x512xf32>
    %c2_120 = arith.constant 2 : index
    %c0_121 = arith.constant 0 : index
    %c0_122 = arith.constant 0 : index
    %170 = vector.load %arg2[%c2_120, %c0_121, %c0_122] : memref<9x1x512xf32, #tpu.memory_space<vmem>>, vector<1x1x512xf32>
    %171 = vector.shape_cast %170 : vector<1x1x512xf32> to vector<1x512xf32>
    %172 = vector.broadcast %171 : vector<1x512xf32> to vector<8x512xf32>
    %173 = arith.mulf %169, %172 : vector<8x512xf32>
    %174 = arith.truncf %173 : vector<8x512xf32> to vector<8x512xbf16>
    %c16_123 = arith.constant 16 : index
    %c0_124 = arith.constant 0 : index
    %175 = vector.load %arg16[%c16_123, %c0_124] : memref<72x512xbf16, #tpu.memory_space<vmem>>, vector<8x512xbf16>
    tpu.vector_store %arg16[%c16_123, %c0_124], %174 {strides = array<i32>} : memref<72x512xbf16, #tpu.memory_space<vmem>>, vector<8x512xbf16>,
    %c1_i32_125 = arith.constant 1 : i32
    %176 = tpu.dynamic_rotate %148 by %c1_i32_125 dim 1 : vector<8x512xf32>, i32 -> vector<8x512xf32>
    %c3_126 = arith.constant 3 : index
    %c0_127 = arith.constant 0 : index
    %c0_128 = arith.constant 0 : index
    %177 = vector.load %arg2[%c3_126, %c0_127, %c0_128] : memref<9x1x512xf32, #tpu.memory_space<vmem>>, vector<1x1x512xf32>
    %178 = vector.shape_cast %177 : vector<1x1x512xf32> to vector<1x512xf32>
    %179 = vector.broadcast %178 : vector<1x512xf32> to vector<8x512xf32>
    %180 = arith.mulf %176, %179 : vector<8x512xf32>
    %181 = arith.truncf %180 : vector<8x512xf32> to vector<8x512xbf16>
    %c24_129 = arith.constant 24 : index
    %c0_130 = arith.constant 0 : index
    %182 = vector.load %arg16[%c24_129, %c0_130] : memref<72x512xbf16, #tpu.memory_space<vmem>>, vector<8x512xbf16>
    tpu.vector_store %arg16[%c24_129, %c0_130], %181 {strides = array<i32>} : memref<72x512xbf16, #tpu.memory_space<vmem>>, vector<8x512xbf16>,
    %c4_131 = arith.constant 4 : index
    %c0_132 = arith.constant 0 : index
    %c0_133 = arith.constant 0 : index
    %183 = vector.load %arg2[%c4_131, %c0_132, %c0_133] : memref<9x1x512xf32, #tpu.memory_space<vmem>>, vector<1x1x512xf32>
    %184 = vector.shape_cast %183 : vector<1x1x512xf32> to vector<1x512xf32>
    %185 = vector.broadcast %184 : vector<1x512xf32> to vector<8x512xf32>
    %186 = arith.mulf %148, %185 : vector<8x512xf32>
    %187 = arith.truncf %186 : vector<8x512xf32> to vector<8x512xbf16>
    %c32_134 = arith.constant 32 : index
    %c0_135 = arith.constant 0 : index
    %188 = vector.load %arg16[%c32_134, %c0_135] : memref<72x512xbf16, #tpu.memory_space<vmem>>, vector<8x512xbf16>
    tpu.vector_store %arg16[%c32_134, %c0_135], %187 {strides = array<i32>} : memref<72x512xbf16, #tpu.memory_space<vmem>>, vector<8x512xbf16>,
    %c511_i32_136 = arith.constant 511 : i32
    %189 = tpu.dynamic_rotate %148 by %c511_i32_136 dim 1 : vector<8x512xf32>, i32 -> vector<8x512xf32>
    %c5_137 = arith.constant 5 : index
    %c0_138 = arith.constant 0 : index
    %c0_139 = arith.constant 0 : index
    %190 = vector.load %arg2[%c5_137, %c0_138, %c0_139] : memref<9x1x512xf32, #tpu.memory_space<vmem>>, vector<1x1x512xf32>
    %191 = vector.shape_cast %190 : vector<1x1x512xf32> to vector<1x512xf32>
    %192 = vector.broadcast %191 : vector<1x512xf32> to vector<8x512xf32>
    %193 = arith.mulf %189, %192 : vector<8x512xf32>
    %194 = arith.truncf %193 : vector<8x512xf32> to vector<8x512xbf16>
    %c40_140 = arith.constant 40 : index
    %c0_141 = arith.constant 0 : index
    %195 = vector.load %arg16[%c40_140, %c0_141] : memref<72x512xbf16, #tpu.memory_space<vmem>>, vector<8x512xbf16>
    tpu.vector_store %arg16[%c40_140, %c0_141], %194 {strides = array<i32>} : memref<72x512xbf16, #tpu.memory_space<vmem>>, vector<8x512xbf16>,
    %c497_i32_142 = arith.constant 497 : i32
    %196 = tpu.dynamic_rotate %148 by %c497_i32_142 dim 1 : vector<8x512xf32>, i32 -> vector<8x512xf32>
    %c6_143 = arith.constant 6 : index
    %c0_144 = arith.constant 0 : index
    %c0_145 = arith.constant 0 : index
    %197 = vector.load %arg2[%c6_143, %c0_144, %c0_145] : memref<9x1x512xf32, #tpu.memory_space<vmem>>, vector<1x1x512xf32>
    %198 = vector.shape_cast %197 : vector<1x1x512xf32> to vector<1x512xf32>
    %199 = vector.broadcast %198 : vector<1x512xf32> to vector<8x512xf32>
    %200 = arith.mulf %196, %199 : vector<8x512xf32>
    %201 = arith.truncf %200 : vector<8x512xf32> to vector<8x512xbf16>
    %c48_146 = arith.constant 48 : index
    %c0_147 = arith.constant 0 : index
    %202 = vector.load %arg16[%c48_146, %c0_147] : memref<72x512xbf16, #tpu.memory_space<vmem>>, vector<8x512xbf16>
    tpu.vector_store %arg16[%c48_146, %c0_147], %201 {strides = array<i32>} : memref<72x512xbf16, #tpu.memory_space<vmem>>, vector<8x512xbf16>,
    %c496_i32_148 = arith.constant 496 : i32
    %203 = tpu.dynamic_rotate %148 by %c496_i32_148 dim 1 : vector<8x512xf32>, i32 -> vector<8x512xf32>
    %c7_149 = arith.constant 7 : index
    %c0_150 = arith.constant 0 : index
    %c0_151 = arith.constant 0 : index
    %204 = vector.load %arg2[%c7_149, %c0_150, %c0_151] : memref<9x1x512xf32, #tpu.memory_space<vmem>>, vector<1x1x512xf32>
    %205 = vector.shape_cast %204 : vector<1x1x512xf32> to vector<1x512xf32>
    %206 = vector.broadcast %205 : vector<1x512xf32> to vector<8x512xf32>
    %207 = arith.mulf %203, %206 : vector<8x512xf32>
    %208 = arith.truncf %207 : vector<8x512xf32> to vector<8x512xbf16>
    %c56_152 = arith.constant 56 : index
    %c0_153 = arith.constant 0 : index
    %209 = vector.load %arg16[%c56_152, %c0_153] : memref<72x512xbf16, #tpu.memory_space<vmem>>, vector<8x512xbf16>
    tpu.vector_store %arg16[%c56_152, %c0_153], %208 {strides = array<i32>} : memref<72x512xbf16, #tpu.memory_space<vmem>>, vector<8x512xbf16>,
    %c495_i32_154 = arith.constant 495 : i32
    %210 = tpu.dynamic_rotate %148 by %c495_i32_154 dim 1 : vector<8x512xf32>, i32 -> vector<8x512xf32>
    %c8_155 = arith.constant 8 : index
    %c0_156 = arith.constant 0 : index
    %c0_157 = arith.constant 0 : index
    %211 = vector.load %arg2[%c8_155, %c0_156, %c0_157] : memref<9x1x512xf32, #tpu.memory_space<vmem>>, vector<1x1x512xf32>
    %212 = vector.shape_cast %211 : vector<1x1x512xf32> to vector<1x512xf32>
    %213 = vector.broadcast %212 : vector<1x512xf32> to vector<8x512xf32>
    %214 = arith.mulf %210, %213 : vector<8x512xf32>
    %215 = arith.truncf %214 : vector<8x512xf32> to vector<8x512xbf16>
    %c64_158 = arith.constant 64 : index
    %c0_159 = arith.constant 0 : index
    %216 = vector.load %arg16[%c64_158, %c0_159] : memref<72x512xbf16, #tpu.memory_space<vmem>>, vector<8x512xbf16>
    tpu.vector_store %arg16[%c64_158, %c0_159], %215 {strides = array<i32>} : memref<72x512xbf16, #tpu.memory_space<vmem>>, vector<8x512xbf16>,
    %c0_160 = arith.constant 0 : index
    %c0_161 = arith.constant 0 : index
    %217 = vector.load %arg9[%c0_160, %c0_161] : memref<4x72xbf16, #tpu.memory_space<vmem>>, vector<4x72xbf16>
    %c0_162 = arith.constant 0 : index
    %c0_163 = arith.constant 0 : index
    %218 = vector.load %arg16[%c0_162, %c0_163] : memref<72x512xbf16, #tpu.memory_space<vmem>>, vector<72x512xbf16>
    %cst_164 = arith.constant dense<0.000000e+00> : vector<4x512xf32>
    %219 = tpu.matmul %217, %218, %cst_164 {dimension_numbers = #tpu.dot_dimension_numbers<[1], [0], [0], [1], [0, 0, 1, 1], [], []>} : vector<4x72xbf16>, vector<72x512xbf16>, vector<4x512xf32> -> vector<4x512xf32>
    %c0_165 = arith.constant 0 : index
    %c0_166 = arith.constant 0 : index
    %220 = vector.load %arg10[%c0_165, %c0_166] : memref<4x1xf32, #tpu.memory_space<vmem>>, vector<4x1xf32>
    %221 = vector.broadcast %220 : vector<4x1xf32> to vector<4x512xf32>
    %222 = arith.addf %219, %221 : vector<4x512xf32>
    %cst_167 = arith.constant 0.000000e+00 : f32
    %223 = vector.broadcast %cst_167 : f32 to vector<4x512xf32>
    %224 = arith.maximumf %222, %223 : vector<4x512xf32>
    %c17_i32_168 = arith.constant 17 : i32
    %225 = tpu.dynamic_rotate %224 by %c17_i32_168 dim 1 : vector<4x512xf32>, i32 -> vector<4x512xf32>
    %c0_169 = arith.constant 0 : index
    %c0_170 = arith.constant 0 : index
    %c0_171 = arith.constant 0 : index
    %226 = vector.load %arg2[%c0_169, %c0_170, %c0_171] : memref<9x1x512xf32, #tpu.memory_space<vmem>>, vector<1x1x512xf32>
    %227 = vector.shape_cast %226 : vector<1x1x512xf32> to vector<1x512xf32>
    %228 = vector.broadcast %227 : vector<1x512xf32> to vector<4x512xf32>
    %229 = arith.mulf %225, %228 : vector<4x512xf32>
    %230 = arith.truncf %229 : vector<4x512xf32> to vector<4x512xbf16>
    %c0_172 = arith.constant 0 : index
    %c0_173 = arith.constant 0 : index
    %231 = vector.load %arg16[%c0_172, %c0_173] : memref<72x512xbf16, #tpu.memory_space<vmem>>, vector<4x512xbf16>
    tpu.vector_store %arg16[%c0_172, %c0_173], %230 {strides = array<i32>} : memref<72x512xbf16, #tpu.memory_space<vmem>>, vector<4x512xbf16>,
    %c16_i32_174 = arith.constant 16 : i32
    %232 = tpu.dynamic_rotate %224 by %c16_i32_174 dim 1 : vector<4x512xf32>, i32 -> vector<4x512xf32>
    %c1_175 = arith.constant 1 : index
    %c0_176 = arith.constant 0 : index
    %c0_177 = arith.constant 0 : index
    %233 = vector.load %arg2[%c1_175, %c0_176, %c0_177] : memref<9x1x512xf32, #tpu.memory_space<vmem>>, vector<1x1x512xf32>
    %234 = vector.shape_cast %233 : vector<1x1x512xf32> to vector<1x512xf32>
    %235 = vector.broadcast %234 : vector<1x512xf32> to vector<4x512xf32>
    %236 = arith.mulf %232, %235 : vector<4x512xf32>
    %237 = arith.truncf %236 : vector<4x512xf32> to vector<4x512xbf16>
    %c4_178 = arith.constant 4 : index
    %c0_179 = arith.constant 0 : index
    %238 = vector.load %arg16[%c4_178, %c0_179] : memref<72x512xbf16, #tpu.memory_space<vmem>>, vector<4x512xbf16>
    tpu.vector_store %arg16[%c4_178, %c0_179], %237 {strides = array<i32>} : memref<72x512xbf16, #tpu.memory_space<vmem>>, vector<4x512xbf16>,
    %c15_i32_180 = arith.constant 15 : i32
    %239 = tpu.dynamic_rotate %224 by %c15_i32_180 dim 1 : vector<4x512xf32>, i32 -> vector<4x512xf32>
    %c2_181 = arith.constant 2 : index
    %c0_182 = arith.constant 0 : index
    %c0_183 = arith.constant 0 : index
    %240 = vector.load %arg2[%c2_181, %c0_182, %c0_183] : memref<9x1x512xf32, #tpu.memory_space<vmem>>, vector<1x1x512xf32>
    %241 = vector.shape_cast %240 : vector<1x1x512xf32> to vector<1x512xf32>
    %242 = vector.broadcast %241 : vector<1x512xf32> to vector<4x512xf32>
    %243 = arith.mulf %239, %242 : vector<4x512xf32>
    %244 = arith.truncf %243 : vector<4x512xf32> to vector<4x512xbf16>
    %c8_184 = arith.constant 8 : index
    %c0_185 = arith.constant 0 : index
    %245 = vector.load %arg16[%c8_184, %c0_185] : memref<72x512xbf16, #tpu.memory_space<vmem>>, vector<4x512xbf16>
    tpu.vector_store %arg16[%c8_184, %c0_185], %244 {strides = array<i32>} : memref<72x512xbf16, #tpu.memory_space<vmem>>, vector<4x512xbf16>,
    %c1_i32_186 = arith.constant 1 : i32
    %246 = tpu.dynamic_rotate %224 by %c1_i32_186 dim 1 : vector<4x512xf32>, i32 -> vector<4x512xf32>
    %c3_187 = arith.constant 3 : index
    %c0_188 = arith.constant 0 : index
    %c0_189 = arith.constant 0 : index
    %247 = vector.load %arg2[%c3_187, %c0_188, %c0_189] : memref<9x1x512xf32, #tpu.memory_space<vmem>>, vector<1x1x512xf32>
    %248 = vector.shape_cast %247 : vector<1x1x512xf32> to vector<1x512xf32>
    %249 = vector.broadcast %248 : vector<1x512xf32> to vector<4x512xf32>
    %250 = arith.mulf %246, %249 : vector<4x512xf32>
    %251 = arith.truncf %250 : vector<4x512xf32> to vector<4x512xbf16>
    %c12_190 = arith.constant 12 : index
    %c0_191 = arith.constant 0 : index
    %252 = vector.load %arg16[%c12_190, %c0_191] : memref<72x512xbf16, #tpu.memory_space<vmem>>, vector<4x512xbf16>
    tpu.vector_store %arg16[%c12_190, %c0_191], %251 {strides = array<i32>} : memref<72x512xbf16, #tpu.memory_space<vmem>>, vector<4x512xbf16>,
    %c4_192 = arith.constant 4 : index
    %c0_193 = arith.constant 0 : index
    %c0_194 = arith.constant 0 : index
    %253 = vector.load %arg2[%c4_192, %c0_193, %c0_194] : memref<9x1x512xf32, #tpu.memory_space<vmem>>, vector<1x1x512xf32>
    %254 = vector.shape_cast %253 : vector<1x1x512xf32> to vector<1x512xf32>
    %255 = vector.broadcast %254 : vector<1x512xf32> to vector<4x512xf32>
    %256 = arith.mulf %224, %255 : vector<4x512xf32>
    %257 = arith.truncf %256 : vector<4x512xf32> to vector<4x512xbf16>
    %c16_195 = arith.constant 16 : index
    %c0_196 = arith.constant 0 : index
    %258 = vector.load %arg16[%c16_195, %c0_196] : memref<72x512xbf16, #tpu.memory_space<vmem>>, vector<4x512xbf16>
    tpu.vector_store %arg16[%c16_195, %c0_196], %257 {strides = array<i32>} : memref<72x512xbf16, #tpu.memory_space<vmem>>, vector<4x512xbf16>,
    %c511_i32_197 = arith.constant 511 : i32
    %259 = tpu.dynamic_rotate %224 by %c511_i32_197 dim 1 : vector<4x512xf32>, i32 -> vector<4x512xf32>
    %c5_198 = arith.constant 5 : index
    %c0_199 = arith.constant 0 : index
    %c0_200 = arith.constant 0 : index
    %260 = vector.load %arg2[%c5_198, %c0_199, %c0_200] : memref<9x1x512xf32, #tpu.memory_space<vmem>>, vector<1x1x512xf32>
    %261 = vector.shape_cast %260 : vector<1x1x512xf32> to vector<1x512xf32>
    %262 = vector.broadcast %261 : vector<1x512xf32> to vector<4x512xf32>
    %263 = arith.mulf %259, %262 : vector<4x512xf32>
    %264 = arith.truncf %263 : vector<4x512xf32> to vector<4x512xbf16>
    %c20_201 = arith.constant 20 : index
    %c0_202 = arith.constant 0 : index
    %265 = vector.load %arg16[%c20_201, %c0_202] : memref<72x512xbf16, #tpu.memory_space<vmem>>, vector<4x512xbf16>
    tpu.vector_store %arg16[%c20_201, %c0_202], %264 {strides = array<i32>} : memref<72x512xbf16, #tpu.memory_space<vmem>>, vector<4x512xbf16>,
    %c497_i32_203 = arith.constant 497 : i32
    %266 = tpu.dynamic_rotate %224 by %c497_i32_203 dim 1 : vector<4x512xf32>, i32 -> vector<4x512xf32>
    %c6_204 = arith.constant 6 : index
    %c0_205 = arith.constant 0 : index
    %c0_206 = arith.constant 0 : index
    %267 = vector.load %arg2[%c6_204, %c0_205, %c0_206] : memref<9x1x512xf32, #tpu.memory_space<vmem>>, vector<1x1x512xf32>
    %268 = vector.shape_cast %267 : vector<1x1x512xf32> to vector<1x512xf32>
    %269 = vector.broadcast %268 : vector<1x512xf32> to vector<4x512xf32>
    %270 = arith.mulf %266, %269 : vector<4x512xf32>
    %271 = arith.truncf %270 : vector<4x512xf32> to vector<4x512xbf16>
    %c24_207 = arith.constant 24 : index
    %c0_208 = arith.constant 0 : index
    %272 = vector.load %arg16[%c24_207, %c0_208] : memref<72x512xbf16, #tpu.memory_space<vmem>>, vector<4x512xbf16>
    tpu.vector_store %arg16[%c24_207, %c0_208], %271 {strides = array<i32>} : memref<72x512xbf16, #tpu.memory_space<vmem>>, vector<4x512xbf16>,
    %c496_i32_209 = arith.constant 496 : i32
    %273 = tpu.dynamic_rotate %224 by %c496_i32_209 dim 1 : vector<4x512xf32>, i32 -> vector<4x512xf32>
    %c7_210 = arith.constant 7 : index
    %c0_211 = arith.constant 0 : index
    %c0_212 = arith.constant 0 : index
    %274 = vector.load %arg2[%c7_210, %c0_211, %c0_212] : memref<9x1x512xf32, #tpu.memory_space<vmem>>, vector<1x1x512xf32>
    %275 = vector.shape_cast %274 : vector<1x1x512xf32> to vector<1x512xf32>
    %276 = vector.broadcast %275 : vector<1x512xf32> to vector<4x512xf32>
    %277 = arith.mulf %273, %276 : vector<4x512xf32>
    %278 = arith.truncf %277 : vector<4x512xf32> to vector<4x512xbf16>
    %c28_213 = arith.constant 28 : index
    %c0_214 = arith.constant 0 : index
    %279 = vector.load %arg16[%c28_213, %c0_214] : memref<72x512xbf16, #tpu.memory_space<vmem>>, vector<4x512xbf16>
    tpu.vector_store %arg16[%c28_213, %c0_214], %278 {strides = array<i32>} : memref<72x512xbf16, #tpu.memory_space<vmem>>, vector<4x512xbf16>,
    %c495_i32_215 = arith.constant 495 : i32
    %280 = tpu.dynamic_rotate %224 by %c495_i32_215 dim 1 : vector<4x512xf32>, i32 -> vector<4x512xf32>
    %c8_216 = arith.constant 8 : index
    %c0_217 = arith.constant 0 : index
    %c0_218 = arith.constant 0 : index
    %281 = vector.load %arg2[%c8_216, %c0_217, %c0_218] : memref<9x1x512xf32, #tpu.memory_space<vmem>>, vector<1x1x512xf32>
    %282 = vector.shape_cast %281 : vector<1x1x512xf32> to vector<1x512xf32>
    %283 = vector.broadcast %282 : vector<1x512xf32> to vector<4x512xf32>
    %284 = arith.mulf %280, %283 : vector<4x512xf32>
    %285 = arith.truncf %284 : vector<4x512xf32> to vector<4x512xbf16>
    %c32_219 = arith.constant 32 : index
    %c0_220 = arith.constant 0 : index
    %286 = vector.load %arg16[%c32_219, %c0_220] : memref<72x512xbf16, #tpu.memory_space<vmem>>, vector<4x512xbf16>
    tpu.vector_store %arg16[%c32_219, %c0_220], %285 {strides = array<i32>} : memref<72x512xbf16, #tpu.memory_space<vmem>>, vector<4x512xbf16>,
    %c0_221 = arith.constant 0 : index
    %c0_222 = arith.constant 0 : index
    %287 = vector.load %arg11[%c0_221, %c0_222] : memref<4x36xbf16, #tpu.memory_space<vmem>>, vector<4x36xbf16>
    %c0_223 = arith.constant 0 : index
    %c0_224 = arith.constant 0 : index
    %288 = vector.load %arg16[%c0_223, %c0_224] : memref<72x512xbf16, #tpu.memory_space<vmem>>, vector<36x512xbf16>
    %cst_225 = arith.constant dense<0.000000e+00> : vector<4x512xf32>
    %289 = tpu.matmul %287, %288, %cst_225 {dimension_numbers = #tpu.dot_dimension_numbers<[1], [0], [0], [1], [0, 0, 1, 1], [], []>} : vector<4x36xbf16>, vector<36x512xbf16>, vector<4x512xf32> -> vector<4x512xf32>
    %c0_226 = arith.constant 0 : index
    %c0_227 = arith.constant 0 : index
    %290 = vector.load %arg12[%c0_226, %c0_227] : memref<4x1xf32, #tpu.memory_space<vmem>>, vector<4x1xf32>
    %291 = vector.broadcast %290 : vector<4x1xf32> to vector<4x512xf32>
    %292 = arith.addf %289, %291 : vector<4x512xf32>
    %293 = arith.addf %292, %154 : vector<4x512xf32>
    %cst_228 = arith.constant 0.000000e+00 : f32
    %294 = vector.broadcast %cst_228 : f32 to vector<4x512xf32>
    %295 = arith.maximumf %293, %294 : vector<4x512xf32>
    %cst_229 = arith.constant dense<0xFF800000> : vector<512xf32>
    %296 = vector.multi_reduction <maximumf>, %295, %cst_229 [0] : vector<4x512xf32> to vector<512xf32>
    %297 = vector.shape_cast %296 : vector<512xf32> to vector<1x512xf32>
    %298 = vector.broadcast %297 : vector<1x512xf32> to vector<4x512xf32>
    %299 = arith.subf %295, %298 : vector<4x512xf32>
    %300 = math.exp %299 : vector<4x512xf32>
    %cst_230 = arith.constant dense<0.000000e+00> : vector<512xf32>
    %301 = vector.multi_reduction <add>, %300, %cst_230 [0] : vector<4x512xf32> to vector<512xf32>
    %302 = vector.shape_cast %301 : vector<512xf32> to vector<1x512xf32>
    %303 = vector.broadcast %302 : vector<1x512xf32> to vector<4x512xf32>
    %304 = arith.divf %300, %303 : vector<4x512xf32>
    %c0_231 = arith.constant 0 : index
    %c0_232 = arith.constant 0 : index
    %c0_233 = arith.constant 0 : index
    %305 = vector.load %arg15[%c0_231, %c0_232, %c0_233] : memref<1x4x512xf32, #tpu.memory_space<vmem>>, vector<1x4x512xf32>
    %306 = vector.shape_cast %305 : vector<1x4x512xf32> to vector<4x512xf32>
    %307 = vector.shape_cast %304 : vector<4x512xf32> to vector<1x4x512xf32>
    tpu.vector_store %arg15[%c0_231, %c0_232, %c0_233], %307 {strides = array<i32>} : memref<1x4x512xf32, #tpu.memory_space<vmem>>, vector<1x4x512xf32>,
    return
  }
  func.func @transform_0(%arg0: i32) -> (i32, i32, i32) {
    %c0_i32 = arith.constant 0 : i32
    %c0_i32_0 = arith.constant 0 : i32
    %c0_i32_1 = arith.constant 0 : i32
    return %arg0, %c0_i32, %c0_i32_0 : i32, i32, i32
  }
  func.func @transform_1(%arg0: i32) -> (i32, i32, i32) {
    %c0_i32 = arith.constant 0 : i32
    %c0_i32_0 = arith.constant 0 : i32
    %c0_i32_1 = arith.constant 0 : i32
    %c0_i32_2 = arith.constant 0 : i32
    return %c0_i32, %c0_i32_0, %c0_i32_1 : i32, i32, i32
  }
  func.func @transform_2(%arg0: i32) -> (i32, i32) {
    %c0_i32 = arith.constant 0 : i32
    %c0_i32_0 = arith.constant 0 : i32
    %c0_i32_1 = arith.constant 0 : i32
    return %c0_i32, %c0_i32_0 : i32, i32
  }
  func.func @transform_3(%arg0: i32) -> (i32, i32) {
    %c0_i32 = arith.constant 0 : i32
    %c0_i32_0 = arith.constant 0 : i32
    %c0_i32_1 = arith.constant 0 : i32
    return %c0_i32, %c0_i32_0 : i32, i32
  }
  func.func @transform_4(%arg0: i32) -> (i32, i32) {
    %c0_i32 = arith.constant 0 : i32
    %c0_i32_0 = arith.constant 0 : i32
    %c0_i32_1 = arith.constant 0 : i32
    return %c0_i32, %c0_i32_0 : i32, i32
  }
  func.func @transform_5(%arg0: i32) -> (i32, i32) {
    %c0_i32 = arith.constant 0 : i32
    %c0_i32_0 = arith.constant 0 : i32
    %c0_i32_1 = arith.constant 0 : i32
    return %c0_i32, %c0_i32_0 : i32, i32
  }
  func.func @transform_6(%arg0: i32) -> (i32, i32) {
    %c0_i32 = arith.constant 0 : i32
    %c0_i32_0 = arith.constant 0 : i32
    %c0_i32_1 = arith.constant 0 : i32
    return %c0_i32, %c0_i32_0 : i32, i32
  }
  func.func @transform_7(%arg0: i32) -> (i32, i32) {
    %c0_i32 = arith.constant 0 : i32
    %c0_i32_0 = arith.constant 0 : i32
    %c0_i32_1 = arith.constant 0 : i32
    return %c0_i32, %c0_i32_0 : i32, i32
  }
  func.func @transform_8(%arg0: i32) -> (i32, i32) {
    %c0_i32 = arith.constant 0 : i32
    %c0_i32_0 = arith.constant 0 : i32
    %c0_i32_1 = arith.constant 0 : i32
    return %c0_i32, %c0_i32_0 : i32, i32
  }
  func.func @transform_9(%arg0: i32) -> (i32, i32) {
    %c0_i32 = arith.constant 0 : i32
    %c0_i32_0 = arith.constant 0 : i32
    %c0_i32_1 = arith.constant 0 : i32
    return %c0_i32, %c0_i32_0 : i32, i32
  }
  func.func @transform_10(%arg0: i32) -> (i32, i32) {
    %c0_i32 = arith.constant 0 : i32
    %c0_i32_0 = arith.constant 0 : i32
    %c0_i32_1 = arith.constant 0 : i32
    return %c0_i32, %c0_i32_0 : i32, i32
  }
  func.func @transform_11(%arg0: i32) -> (i32, i32) {
    %c0_i32 = arith.constant 0 : i32
    %c0_i32_0 = arith.constant 0 : i32
    %c0_i32_1 = arith.constant 0 : i32
    return %c0_i32, %c0_i32_0 : i32, i32
  }
  func.func @transform_12(%arg0: i32) -> (i32, i32) {
    %c0_i32 = arith.constant 0 : i32
    %c0_i32_0 = arith.constant 0 : i32
    %c0_i32_1 = arith.constant 0 : i32
    return %c0_i32, %c0_i32_0 : i32, i32
  }
  func.func @transform_13(%arg0: i32) -> (i32, i32) {
    %c0_i32 = arith.constant 0 : i32
    %c0_i32_0 = arith.constant 0 : i32
    %c0_i32_1 = arith.constant 0 : i32
    return %c0_i32, %c0_i32_0 : i32, i32
  }
  func.func @transform_14(%arg0: i32) -> (i32, i32, i32) {
    %c0_i32 = arith.constant 0 : i32
    %c0_i32_0 = arith.constant 0 : i32
    %c0_i32_1 = arith.constant 0 : i32
    return %arg0, %c0_i32, %c0_i32_0 : i32, i32, i32
  }
}

</mosaic_0001>

<llo_original>
// kernel: masking1_forward.1
$region0: #{masking1_forward.1}
  #allocation0 [shape = 'u32[]', space=smem, size = 0x4, offset = 0x4, fixed_abs, tag = 'smem constant byte address 0x4 - core index']
  #allocation1 [shape = 'u32[144,128]{1,0:T(1,128)}', space=vmem, size = 0x12000, scoped, tag = 'internal scratch']
  #allocation2 [shape = 'bf16[72,512]{1,0:T(8,128)(2,1)}', space=vmem, size = 0x12000, scoped, tag = 'scratch operand']
  %s0 = inlined_call_operand.vmem [shape: f32[1,4,512], index: 0, kind: input, shape index: {}]
  %s1 = inlined_call_operand.vmem [shape: f32[9,1,512], index: 1, kind: input, shape index: {}]
  %s2 = inlined_call_operand.vmem [shape: bf16[8,36], index: 2, kind: input, shape index: {}]
  %s3 = inlined_call_operand.vmem [shape: f32[8,1], index: 3, kind: input, shape index: {}]
  %s4 = inlined_call_operand.vmem [shape: bf16[8,72], index: 4, kind: input, shape index: {}]
  %s5 = inlined_call_operand.vmem [shape: f32[8,1], index: 5, kind: input, shape index: {}]
  %s6 = inlined_call_operand.vmem [shape: bf16[8,4], index: 6, kind: input, shape index: {}]
  %s7 = inlined_call_operand.vmem [shape: f32[8,1], index: 7, kind: input, shape index: {}]
  %s8 = inlined_call_operand.vmem [shape: bf16[4,72], index: 8, kind: input, shape index: {}]
  %s9 = inlined_call_operand.vmem [shape: f32[4,1], index: 9, kind: input, shape index: {}]
  %s10 = inlined_call_operand.vmem [shape: bf16[4,36], index: 10, kind: input, shape index: {}]
  %s11 = inlined_call_operand.vmem [shape: f32[4,1], index: 11, kind: input, shape index: {}]
  %s12 = inlined_call_operand.vmem [shape: bf16[4,8], index: 12, kind: input, shape index: {}]
  %s13 = inlined_call_operand.vmem [shape: f32[4,1], index: 13, kind: input, shape index: {}]
  %s14 = inlined_call_operand.vmem [shape: f32[1,4,512], index: 14, kind: output, shape index: {}]
  %s15 = sld [smem:[#allocation0]]
  $region66: #{masking1_forward.1} parent=0
    _
  %s17 = ssub.s32 1, %s15
  %s18 = scalar_select 0, %s17, %s15
  // Predicated region
  $region2: #{masking1_forward.1} parent=0 // pred_check
    _
  $region3: #{masking1_forward.1} parent=0 // pred_check_branch
    %20 = sbr.rel (0) target = $region5
  $region4: #{masking1_forward.1} parent=0 // pred_region
    _
  $region5: #{masking1_forward.1} parent=0 // pred_fallthru
    _
  // Predicated region
  $region6: #{masking1_forward.1} parent=0 // pred_check
    _
  $region7: #{masking1_forward.1} parent=0 // pred_check_branch
    %22 = sbr.rel (0) target = $region9
  $region8: #{masking1_forward.1} parent=0 // pred_region
    _
  $region9: #{masking1_forward.1} parent=0 // pred_fallthru
    _
  // Predicated region
  $region10: #{masking1_forward.1} parent=0 // pred_check
    _
  $region11: #{masking1_forward.1} parent=0 // pred_check_branch
    %24 = sbr.rel (0) target = $region13
  $region12: #{masking1_forward.1} parent=0 // pred_region
    _
  $region13: #{masking1_forward.1} parent=0 // pred_fallthru
    _
  // Predicated region
  $region14: #{masking1_forward.1} parent=0 // pred_check
    _
  $region15: #{masking1_forward.1} parent=0 // pred_check_branch
    %26 = sbr.rel (0) target = $region17
  $region16: #{masking1_forward.1} parent=0 // pred_region
    _
  $region17: #{masking1_forward.1} parent=0 // pred_fallthru
    _
  // Predicated region
  $region18: #{masking1_forward.1} parent=0 // pred_check
    _
  $region19: #{masking1_forward.1} parent=0 // pred_check_branch
    %28 = sbr.rel (0) target = $region21
  $region20: #{masking1_forward.1} parent=0 // pred_region
    _
  $region21: #{masking1_forward.1} parent=0 // pred_fallthru
    _
  // Predicated region
  $region22: #{masking1_forward.1} parent=0 // pred_check
    _
  $region23: #{masking1_forward.1} parent=0 // pred_check_branch
    %30 = sbr.rel (0) target = $region25
  $region24: #{masking1_forward.1} parent=0 // pred_region
    _
  $region25: #{masking1_forward.1} parent=0 // pred_fallthru
    _
  // Predicated region
  $region26: #{masking1_forward.1} parent=0 // pred_check
    _
  $region27: #{masking1_forward.1} parent=0 // pred_check_branch
    %32 = sbr.rel (0) target = $region29
  $region28: #{masking1_forward.1} parent=0 // pred_region
    _
  $region29: #{masking1_forward.1} parent=0 // pred_fallthru
    _
  // Predicated region
  $region30: #{masking1_forward.1} parent=0 // pred_check
    _
  $region31: #{masking1_forward.1} parent=0 // pred_check_branch
    %34 = sbr.rel (0) target = $region33
  $region32: #{masking1_forward.1} parent=0 // pred_region
    _
  $region33: #{masking1_forward.1} parent=0 // pred_fallthru
    _
  // Predicated region
  $region34: #{masking1_forward.1} parent=0 // pred_check
    _
  $region35: #{masking1_forward.1} parent=0 // pred_check_branch
    %36 = sbr.rel (0) target = $region37
  $region36: #{masking1_forward.1} parent=0 // pred_region
    _
  $region37: #{masking1_forward.1} parent=0 // pred_fallthru
    _
  // Predicated region
  $region38: #{masking1_forward.1} parent=0 // pred_check
    _
  $region39: #{masking1_forward.1} parent=0 // pred_check_branch
    %38 = sbr.rel (0) target = $region41
  $region40: #{masking1_forward.1} parent=0 // pred_region
    _
  $region41: #{masking1_forward.1} parent=0 // pred_fallthru
    _
  // Predicated region
  $region42: #{masking1_forward.1} parent=0 // pred_check
    _
  $region43: #{masking1_forward.1} parent=0 // pred_check_branch
    %40 = sbr.rel (0) target = $region45
  $region44: #{masking1_forward.1} parent=0 // pred_region
    _
  $region45: #{masking1_forward.1} parent=0 // pred_fallthru
    _
  // Predicated region
  $region46: #{masking1_forward.1} parent=0 // pred_check
    _
  $region47: #{masking1_forward.1} parent=0 // pred_check_branch
    %42 = sbr.rel (0) target = $region49
  $region48: #{masking1_forward.1} parent=0 // pred_region
    _
  $region49: #{masking1_forward.1} parent=0 // pred_fallthru
    _
  // Predicated region
  $region50: #{masking1_forward.1} parent=0 // pred_check
    _
  $region51: #{masking1_forward.1} parent=0 // pred_check_branch
    %44 = sbr.rel (0) target = $region53
  $region52: #{masking1_forward.1} parent=0 // pred_region
    _
  $region53: #{masking1_forward.1} parent=0 // pred_fallthru
    _
  // Predicated region
  $region54: #{masking1_forward.1} parent=0 // pred_check
    _
  $region55: #{masking1_forward.1} parent=0 // pred_check_branch
    %46 = sbr.rel (0) target = $region57
  $region56: #{masking1_forward.1} parent=0 // pred_region
    _
  $region57: #{masking1_forward.1} parent=0 // pred_fallthru
    _
  %v48 = vld [vmem:[%s0] sm:$0xff]
  %v49 = vld [vmem:[%s0 + $0x8] sm:$0xff]
  %v50 = vld [vmem:[%s6] sm:$0xf]
  %v53 = vcombine.high %v48, %v48
  %v54 = vcombine.high %v49, %v49
  %v57 = vpack.c.bf16 %v48, %v48
  %v58 = vpack.c.bf16 %v53, %v53
  %v59 = vpack.c.bf16 %v49, %v49
  %v60 = vpack.c.bf16 %v54, %v54
  %v61 = vld [vmem:[%s7] sm:$0xff]
  %63 = vset.pattern.permute.xlu0 0
  %64 = vperm.xlu0 %63, %v61
  %v65 = vpop.permute.xlu0 %64
  %vm67 = vcmask 31744
  %v69 = vsel %vm67, %v50, 0
  %vm71 = vcmask 1041408
  %v73 = vsel %vm71, %v57, 0
  %v76 = vsel %vm71, %v58, 0
  %v79 = vsel %vm71, %v59, 0
  %v82 = vsel %vm71, %v60, 0
  %84 = vmatprep.subr.bf16.mxu0 0
  %85 = vmatpush1.bf16.msra.mxu0 0
  %86 = vmatprep.subr.bf16.mxu0 0
  %87 = vmatpush1.bf16.msra.mxu0 0
  %88 = vmatprep.subr.bf16.mxu0 0
  %89 = vmatpush1.bf16.msra.mxu0 0
  %90 = vmatprep.subr.bf16.mxu0 0
  %91 = vmatpush1.bf16.msra.mxu0 0
  %92 = vmatprep.subr.bf16.mxu0 0
  %93 = vmatpush1.bf16.msra.mxu0 0
  %94 = vmatprep.subr.bf16.mxu0 0
  %95 = vmatpush1.bf16.msra.mxu0 0
  %96 = vmatprep.subr.bf16.mxu0 0
  %97 = vmatpush1.bf16.msra.mxu0 0
  %98 = vmatprep.subr.bf16.mxu0 %v76
  %99 = vmatpush1.bf16.msra.mxu0 %v73
  %100 = vmatprep.subr.bf16.mxu0 0
  %101 = vmatpush2.bf16.msra.mxu0 0
  %102 = vmatprep.subr.bf16.mxu0 0
  %103 = vmatpush2.bf16.msra.mxu0 0
  %104 = vmatprep.subr.bf16.mxu0 0
  %105 = vmatpush2.bf16.msra.mxu0 0
  %106 = vmatprep.subr.bf16.mxu0 0
  %107 = vmatpush2.bf16.msra.mxu0 0
  %108 = vmatprep.subr.bf16.mxu0 0
  %109 = vmatpush2.bf16.msra.mxu0 0
  %110 = vmatprep.subr.bf16.mxu0 0
  %111 = vmatpush2.bf16.msra.mxu0 0
  %112 = vmatprep.subr.bf16.mxu0 0
  %113 = vmatpush2.bf16.msra.mxu0 0
  %114 = vmatprep.subr.bf16.mxu0 0
  %115 = vmatpush2.bf16.msra.mxu0 0
  %116 = vmatprep.mubr.bf16.mxu0 0
  %117 = vmatmul.mubr.bf16.gmra.mxu0 %v69
  %v118 = vpop.f32.mrf.mxu0
  %v119 = vadd.f32 %v65, %v118
  %v120 = vpop.f32.mrf.mxu0
  %v121 = vadd.f32 %v65, %v120
  %v122 = vpop.f32.mrf.mxu0
  %v123 = vpop.f32.mrf.mxu0
  %124 = vdwg.mxu0
  %125 = vmatprep.subr.bf16.mxu0 0
  %126 = vmatpush1.bf16.msra.mxu0 0
  %127 = vmatprep.subr.bf16.mxu0 0
  %128 = vmatpush1.bf16.msra.mxu0 0
  %129 = vmatprep.subr.bf16.mxu0 0
  %130 = vmatpush1.bf16.msra.mxu0 0
  %131 = vmatprep.subr.bf16.mxu0 0
  %132 = vmatpush1.bf16.msra.mxu0 0
  %133 = vmatprep.subr.bf16.mxu0 0
  %134 = vmatpush1.bf16.msra.mxu0 0
  %135 = vmatprep.subr.bf16.mxu0 0
  %136 = vmatpush1.bf16.msra.mxu0 0
  %137 = vmatprep.subr.bf16.mxu0 0
  %138 = vmatpush1.bf16.msra.mxu0 0
  %139 = vmatprep.subr.bf16.mxu0 %v82
  %140 = vmatpush1.bf16.msra.mxu0 %v79
  %141 = vmatprep.subr.bf16.mxu0 0
  %142 = vmatpush2.bf16.msra.mxu0 0
  %143 = vmatprep.subr.bf16.mxu0 0
  %144 = vmatpush2.bf16.msra.mxu0 0
  %145 = vmatprep.subr.bf16.mxu0 0
  %146 = vmatpush2.bf16.msra.mxu0 0
  %147 = vmatprep.subr.bf16.mxu0 0
  %148 = vmatpush2.bf16.msra.mxu0 0
  %149 = vmatprep.subr.bf16.mxu0 0
  %150 = vmatpush2.bf16.msra.mxu0 0
  %151 = vmatprep.subr.bf16.mxu0 0
  %152 = vmatpush2.bf16.msra.mxu0 0
  %153 = vmatprep.subr.bf16.mxu0 0
  %154 = vmatpush2.bf16.msra.mxu0 0
  %155 = vmatprep.subr.bf16.mxu0 0
  %156 = vmatpush2.bf16.msra.mxu0 0
  %157 = vmatprep.mubr.bf16.mxu0 0
  %158 = vmatmul.mubr.bf16.gmra.mxu0 %v69
  %v159 = vpop.f32.mrf.mxu0
  %v160 = vadd.f32 %v65, %v159
  %v161 = vpop.f32.mrf.mxu0
  %v162 = vadd.f32 %v65, %v161
  %v163 = vpop.f32.mrf.mxu0
  %v164 = vpop.f32.mrf.mxu0
  %165 = vdwg.mxu0
  %166 = vrot.lane.b32.xlu0 %v48, 17
  %v167 = vpop.permute.xlu0 %166
  %168 = vrot.lane.b32.xlu0 %v53, 17
  %v169 = vpop.permute.xlu0 %168
  %170 = vrot.lane.b32.xlu0 %v49, 17
  %v171 = vpop.permute.xlu0 %170
  %172 = vrot.lane.b32.xlu0 %v54, 17
  %v173 = vpop.permute.xlu0 %172
  %v174 = vlaneseq
  %v175 = vand.u32 %v174, 127
  %vm176 = vcmp.lt.s32.totalorder %v175, 17
  %v177 = vsel %vm176, %v171, %v173
  %v178 = vsel %vm176, %v169, %v171
  %v179 = vsel %vm176, %v167, %v169
  %v180 = vsel %vm176, %v173, %v167
  %v181 = vld [vmem:[%s1] sm:$0xf]
  %v183 = vlaneseq
  %v184 = vshrl.u32 %v183, 7
  %v185 = vsub.s32 0, %v184
  %v186 = vrot.slane %v181, %v185
  %v187 = vlaneseq
  %v188 = vshrl.u32 %v187, 7
  %v189 = vsub.s32 1, %v188
  %v190 = vrot.slane %v181, %v189
  %v191 = vlaneseq
  %v192 = vshrl.u32 %v191, 7
  %v193 = vsub.s32 2, %v192
  %v194 = vrot.slane %v181, %v193
  %v195 = vlaneseq
  %v196 = vshrl.u32 %v195, 7
  %v197 = vsub.s32 3, %v196
  %v198 = vrot.slane %v181, %v197
  %v203 = vmul.f32 %v180, %v186
  %v204 = vmul.f32 %v179, %v190
  %v205 = vmul.f32 %v178, %v194
  %v206 = vmul.f32 %v177, %v198
  %v207 = vpack.c.bf16 %v203, %v203
  %v208 = vpack.c.bf16 %v204, %v204
  %v209 = vpack.c.bf16 %v205, %v205
  %v210 = vpack.c.bf16 %v206, %v206
  %v215 = vunpack.c.l.b16 %v207
  %v216 = vunpack.c.l.b16 %v208
  %v217 = vunpack.c.l.b16 %v209
  %v218 = vunpack.c.l.b16 %v210
  %v219 = vpack.c.b16 %v216, %v215
  %v220 = vpack.c.b16 %v218, %v217
  %223 = vst [vmem:[#allocation2] sm:$0x33] %v219
  %224 = vst [vmem:[#allocation2 + $0x8] sm:$0x33] %v220
  %225 = vrot.lane.b32.xlu0 %v48, 16
  %v226 = vpop.permute.xlu0 %225
  %227 = vrot.lane.b32.xlu0 %v53, 16
  %v228 = vpop.permute.xlu0 %227
  %229 = vrot.lane.b32.xlu0 %v49, 16
  %v230 = vpop.permute.xlu0 %229
  %231 = vrot.lane.b32.xlu0 %v54, 16
  %v232 = vpop.permute.xlu0 %231
  %vm233 = vcmp.lt.s32.totalorder %v175, 16
  %v234 = vsel %vm233, %v230, %v232
  %v235 = vsel %vm233, %v228, %v230
  %v236 = vsel %vm233, %v226, %v228
  %v237 = vsel %vm233, %v232, %v226
  %s238 = scalar_lea.vmem %s1, 4
  %v239 = vld [vmem:[%s238] sm:$0xf]
  %v241 = vlaneseq
  %v242 = vshrl.u32 %v241, 7
  %v243 = vsub.s32 0, %v242
  %v244 = vrot.slane %v239, %v243
  %v245 = vlaneseq
  %v246 = vshrl.u32 %v245, 7
  %v247 = vsub.s32 1, %v246
  %v248 = vrot.slane %v239, %v247
  %v249 = vlaneseq
  %v250 = vshrl.u32 %v249, 7
  %v251 = vsub.s32 2, %v250
  %v252 = vrot.slane %v239, %v251
  %v253 = vlaneseq
  %v254 = vshrl.u32 %v253, 7
  %v255 = vsub.s32 3, %v254
  %v256 = vrot.slane %v239, %v255
  %v261 = vmul.f32 %v237, %v244
  %v262 = vmul.f32 %v236, %v248
  %v263 = vmul.f32 %v235, %v252
  %v264 = vmul.f32 %v234, %v256
  %v265 = vpack.c.bf16 %v261, %v261
  %v266 = vpack.c.bf16 %v262, %v262
  %v267 = vpack.c.bf16 %v263, %v263
  %v268 = vpack.c.bf16 %v264, %v264
  %v273 = vunpack.c.l.b16 %v265
  %v274 = vunpack.c.l.b16 %v266
  %v275 = vunpack.c.l.b16 %v267
  %v276 = vunpack.c.l.b16 %v268
  %v277 = vpack.c.b16 %v274, %v273
  %v278 = vpack.c.b16 %v276, %v275
  %v279 = vrot.slane %v277, 6
  %v280 = vrot.slane %v278, 6
  %283 = vst [vmem:[#allocation2] sm:$0xcc] %v279
  %284 = vst [vmem:[#allocation2 + $0x8] sm:$0xcc] %v280
  %285 = vrot.lane.b32.xlu0 %v48, 15
  %v286 = vpop.permute.xlu0 %285
  %287 = vrot.lane.b32.xlu0 %v53, 15
  %v288 = vpop.permute.xlu0 %287
  %289 = vrot.lane.b32.xlu0 %v49, 15
  %v290 = vpop.permute.xlu0 %289
  %291 = vrot.lane.b32.xlu0 %v54, 15
  %v292 = vpop.permute.xlu0 %291
  %vm293 = vcmp.lt.s32.totalorder %v175, 15
  %v294 = vsel %vm293, %v290, %v292
  %v295 = vsel %vm293, %v288, %v290
  %v296 = vsel %vm293, %v286, %v288
  %v297 = vsel %vm293, %v292, %v286
  %s298 = scalar_lea.vmem %s1, 8
  %v299 = vld [vmem:[%s298] sm:$0xf]
  %v301 = vlaneseq
  %v302 = vshrl.u32 %v301, 7
  %v303 = vsub.s32 0, %v302
  %v304 = vrot.slane %v299, %v303
  %v305 = vlaneseq
  %v306 = vshrl.u32 %v305, 7
  %v307 = vsub.s32 1, %v306
  %v308 = vrot.slane %v299, %v307
  %v309 = vlaneseq
  %v310 = vshrl.u32 %v309, 7
  %v311 = vsub.s32 2, %v310
  %v312 = vrot.slane %v299, %v311
  %v313 = vlaneseq
  %v314 = vshrl.u32 %v313, 7
  %v315 = vsub.s32 3, %v314
  %v316 = vrot.slane %v299, %v315
  %v321 = vmul.f32 %v297, %v304
  %v322 = vmul.f32 %v296, %v308
  %v323 = vmul.f32 %v295, %v312
  %v324 = vmul.f32 %v294, %v316
  %v325 = vpack.c.bf16 %v321, %v321
  %v326 = vpack.c.bf16 %v322, %v322
  %v327 = vpack.c.bf16 %v323, %v323
  %v328 = vpack.c.bf16 %v324, %v324
  %v333 = vunpack.c.l.b16 %v325
  %v334 = vunpack.c.l.b16 %v326
  %v335 = vunpack.c.l.b16 %v327
  %v336 = vunpack.c.l.b16 %v328
  %v337 = vpack.c.b16 %v334, %v333
  %v338 = vpack.c.b16 %v336, %v335
  %341 = vst [vmem:[#allocation2 + $0x10] sm:$0x33] %v337
  %342 = vst [vmem:[#allocation2 + $0x18] sm:$0x33] %v338
  %343 = vrot.lane.b32.xlu0 %v48, 1
  %v344 = vpop.permute.xlu0 %343
  %345 = vrot.lane.b32.xlu0 %v53, 1
  %v346 = vpop.permute.xlu0 %345
  %347 = vrot.lane.b32.xlu0 %v49, 1
  %v348 = vpop.permute.xlu0 %347
  %349 = vrot.lane.b32.xlu0 %v54, 1
  %v350 = vpop.permute.xlu0 %349
  %vm351 = vcmp.lt.s32.totalorder %v175, 1
  %v352 = vsel %vm351, %v348, %v350
  %v353 = vsel %vm351, %v346, %v348
  %v354 = vsel %vm351, %v344, %v346
  %v355 = vsel %vm351, %v350, %v344
  %s356 = scalar_lea.vmem %s1, 12
  %v357 = vld [vmem:[%s356] sm:$0xf]
  %v359 = vlaneseq
  %v360 = vshrl.u32 %v359, 7
  %v361 = vsub.s32 0, %v360
  %v362 = vrot.slane %v357, %v361
  %v363 = vlaneseq
  %v364 = vshrl.u32 %v363, 7
  %v365 = vsub.s32 1, %v364
  %v366 = vrot.slane %v357, %v365
  %v367 = vlaneseq
  %v368 = vshrl.u32 %v367, 7
  %v369 = vsub.s32 2, %v368
  %v370 = vrot.slane %v357, %v369
  %v371 = vlaneseq
  %v372 = vshrl.u32 %v371, 7
  %v373 = vsub.s32 3, %v372
  %v374 = vrot.slane %v357, %v373
  %v379 = vmul.f32 %v355, %v362
  %v380 = vmul.f32 %v354, %v366
  %v381 = vmul.f32 %v353, %v370
  %v382 = vmul.f32 %v352, %v374
  %v383 = vpack.c.bf16 %v379, %v379
  %v384 = vpack.c.bf16 %v380, %v380
  %v385 = vpack.c.bf16 %v381, %v381
  %v386 = vpack.c.bf16 %v382, %v382
  %v391 = vunpack.c.l.b16 %v383
  %v392 = vunpack.c.l.b16 %v384
  %v393 = vunpack.c.l.b16 %v385
  %v394 = vunpack.c.l.b16 %v386
  %v395 = vpack.c.b16 %v392, %v391
  %v396 = vpack.c.b16 %v394, %v393
  %v397 = vrot.slane %v395, 6
  %v398 = vrot.slane %v396, 6
  %401 = vst [vmem:[#allocation2 + $0x10] sm:$0xcc] %v397
  %402 = vst [vmem:[#allocation2 + $0x18] sm:$0xcc] %v398
  %s403 = scalar_lea.vmem %s1, 16
  %v404 = vld [vmem:[%s403] sm:$0xf]
  %v406 = vlaneseq
  %v407 = vshrl.u32 %v406, 7
  %v408 = vsub.s32 0, %v407
  %v409 = vrot.slane %v404, %v408
  %v410 = vlaneseq
  %v411 = vshrl.u32 %v410, 7
  %v412 = vsub.s32 1, %v411
  %v413 = vrot.slane %v404, %v412
  %v414 = vlaneseq
  %v415 = vshrl.u32 %v414, 7
  %v416 = vsub.s32 2, %v415
  %v417 = vrot.slane %v404, %v416
  %v418 = vlaneseq
  %v419 = vshrl.u32 %v418, 7
  %v420 = vsub.s32 3, %v419
  %v421 = vrot.slane %v404, %v420
  %v422 = vcombine.low %v409, %v413
  %v423 = vcombine.low %v417, %v421
  %v426 = vmul.f32 %v48, %v422
  %v427 = vmul.f32 %v49, %v423
  %v430 = vcombine.high %v426, %v426
  %v431 = vcombine.high %v427, %v427
  %v434 = vpack.c.bf16 %v426, %v426
  %v435 = vpack.c.bf16 %v430, %v430
  %v436 = vpack.c.bf16 %v427, %v427
  %v437 = vpack.c.bf16 %v431, %v431
  %v442 = vunpack.c.l.b16 %v434
  %v443 = vunpack.c.l.b16 %v435
  %v444 = vunpack.c.l.b16 %v436
  %v445 = vunpack.c.l.b16 %v437
  %v446 = vpack.c.b16 %v443, %v442
  %v447 = vpack.c.b16 %v445, %v444
  %450 = vst [vmem:[#allocation2 + $0x20] sm:$0x33] %v446
  %451 = vst [vmem:[#allocation2 + $0x28] sm:$0x33] %v447
  %452 = vrot.lane.b32.xlu0 %v48, 127
  %v453 = vpop.permute.xlu0 %452
  %454 = vrot.lane.b32.xlu0 %v53, 127
  %v455 = vpop.permute.xlu0 %454
  %456 = vrot.lane.b32.xlu0 %v49, 127
  %v457 = vpop.permute.xlu0 %456
  %458 = vrot.lane.b32.xlu0 %v54, 127
  %v459 = vpop.permute.xlu0 %458
  %vm460 = vcmp.lt.s32.totalorder %v175, 127
  %v461 = vsel %vm460, %v457, %v459
  %v462 = vsel %vm460, %v455, %v457
  %v463 = vsel %vm460, %v453, %v455
  %v464 = vsel %vm460, %v459, %v453
  %s465 = scalar_lea.vmem %s1, 20
  %v466 = vld [vmem:[%s465] sm:$0xf]
  %v468 = vlaneseq
  %v469 = vshrl.u32 %v468, 7
  %v470 = vsub.s32 0, %v469
  %v471 = vrot.slane %v466, %v470
  %v472 = vlaneseq
  %v473 = vshrl.u32 %v472, 7
  %v474 = vsub.s32 1, %v473
  %v475 = vrot.slane %v466, %v474
  %v476 = vlaneseq
  %v477 = vshrl.u32 %v476, 7
  %v478 = vsub.s32 2, %v477
  %v479 = vrot.slane %v466, %v478
  %v480 = vlaneseq
  %v481 = vshrl.u32 %v480, 7
  %v482 = vsub.s32 3, %v481
  %v483 = vrot.slane %v466, %v482
  %v488 = vmul.f32 %v463, %v471
  %v489 = vmul.f32 %v462, %v475
  %v490 = vmul.f32 %v461, %v479
  %v491 = vmul.f32 %v464, %v483
  %v492 = vpack.c.bf16 %v488, %v488
  %v493 = vpack.c.bf16 %v489, %v489
  %v494 = vpack.c.bf16 %v490, %v490
  %v495 = vpack.c.bf16 %v491, %v491
  %v500 = vunpack.c.l.b16 %v492
  %v501 = vunpack.c.l.b16 %v493
  %v502 = vunpack.c.l.b16 %v494
  %v503 = vunpack.c.l.b16 %v495
  %v504 = vpack.c.b16 %v501, %v500
  %v505 = vpack.c.b16 %v503, %v502
  %v506 = vrot.slane %v504, 6
  %v507 = vrot.slane %v505, 6
  %510 = vst [vmem:[#allocation2 + $0x20] sm:$0xcc] %v506
  %511 = vst [vmem:[#allocation2 + $0x28] sm:$0xcc] %v507
  %512 = vrot.lane.b32.xlu0 %v48, 113
  %v513 = vpop.permute.xlu0 %512
  %514 = vrot.lane.b32.xlu0 %v53, 113
  %v515 = vpop.permute.xlu0 %514
  %516 = vrot.lane.b32.xlu0 %v49, 113
  %v517 = vpop.permute.xlu0 %516
  %518 = vrot.lane.b32.xlu0 %v54, 113
  %v519 = vpop.permute.xlu0 %518
  %vm520 = vcmp.lt.s32.totalorder %v175, 113
  %v521 = vsel %vm520, %v517, %v519
  %v522 = vsel %vm520, %v515, %v517
  %v523 = vsel %vm520, %v513, %v515
  %v524 = vsel %vm520, %v519, %v513
  %s525 = scalar_lea.vmem %s1, 24
  %v526 = vld [vmem:[%s525] sm:$0xf]
  %v528 = vlaneseq
  %v529 = vshrl.u32 %v528, 7
  %v530 = vsub.s32 0, %v529
  %v531 = vrot.slane %v526, %v530
  %v532 = vlaneseq
  %v533 = vshrl.u32 %v532, 7
  %v534 = vsub.s32 1, %v533
  %v535 = vrot.slane %v526, %v534
  %v536 = vlaneseq
  %v537 = vshrl.u32 %v536, 7
  %v538 = vsub.s32 2, %v537
  %v539 = vrot.slane %v526, %v538
  %v540 = vlaneseq
  %v541 = vshrl.u32 %v540, 7
  %v542 = vsub.s32 3, %v541
  %v543 = vrot.slane %v526, %v542
  %v548 = vmul.f32 %v523, %v531
  %v549 = vmul.f32 %v522, %v535
  %v550 = vmul.f32 %v521, %v539
  %v551 = vmul.f32 %v524, %v543
  %v552 = vpack.c.bf16 %v548, %v548
  %v553 = vpack.c.bf16 %v549, %v549
  %v554 = vpack.c.bf16 %v550, %v550
  %v555 = vpack.c.bf16 %v551, %v551
  %v560 = vunpack.c.l.b16 %v552
  %v561 = vunpack.c.l.b16 %v553
  %v562 = vunpack.c.l.b16 %v554
  %v563 = vunpack.c.l.b16 %v555
  %v564 = vpack.c.b16 %v561, %v560
  %v565 = vpack.c.b16 %v563, %v562
  %568 = vst [vmem:[#allocation2 + $0x30] sm:$0x33] %v564
  %569 = vst [vmem:[#allocation2 + $0x38] sm:$0x33] %v565
  %570 = vrot.lane.b32.xlu0 %v48, 112
  %v571 = vpop.permute.xlu0 %570
  %572 = vrot.lane.b32.xlu0 %v53, 112
  %v573 = vpop.permute.xlu0 %572
  %574 = vrot.lane.b32.xlu0 %v49, 112
  %v575 = vpop.permute.xlu0 %574
  %576 = vrot.lane.b32.xlu0 %v54, 112
  %v577 = vpop.permute.xlu0 %576
  %vm578 = vcmp.lt.s32.totalorder %v175, 112
  %v579 = vsel %vm578, %v575, %v577
  %v580 = vsel %vm578, %v573, %v575
  %v581 = vsel %vm578, %v571, %v573
  %v582 = vsel %vm578, %v577, %v571
  %s583 = scalar_lea.vmem %s1, 28
  %v584 = vld [vmem:[%s583] sm:$0xf]
  %v586 = vlaneseq
  %v587 = vshrl.u32 %v586, 7
  %v588 = vsub.s32 0, %v587
  %v589 = vrot.slane %v584, %v588
  %v590 = vlaneseq
  %v591 = vshrl.u32 %v590, 7
  %v592 = vsub.s32 1, %v591
  %v593 = vrot.slane %v584, %v592
  %v594 = vlaneseq
  %v595 = vshrl.u32 %v594, 7
  %v596 = vsub.s32 2, %v595
  %v597 = vrot.slane %v584, %v596
  %v598 = vlaneseq
  %v599 = vshrl.u32 %v598, 7
  %v600 = vsub.s32 3, %v599
  %v601 = vrot.slane %v584, %v600
  %v606 = vmul.f32 %v581, %v589
  %v607 = vmul.f32 %v580, %v593
  %v608 = vmul.f32 %v579, %v597
  %v609 = vmul.f32 %v582, %v601
  %v610 = vpack.c.bf16 %v606, %v606
  %v611 = vpack.c.bf16 %v607, %v607
  %v612 = vpack.c.bf16 %v608, %v608
  %v613 = vpack.c.bf16 %v609, %v609
  %v618 = vunpack.c.l.b16 %v610
  %v619 = vunpack.c.l.b16 %v611
  %v620 = vunpack.c.l.b16 %v612
  %v621 = vunpack.c.l.b16 %v613
  %v622 = vpack.c.b16 %v619, %v618
  %v623 = vpack.c.b16 %v621, %v620
  %v624 = vrot.slane %v622, 6
  %v625 = vrot.slane %v623, 6
  %628 = vst [vmem:[#allocation2 + $0x30] sm:$0xcc] %v624
  %629 = vst [vmem:[#allocation2 + $0x38] sm:$0xcc] %v625
  %630 = vrot.lane.b32.xlu0 %v48, 111
  %v631 = vpop.permute.xlu0 %630
  %632 = vrot.lane.b32.xlu0 %v53, 111
  %v633 = vpop.permute.xlu0 %632
  %634 = vrot.lane.b32.xlu0 %v49, 111
  %v635 = vpop.permute.xlu0 %634
  %636 = vrot.lane.b32.xlu0 %v54, 111
  %v637 = vpop.permute.xlu0 %636
  %vm638 = vcmp.lt.s32.totalorder %v175, 111
  %v639 = vsel %vm638, %v635, %v637
  %v640 = vsel %vm638, %v633, %v635
  %v641 = vsel %vm638, %v631, %v633
  %v642 = vsel %vm638, %v637, %v631
  %s643 = scalar_lea.vmem %s1, 32
  %v644 = vld [vmem:[%s643] sm:$0xf]
  %v646 = vlaneseq
  %v647 = vshrl.u32 %v646, 7
  %v648 = vsub.s32 0, %v647
  %v649 = vrot.slane %v644, %v648
  %v650 = vlaneseq
  %v651 = vshrl.u32 %v650, 7
  %v652 = vsub.s32 1, %v651
  %v653 = vrot.slane %v644, %v652
  %v654 = vlaneseq
  %v655 = vshrl.u32 %v654, 7
  %v656 = vsub.s32 2, %v655
  %v657 = vrot.slane %v644, %v656
  %v658 = vlaneseq
  %v659 = vshrl.u32 %v658, 7
  %v660 = vsub.s32 3, %v659
  %v661 = vrot.slane %v644, %v660
  %v666 = vmul.f32 %v641, %v649
  %v667 = vmul.f32 %v640, %v653
  %v668 = vmul.f32 %v639, %v657
  %v669 = vmul.f32 %v642, %v661
  %v670 = vpack.c.bf16 %v666, %v666
  %v671 = vpack.c.bf16 %v667, %v667
  %v672 = vpack.c.bf16 %v668, %v668
  %v673 = vpack.c.bf16 %v669, %v669
  %v678 = vunpack.c.l.b16 %v670
  %v679 = vunpack.c.l.b16 %v671
  %v680 = vunpack.c.l.b16 %v672
  %v681 = vunpack.c.l.b16 %v673
  %v682 = vpack.c.b16 %v679, %v678
  %v683 = vpack.c.b16 %v681, %v680
  %686 = vst [vmem:[#allocation2 + $0x40] sm:$0x33] %v682
  %687 = vst [vmem:[#allocation2 + $0x48] sm:$0x33] %v683
  %v688 = vld [vmem:[%s2] sm:$0xf]
  %v689 = vld [vmem:[#allocation2] sm:$0xff]
  %v690 = vld [vmem:[#allocation2 + $0x8] sm:$0xff]
  %v691 = vld [vmem:[#allocation2 + $0x10] sm:$0xff]
  %v692 = vld [vmem:[#allocation2 + $0x18] sm:$0xff]
  %v693 = vld [vmem:[#allocation2 + $0x20] sm:$0xff]
  %v694 = vld [vmem:[#allocation2 + $0x28] sm:$0xff]
  %v695 = vld [vmem:[#allocation2 + $0x30] sm:$0xff]
  %v696 = vld [vmem:[#allocation2 + $0x38] sm:$0xff]
  %v697 = vld [vmem:[#allocation2 + $0x40] sm:$0x33]
  %v698 = vld [vmem:[#allocation2 + $0x48] sm:$0x33]
  %v699 = vld [vmem:[%s3] sm:$0xff]
  %701 = vset.pattern.permute.xlu0 0
  %702 = vperm.xlu0 %701, %v699
  %v703 = vpop.permute.xlu0 %702
  %v715 = vunpack.c.l.b16 %v689
  %v716 = vunpack.c.h.b16 %v689
  %v717 = vunpack.c.l.b16 %v690
  %v718 = vunpack.c.h.b16 %v690
  %v719 = vunpack.c.l.b16 %v691
  %v720 = vunpack.c.h.b16 %v691
  %v721 = vunpack.c.l.b16 %v692
  %v722 = vunpack.c.h.b16 %v692
  %v723 = vunpack.c.l.b16 %v693
  %v724 = vunpack.c.h.b16 %v693
  %v725 = vunpack.c.l.b16 %v694
  %v726 = vunpack.c.h.b16 %v694
  %v727 = vunpack.c.l.b16 %v695
  %v728 = vunpack.c.h.b16 %v695
  %v729 = vunpack.c.l.b16 %v696
  %v730 = vunpack.c.h.b16 %v696
  %v731 = vunpack.c.l.b16 %v697
  %v732 = vunpack.c.h.b16 %v697
  %v733 = vunpack.c.l.b16 %v698
  %v734 = vunpack.c.h.b16 %v698
  %v735 = vpack.c.b16 %v719, %v715
  %v736 = vpack.c.b16 %v720, %v716
  %v737 = vpack.c.b16 %v721, %v717
  %v738 = vpack.c.b16 %v722, %v718
  %v739 = vpack.c.b16 %v727, %v723
  %v740 = vpack.c.b16 %v728, %v724
  %v741 = vpack.c.b16 %v729, %v725
  %v742 = vpack.c.b16 %v730, %v726
  %v743 = vpack.c.b16 %v731, %v731
  %v744 = vpack.c.b16 %v732, %v732
  %v745 = vpack.c.b16 %v733, %v733
  %v746 = vpack.c.b16 %v734, %v734
  %vm755 = vcmask 293888
  %v757 = vsel %vm755, %v688, 0
  %v760 = vsel %vm71, %v743, 0
  %v763 = vsel %vm71, %v744, 0
  %v766 = vsel %vm71, %v745, 0
  %v769 = vsel %vm71, %v746, 0
  %771 = vmatprep.subr.bf16.mxu0 0
  %772 = vmatpush1.bf16.msra.mxu0 0
  %773 = vmatprep.subr.bf16.mxu0 0
  %774 = vmatpush1.bf16.msra.mxu0 0
  %775 = vmatprep.subr.bf16.mxu0 0
  %776 = vmatpush1.bf16.msra.mxu0 0
  %777 = vmatprep.subr.bf16.mxu0 0
  %778 = vmatpush1.bf16.msra.mxu0 0
  %779 = vmatprep.subr.bf16.mxu0 0
  %780 = vmatpush1.bf16.msra.mxu0 0
  %781 = vmatprep.subr.bf16.mxu0 %v763
  %782 = vmatpush1.bf16.msra.mxu0 %v760
  %783 = vmatprep.subr.bf16.mxu0 %v740
  %784 = vmatpush1.bf16.msra.mxu0 %v739
  %785 = vmatprep.subr.bf16.mxu0 %v736
  %786 = vmatpush1.bf16.msra.mxu0 %v735
  %787 = vmatprep.subr.bf16.mxu0 0
  %788 = vmatpush2.bf16.msra.mxu0 0
  %789 = vmatprep.subr.bf16.mxu0 0
  %790 = vmatpush2.bf16.msra.mxu0 0
  %791 = vmatprep.subr.bf16.mxu0 0
  %792 = vmatpush2.bf16.msra.mxu0 0
  %793 = vmatprep.subr.bf16.mxu0 0
  %794 = vmatpush2.bf16.msra.mxu0 0
  %795 = vmatprep.subr.bf16.mxu0 0
  %796 = vmatpush2.bf16.msra.mxu0 0
  %797 = vmatprep.subr.bf16.mxu0 0
  %798 = vmatpush2.bf16.msra.mxu0 0
  %799 = vmatprep.subr.bf16.mxu0 0
  %800 = vmatpush2.bf16.msra.mxu0 0
  %801 = vmatprep.subr.bf16.mxu0 0
  %802 = vmatpush2.bf16.msra.mxu0 0
  %803 = vmatprep.mubr.bf16.mxu0 0
  %804 = vmatmul.mubr.bf16.gmra.mxu0 %v757
  %v805 = vpop.f32.mrf.mxu0
  %v806 = vadd.f32 %v703, %v805
  %v807 = vpop.f32.mrf.mxu0
  %v808 = vadd.f32 %v703, %v807
  %v809 = vpop.f32.mrf.mxu0
  %v810 = vpop.f32.mrf.mxu0
  %811 = vdwg.mxu0
  %812 = vmatprep.subr.bf16.mxu0 0
  %813 = vmatpush1.bf16.msra.mxu0 0
  %814 = vmatprep.subr.bf16.mxu0 0
  %815 = vmatpush1.bf16.msra.mxu0 0
  %816 = vmatprep.subr.bf16.mxu0 0
  %817 = vmatpush1.bf16.msra.mxu0 0
  %818 = vmatprep.subr.bf16.mxu0 0
  %819 = vmatpush1.bf16.msra.mxu0 0
  %820 = vmatprep.subr.bf16.mxu0 0
  %821 = vmatpush1.bf16.msra.mxu0 0
  %822 = vmatprep.subr.bf16.mxu0 %v769
  %823 = vmatpush1.bf16.msra.mxu0 %v766
  %824 = vmatprep.subr.bf16.mxu0 %v742
  %825 = vmatpush1.bf16.msra.mxu0 %v741
  %826 = vmatprep.subr.bf16.mxu0 %v738
  %827 = vmatpush1.bf16.msra.mxu0 %v737
  %828 = vmatprep.subr.bf16.mxu0 0
  %829 = vmatpush2.bf16.msra.mxu0 0
  %830 = vmatprep.subr.bf16.mxu0 0
  %831 = vmatpush2.bf16.msra.mxu0 0
  %832 = vmatprep.subr.bf16.mxu0 0
  %833 = vmatpush2.bf16.msra.mxu0 0
  %834 = vmatprep.subr.bf16.mxu0 0
  %835 = vmatpush2.bf16.msra.mxu0 0
  %836 = vmatprep.subr.bf16.mxu0 0
  %837 = vmatpush2.bf16.msra.mxu0 0
  %838 = vmatprep.subr.bf16.mxu0 0
  %839 = vmatpush2.bf16.msra.mxu0 0
  %840 = vmatprep.subr.bf16.mxu0 0
  %841 = vmatpush2.bf16.msra.mxu0 0
  %842 = vmatprep.subr.bf16.mxu0 0
  %843 = vmatpush2.bf16.msra.mxu0 0
  %844 = vmatprep.mubr.bf16.mxu0 0
  %845 = vmatmul.mubr.bf16.gmra.mxu0 %v757
  %v846 = vpop.f32.mrf.mxu0
  %v847 = vadd.f32 %v703, %v846
  %v848 = vpop.f32.mrf.mxu0
  %v849 = vadd.f32 %v703, %v848
  %v850 = vpop.f32.mrf.mxu0
  %v851 = vpop.f32.mrf.mxu0
  %852 = vdwg.mxu0
  %v853 = vmax.f32 %v806, 0.0
  %v854 = vmax.f32 %v808, 0.0
  %v855 = vmax.f32 %v847, 0.0
  %v856 = vmax.f32 %v849, 0.0
  %857 = vrot.lane.b32.xlu0 %v853, 17
  %v858 = vpop.permute.xlu0 %857
  %859 = vrot.lane.b32.xlu0 %v854, 17
  %v860 = vpop.permute.xlu0 %859
  %861 = vrot.lane.b32.xlu0 %v855, 17
  %v862 = vpop.permute.xlu0 %861
  %863 = vrot.lane.b32.xlu0 %v856, 17
  %v864 = vpop.permute.xlu0 %863
  %v865 = vsel %vm176, %v862, %v864
  %v866 = vsel %vm176, %v860, %v862
  %v867 = vsel %vm176, %v858, %v860
  %v868 = vsel %vm176, %v864, %v858
  %v869 = vld [vmem:[%s1] sm:$0xf]
  %v871 = vlaneseq
  %v872 = vshrl.u32 %v871, 7
  %v873 = vsub.s32 0, %v872
  %v874 = vrot.slane %v869, %v873
  %v875 = vlaneseq
  %v876 = vshrl.u32 %v875, 7
  %v877 = vsub.s32 1, %v876
  %v878 = vrot.slane %v869, %v877
  %v879 = vlaneseq
  %v880 = vshrl.u32 %v879, 7
  %v881 = vsub.s32 2, %v880
  %v882 = vrot.slane %v869, %v881
  %v883 = vlaneseq
  %v884 = vshrl.u32 %v883, 7
  %v885 = vsub.s32 3, %v884
  %v886 = vrot.slane %v869, %v885
  %v891 = vmul.f32 %v868, %v874
  %v892 = vmul.f32 %v867, %v878
  %v893 = vmul.f32 %v866, %v882
  %v894 = vmul.f32 %v865, %v886
  %v895 = vpack.c.bf16 %v891, %v891
  %v896 = vpack.c.bf16 %v892, %v892
  %v897 = vpack.c.bf16 %v893, %v893
  %v898 = vpack.c.bf16 %v894, %v894
  %v903 = vunpack.c.l.b16 %v895
  %v904 = vunpack.c.l.b16 %v896
  %v905 = vunpack.c.l.b16 %v897
  %v906 = vunpack.c.l.b16 %v898
  %v907 = vpack.c.b16 %v904, %v903
  %v908 = vpack.c.b16 %v906, %v905
  %911 = vst [vmem:[#allocation2] sm:$0xff] %v907
  %912 = vst [vmem:[#allocation2 + $0x8] sm:$0xff] %v908
  %913 = vrot.lane.b32.xlu0 %v853, 16
  %v914 = vpop.permute.xlu0 %913
  %915 = vrot.lane.b32.xlu0 %v854, 16
  %v916 = vpop.permute.xlu0 %915
  %917 = vrot.lane.b32.xlu0 %v855, 16
  %v918 = vpop.permute.xlu0 %917
  %919 = vrot.lane.b32.xlu0 %v856, 16
  %v920 = vpop.permute.xlu0 %919
  %v921 = vsel %vm233, %v918, %v920
  %v922 = vsel %vm233, %v916, %v918
  %v923 = vsel %vm233, %v914, %v916
  %v924 = vsel %vm233, %v920, %v914
  %v925 = vld [vmem:[%s238] sm:$0xf]
  %v927 = vlaneseq
  %v928 = vshrl.u32 %v927, 7
  %v929 = vsub.s32 0, %v928
  %v930 = vrot.slane %v925, %v929
  %v931 = vlaneseq
  %v932 = vshrl.u32 %v931, 7
  %v933 = vsub.s32 1, %v932
  %v934 = vrot.slane %v925, %v933
  %v935 = vlaneseq
  %v936 = vshrl.u32 %v935, 7
  %v937 = vsub.s32 2, %v936
  %v938 = vrot.slane %v925, %v937
  %v939 = vlaneseq
  %v940 = vshrl.u32 %v939, 7
  %v941 = vsub.s32 3, %v940
  %v942 = vrot.slane %v925, %v941
  %v947 = vmul.f32 %v924, %v930
  %v948 = vmul.f32 %v923, %v934
  %v949 = vmul.f32 %v922, %v938
  %v950 = vmul.f32 %v921, %v942
  %v951 = vpack.c.bf16 %v947, %v947
  %v952 = vpack.c.bf16 %v948, %v948
  %v953 = vpack.c.bf16 %v949, %v949
  %v954 = vpack.c.bf16 %v950, %v950
  %v959 = vunpack.c.l.b16 %v951
  %v960 = vunpack.c.l.b16 %v952
  %v961 = vunpack.c.l.b16 %v953
  %v962 = vunpack.c.l.b16 %v954
  %v963 = vpack.c.b16 %v960, %v959
  %v964 = vpack.c.b16 %v962, %v961
  %967 = vst [vmem:[#allocation2 + $0x10] sm:$0xff] %v963
  %968 = vst [vmem:[#allocation2 + $0x18] sm:$0xff] %v964
  %969 = vrot.lane.b32.xlu0 %v853, 15
  %v970 = vpop.permute.xlu0 %969
  %971 = vrot.lane.b32.xlu0 %v854, 15
  %v972 = vpop.permute.xlu0 %971
  %973 = vrot.lane.b32.xlu0 %v855, 15
  %v974 = vpop.permute.xlu0 %973
  %975 = vrot.lane.b32.xlu0 %v856, 15
  %v976 = vpop.permute.xlu0 %975
  %v977 = vsel %vm293, %v974, %v976
  %v978 = vsel %vm293, %v972, %v974
  %v979 = vsel %vm293, %v970, %v972
  %v980 = vsel %vm293, %v976, %v970
  %v981 = vld [vmem:[%s298] sm:$0xf]
  %v983 = vlaneseq
  %v984 = vshrl.u32 %v983, 7
  %v985 = vsub.s32 0, %v984
  %v986 = vrot.slane %v981, %v985
  %v987 = vlaneseq
  %v988 = vshrl.u32 %v987, 7
  %v989 = vsub.s32 1, %v988
  %v990 = vrot.slane %v981, %v989
  %v991 = vlaneseq
  %v992 = vshrl.u32 %v991, 7
  %v993 = vsub.s32 2, %v992
  %v994 = vrot.slane %v981, %v993
  %v995 = vlaneseq
  %v996 = vshrl.u32 %v995, 7
  %v997 = vsub.s32 3, %v996
  %v998 = vrot.slane %v981, %v997
  %v1003 = vmul.f32 %v980, %v986
  %v1004 = vmul.f32 %v979, %v990
  %v1005 = vmul.f32 %v978, %v994
  %v1006 = vmul.f32 %v977, %v998
  %v1007 = vpack.c.bf16 %v1003, %v1003
  %v1008 = vpack.c.bf16 %v1004, %v1004
  %v1009 = vpack.c.bf16 %v1005, %v1005
  %v1010 = vpack.c.bf16 %v1006, %v1006
  %v1015 = vunpack.c.l.b16 %v1007
  %v1016 = vunpack.c.l.b16 %v1008
  %v1017 = vunpack.c.l.b16 %v1009
  %v1018 = vunpack.c.l.b16 %v1010
  %v1019 = vpack.c.b16 %v1016, %v1015
  %v1020 = vpack.c.b16 %v1018, %v1017
  %1023 = vst [vmem:[#allocation2 + $0x20] sm:$0xff] %v1019
  %1024 = vst [vmem:[#allocation2 + $0x28] sm:$0xff] %v1020
  %1025 = vrot.lane.b32.xlu0 %v853, 1
  %v1026 = vpop.permute.xlu0 %1025
  %1027 = vrot.lane.b32.xlu0 %v854, 1
  %v1028 = vpop.permute.xlu0 %1027
  %1029 = vrot.lane.b32.xlu0 %v855, 1
  %v1030 = vpop.permute.xlu0 %1029
  %1031 = vrot.lane.b32.xlu0 %v856, 1
  %v1032 = vpop.permute.xlu0 %1031
  %v1033 = vsel %vm351, %v1030, %v1032
  %v1034 = vsel %vm351, %v1028, %v1030
  %v1035 = vsel %vm351, %v1026, %v1028
  %v1036 = vsel %vm351, %v1032, %v1026
  %v1037 = vld [vmem:[%s356] sm:$0xf]
  %v1039 = vlaneseq
  %v1040 = vshrl.u32 %v1039, 7
  %v1041 = vsub.s32 0, %v1040
  %v1042 = vrot.slane %v1037, %v1041
  %v1043 = vlaneseq
  %v1044 = vshrl.u32 %v1043, 7
  %v1045 = vsub.s32 1, %v1044
  %v1046 = vrot.slane %v1037, %v1045
  %v1047 = vlaneseq
  %v1048 = vshrl.u32 %v1047, 7
  %v1049 = vsub.s32 2, %v1048
  %v1050 = vrot.slane %v1037, %v1049
  %v1051 = vlaneseq
  %v1052 = vshrl.u32 %v1051, 7
  %v1053 = vsub.s32 3, %v1052
  %v1054 = vrot.slane %v1037, %v1053
  %v1059 = vmul.f32 %v1036, %v1042
  %v1060 = vmul.f32 %v1035, %v1046
  %v1061 = vmul.f32 %v1034, %v1050
  %v1062 = vmul.f32 %v1033, %v1054
  %v1063 = vpack.c.bf16 %v1059, %v1059
  %v1064 = vpack.c.bf16 %v1060, %v1060
  %v1065 = vpack.c.bf16 %v1061, %v1061
  %v1066 = vpack.c.bf16 %v1062, %v1062
  %v1071 = vunpack.c.l.b16 %v1063
  %v1072 = vunpack.c.l.b16 %v1064
  %v1073 = vunpack.c.l.b16 %v1065
  %v1074 = vunpack.c.l.b16 %v1066
  %v1075 = vpack.c.b16 %v1072, %v1071
  %v1076 = vpack.c.b16 %v1074, %v1073
  %1079 = vst [vmem:[#allocation2 + $0x30] sm:$0xff] %v1075
  %1080 = vst [vmem:[#allocation2 + $0x38] sm:$0xff] %v1076
  %v1081 = vld [vmem:[%s403] sm:$0xf]
  %v1083 = vlaneseq
  %v1084 = vshrl.u32 %v1083, 7
  %v1085 = vsub.s32 0, %v1084
  %v1086 = vrot.slane %v1081, %v1085
  %v1087 = vlaneseq
  %v1088 = vshrl.u32 %v1087, 7
  %v1089 = vsub.s32 1, %v1088
  %v1090 = vrot.slane %v1081, %v1089
  %v1091 = vlaneseq
  %v1092 = vshrl.u32 %v1091, 7
  %v1093 = vsub.s32 2, %v1092
  %v1094 = vrot.slane %v1081, %v1093
  %v1095 = vlaneseq
  %v1096 = vshrl.u32 %v1095, 7
  %v1097 = vsub.s32 3, %v1096
  %v1098 = vrot.slane %v1081, %v1097
  %v1103 = vmul.f32 %v853, %v1086
  %v1104 = vmul.f32 %v854, %v1090
  %v1105 = vmul.f32 %v855, %v1094
  %v1106 = vmul.f32 %v856, %v1098
  %v1107 = vpack.c.bf16 %v1103, %v1103
  %v1108 = vpack.c.bf16 %v1104, %v1104
  %v1109 = vpack.c.bf16 %v1105, %v1105
  %v1110 = vpack.c.bf16 %v1106, %v1106
  %v1115 = vunpack.c.l.b16 %v1107
  %v1116 = vunpack.c.l.b16 %v1108
  %v1117 = vunpack.c.l.b16 %v1109
  %v1118 = vunpack.c.l.b16 %v1110
  %v1119 = vpack.c.b16 %v1116, %v1115
  %v1120 = vpack.c.b16 %v1118, %v1117
  %1123 = vst [vmem:[#allocation2 + $0x40] sm:$0xff] %v1119
  %1124 = vst [vmem:[#allocation2 + $0x48] sm:$0xff] %v1120
  %1125 = vrot.lane.b32.xlu0 %v853, 127
  %v1126 = vpop.permute.xlu0 %1125
  %1127 = vrot.lane.b32.xlu0 %v854, 127
  %v1128 = vpop.permute.xlu0 %1127
  %1129 = vrot.lane.b32.xlu0 %v855, 127
  %v1130 = vpop.permute.xlu0 %1129
  %1131 = vrot.lane.b32.xlu0 %v856, 127
  %v1132 = vpop.permute.xlu0 %1131
  %v1133 = vsel %vm460, %v1130, %v1132
  %v1134 = vsel %vm460, %v1128, %v1130
  %v1135 = vsel %vm460, %v1126, %v1128
  %v1136 = vsel %vm460, %v1132, %v1126
  %v1137 = vld [vmem:[%s465] sm:$0xf]
  %v1139 = vlaneseq
  %v1140 = vshrl.u32 %v1139, 7
  %v1141 = vsub.s32 0, %v1140
  %v1142 = vrot.slane %v1137, %v1141
  %v1143 = vlaneseq
  %v1144 = vshrl.u32 %v1143, 7
  %v1145 = vsub.s32 1, %v1144
  %v1146 = vrot.slane %v1137, %v1145
  %v1147 = vlaneseq
  %v1148 = vshrl.u32 %v1147, 7
  %v1149 = vsub.s32 2, %v1148
  %v1150 = vrot.slane %v1137, %v1149
  %v1151 = vlaneseq
  %v1152 = vshrl.u32 %v1151, 7
  %v1153 = vsub.s32 3, %v1152
  %v1154 = vrot.slane %v1137, %v1153
  %v1159 = vmul.f32 %v1135, %v1142
  %v1160 = vmul.f32 %v1134, %v1146
  %v1161 = vmul.f32 %v1133, %v1150
  %v1162 = vmul.f32 %v1136, %v1154
  %v1163 = vpack.c.bf16 %v1159, %v1159
  %v1164 = vpack.c.bf16 %v1160, %v1160
  %v1165 = vpack.c.bf16 %v1161, %v1161
  %v1166 = vpack.c.bf16 %v1162, %v1162
  %v1171 = vunpack.c.l.b16 %v1163
  %v1172 = vunpack.c.l.b16 %v1164
  %v1173 = vunpack.c.l.b16 %v1165
  %v1174 = vunpack.c.l.b16 %v1166
  %v1175 = vpack.c.b16 %v1172, %v1171
  %v1176 = vpack.c.b16 %v1174, %v1173
  %1179 = vst [vmem:[#allocation2 + $0x50] sm:$0xff] %v1175
  %1180 = vst [vmem:[#allocation2 + $0x58] sm:$0xff] %v1176
  %1181 = vrot.lane.b32.xlu0 %v853, 113
  %v1182 = vpop.permute.xlu0 %1181
  %1183 = vrot.lane.b32.xlu0 %v854, 113
  %v1184 = vpop.permute.xlu0 %1183
  %1185 = vrot.lane.b32.xlu0 %v855, 113
  %v1186 = vpop.permute.xlu0 %1185
  %1187 = vrot.lane.b32.xlu0 %v856, 113
  %v1188 = vpop.permute.xlu0 %1187
  %v1189 = vsel %vm520, %v1186, %v1188
  %v1190 = vsel %vm520, %v1184, %v1186
  %v1191 = vsel %vm520, %v1182, %v1184
  %v1192 = vsel %vm520, %v1188, %v1182
  %v1193 = vld [vmem:[%s525] sm:$0xf]
  %v1195 = vlaneseq
  %v1196 = vshrl.u32 %v1195, 7
  %v1197 = vsub.s32 0, %v1196
  %v1198 = vrot.slane %v1193, %v1197
  %v1199 = vlaneseq
  %v1200 = vshrl.u32 %v1199, 7
  %v1201 = vsub.s32 1, %v1200
  %v1202 = vrot.slane %v1193, %v1201
  %v1203 = vlaneseq
  %v1204 = vshrl.u32 %v1203, 7
  %v1205 = vsub.s32 2, %v1204
  %v1206 = vrot.slane %v1193, %v1205
  %v1207 = vlaneseq
  %v1208 = vshrl.u32 %v1207, 7
  %v1209 = vsub.s32 3, %v1208
  %v1210 = vrot.slane %v1193, %v1209
  %v1215 = vmul.f32 %v1191, %v1198
  %v1216 = vmul.f32 %v1190, %v1202
  %v1217 = vmul.f32 %v1189, %v1206
  %v1218 = vmul.f32 %v1192, %v1210
  %v1219 = vpack.c.bf16 %v1215, %v1215
  %v1220 = vpack.c.bf16 %v1216, %v1216
  %v1221 = vpack.c.bf16 %v1217, %v1217
  %v1222 = vpack.c.bf16 %v1218, %v1218
  %v1227 = vunpack.c.l.b16 %v1219
  %v1228 = vunpack.c.l.b16 %v1220
  %v1229 = vunpack.c.l.b16 %v1221
  %v1230 = vunpack.c.l.b16 %v1222
  %v1231 = vpack.c.b16 %v1228, %v1227
  %v1232 = vpack.c.b16 %v1230, %v1229
  %1235 = vst [vmem:[#allocation2 + $0x60] sm:$0xff] %v1231
  %1236 = vst [vmem:[#allocation2 + $0x68] sm:$0xff] %v1232
  %1237 = vrot.lane.b32.xlu0 %v853, 112
  %v1238 = vpop.permute.xlu0 %1237
  %1239 = vrot.lane.b32.xlu0 %v854, 112
  %v1240 = vpop.permute.xlu0 %1239
  %1241 = vrot.lane.b32.xlu0 %v855, 112
  %v1242 = vpop.permute.xlu0 %1241
  %1243 = vrot.lane.b32.xlu0 %v856, 112
  %v1244 = vpop.permute.xlu0 %1243
  %v1245 = vsel %vm578, %v1242, %v1244
  %v1246 = vsel %vm578, %v1240, %v1242
  %v1247 = vsel %vm578, %v1238, %v1240
  %v1248 = vsel %vm578, %v1244, %v1238
  %v1249 = vld [vmem:[%s583] sm:$0xf]
  %v1251 = vlaneseq
  %v1252 = vshrl.u32 %v1251, 7
  %v1253 = vsub.s32 0, %v1252
  %v1254 = vrot.slane %v1249, %v1253
  %v1255 = vlaneseq
  %v1256 = vshrl.u32 %v1255, 7
  %v1257 = vsub.s32 1, %v1256
  %v1258 = vrot.slane %v1249, %v1257
  %v1259 = vlaneseq
  %v1260 = vshrl.u32 %v1259, 7
  %v1261 = vsub.s32 2, %v1260
  %v1262 = vrot.slane %v1249, %v1261
  %v1263 = vlaneseq
  %v1264 = vshrl.u32 %v1263, 7
  %v1265 = vsub.s32 3, %v1264
  %v1266 = vrot.slane %v1249, %v1265
  %v1271 = vmul.f32 %v1247, %v1254
  %v1272 = vmul.f32 %v1246, %v1258
  %v1273 = vmul.f32 %v1245, %v1262
  %v1274 = vmul.f32 %v1248, %v1266
  %v1275 = vpack.c.bf16 %v1271, %v1271
  %v1276 = vpack.c.bf16 %v1272, %v1272
  %v1277 = vpack.c.bf16 %v1273, %v1273
  %v1278 = vpack.c.bf16 %v1274, %v1274
  %v1283 = vunpack.c.l.b16 %v1275
  %v1284 = vunpack.c.l.b16 %v1276
  %v1285 = vunpack.c.l.b16 %v1277
  %v1286 = vunpack.c.l.b16 %v1278
  %v1287 = vpack.c.b16 %v1284, %v1283
  %v1288 = vpack.c.b16 %v1286, %v1285
  %1291 = vst [vmem:[#allocation2 + $0x70] sm:$0xff] %v1287
  %1292 = vst [vmem:[#allocation2 + $0x78] sm:$0xff] %v1288
  %1293 = vrot.lane.b32.xlu0 %v853, 111
  %v1294 = vpop.permute.xlu0 %1293
  %1295 = vrot.lane.b32.xlu0 %v854, 111
  %v1296 = vpop.permute.xlu0 %1295
  %1297 = vrot.lane.b32.xlu0 %v855, 111
  %v1298 = vpop.permute.xlu0 %1297
  %1299 = vrot.lane.b32.xlu0 %v856, 111
  %v1300 = vpop.permute.xlu0 %1299
  %v1301 = vsel %vm638, %v1298, %v1300
  %v1302 = vsel %vm638, %v1296, %v1298
  %v1303 = vsel %vm638, %v1294, %v1296
  %v1304 = vsel %vm638, %v1300, %v1294
  %v1305 = vld [vmem:[%s643] sm:$0xf]
  %v1307 = vlaneseq
  %v1308 = vshrl.u32 %v1307, 7
  %v1309 = vsub.s32 0, %v1308
  %v1310 = vrot.slane %v1305, %v1309
  %v1311 = vlaneseq
  %v1312 = vshrl.u32 %v1311, 7
  %v1313 = vsub.s32 1, %v1312
  %v1314 = vrot.slane %v1305, %v1313
  %v1315 = vlaneseq
  %v1316 = vshrl.u32 %v1315, 7
  %v1317 = vsub.s32 2, %v1316
  %v1318 = vrot.slane %v1305, %v1317
  %v1319 = vlaneseq
  %v1320 = vshrl.u32 %v1319, 7
  %v1321 = vsub.s32 3, %v1320
  %v1322 = vrot.slane %v1305, %v1321
  %v1327 = vmul.f32 %v1303, %v1310
  %v1328 = vmul.f32 %v1302, %v1314
  %v1329 = vmul.f32 %v1301, %v1318
  %v1330 = vmul.f32 %v1304, %v1322
  %v1331 = vpack.c.bf16 %v1327, %v1327
  %v1332 = vpack.c.bf16 %v1328, %v1328
  %v1333 = vpack.c.bf16 %v1329, %v1329
  %v1334 = vpack.c.bf16 %v1330, %v1330
  %v1339 = vunpack.c.l.b16 %v1331
  %v1340 = vunpack.c.l.b16 %v1332
  %v1341 = vunpack.c.l.b16 %v1333
  %v1342 = vunpack.c.l.b16 %v1334
  %v1343 = vpack.c.b16 %v1340, %v1339
  %v1344 = vpack.c.b16 %v1342, %v1341
  %1347 = vst [vmem:[#allocation2 + $0x80] sm:$0xff] %v1343
  %1348 = vst [vmem:[#allocation2 + $0x88] sm:$0xff] %v1344
  %v1349 = vld [vmem:[%s4] sm:$0xf]
  %v1350 = vld [vmem:[#allocation2] sm:$0xff]
  %v1351 = vld [vmem:[#allocation2 + $0x8] sm:$0xff]
  %v1352 = vld [vmem:[#allocation2 + $0x10] sm:$0xff]
  %v1353 = vld [vmem:[#allocation2 + $0x18] sm:$0xff]
  %v1354 = vld [vmem:[#allocation2 + $0x20] sm:$0xff]
  %v1355 = vld [vmem:[#allocation2 + $0x28] sm:$0xff]
  %v1356 = vld [vmem:[#allocation2 + $0x30] sm:$0xff]
  %v1357 = vld [vmem:[#allocation2 + $0x38] sm:$0xff]
  %v1358 = vld [vmem:[#allocation2 + $0x40] sm:$0xff]
  %v1359 = vld [vmem:[#allocation2 + $0x48] sm:$0xff]
  %v1360 = vld [vmem:[#allocation2 + $0x50] sm:$0xff]
  %v1361 = vld [vmem:[#allocation2 + $0x58] sm:$0xff]
  %v1362 = vld [vmem:[#allocation2 + $0x60] sm:$0xff]
  %v1363 = vld [vmem:[#allocation2 + $0x68] sm:$0xff]
  %v1364 = vld [vmem:[#allocation2 + $0x70] sm:$0xff]
  %v1365 = vld [vmem:[#allocation2 + $0x78] sm:$0xff]
  %v1366 = vld [vmem:[#allocation2 + $0x80] sm:$0xff]
  %v1367 = vld [vmem:[#allocation2 + $0x88] sm:$0xff]
  %v1368 = vld [vmem:[%s5] sm:$0xff]
  %1370 = vset.pattern.permute.xlu0 0
  %1371 = vperm.xlu0 %1370, %v1368
  %v1372 = vpop.permute.xlu0 %1371
  %v1392 = vunpack.c.l.b16 %v1350
  %v1393 = vunpack.c.h.b16 %v1350
  %v1394 = vunpack.c.l.b16 %v1351
  %v1395 = vunpack.c.h.b16 %v1351
  %v1396 = vunpack.c.l.b16 %v1352
  %v1397 = vunpack.c.h.b16 %v1352
  %v1398 = vunpack.c.l.b16 %v1353
  %v1399 = vunpack.c.h.b16 %v1353
  %v1400 = vunpack.c.l.b16 %v1354
  %v1401 = vunpack.c.h.b16 %v1354
  %v1402 = vunpack.c.l.b16 %v1355
  %v1403 = vunpack.c.h.b16 %v1355
  %v1404 = vunpack.c.l.b16 %v1356
  %v1405 = vunpack.c.h.b16 %v1356
  %v1406 = vunpack.c.l.b16 %v1357
  %v1407 = vunpack.c.h.b16 %v1357
  %v1408 = vunpack.c.l.b16 %v1358
  %v1409 = vunpack.c.h.b16 %v1358
  %v1410 = vunpack.c.l.b16 %v1359
  %v1411 = vunpack.c.h.b16 %v1359
  %v1412 = vunpack.c.l.b16 %v1360
  %v1413 = vunpack.c.h.b16 %v1360
  %v1414 = vunpack.c.l.b16 %v1361
  %v1415 = vunpack.c.h.b16 %v1361
  %v1416 = vunpack.c.l.b16 %v1362
  %v1417 = vunpack.c.h.b16 %v1362
  %v1418 = vunpack.c.l.b16 %v1363
  %v1419 = vunpack.c.h.b16 %v1363
  %v1420 = vunpack.c.l.b16 %v1364
  %v1421 = vunpack.c.h.b16 %v1364
  %v1422 = vunpack.c.l.b16 %v1365
  %v1423 = vunpack.c.h.b16 %v1365
  %v1424 = vunpack.c.l.b16 %v1366
  %v1425 = vunpack.c.h.b16 %v1366
  %v1426 = vunpack.c.l.b16 %v1367
  %v1427 = vunpack.c.h.b16 %v1367
  %v1428 = vpack.c.b16 %v1396, %v1392
  %v1429 = vpack.c.b16 %v1397, %v1393
  %v1430 = vpack.c.b16 %v1398, %v1394
  %v1431 = vpack.c.b16 %v1399, %v1395
  %v1432 = vpack.c.b16 %v1404, %v1400
  %v1433 = vpack.c.b16 %v1405, %v1401
  %v1434 = vpack.c.b16 %v1406, %v1402
  %v1435 = vpack.c.b16 %v1407, %v1403
  %v1436 = vpack.c.b16 %v1412, %v1408
  %v1437 = vpack.c.b16 %v1413, %v1409
  %v1438 = vpack.c.b16 %v1414, %v1410
  %v1439 = vpack.c.b16 %v1415, %v1411
  %v1440 = vpack.c.b16 %v1420, %v1416
  %v1441 = vpack.c.b16 %v1421, %v1417
  %v1442 = vpack.c.b16 %v1422, %v1418
  %v1443 = vpack.c.b16 %v1423, %v1419
  %v1444 = vpack.c.b16 %v1424, %v1424
  %v1445 = vpack.c.b16 %v1425, %v1425
  %v1446 = vpack.c.b16 %v1426, %v1426
  %v1447 = vpack.c.b16 %v1427, %v1427
  %vm1464 = vcmask 588800
  %v1466 = vsel %vm1464, %v1349, 0
  %vm1468 = vcmask 1043456
  %v1470 = vsel %vm1468, %v1444, 0
  %v1473 = vsel %vm1468, %v1445, 0
  %v1476 = vsel %vm1468, %v1446, 0
  %v1479 = vsel %vm1468, %v1447, 0
  %1481 = vmatprep.subr.bf16.mxu0 0
  %1482 = vmatpush1.bf16.msra.mxu0 0
  %1483 = vmatprep.subr.bf16.mxu0 0
  %1484 = vmatpush1.bf16.msra.mxu0 0
  %1485 = vmatprep.subr.bf16.mxu0 0
  %1486 = vmatpush1.bf16.msra.mxu0 0
  %1487 = vmatprep.subr.bf16.mxu0 %v1473
  %1488 = vmatpush1.bf16.msra.mxu0 %v1470
  %1489 = vmatprep.subr.bf16.mxu0 %v1441
  %1490 = vmatpush1.bf16.msra.mxu0 %v1440
  %1491 = vmatprep.subr.bf16.mxu0 %v1437
  %1492 = vmatpush1.bf16.msra.mxu0 %v1436
  %1493 = vmatprep.subr.bf16.mxu0 %v1433
  %1494 = vmatpush1.bf16.msra.mxu0 %v1432
  %1495 = vmatprep.subr.bf16.mxu0 %v1429
  %1496 = vmatpush1.bf16.msra.mxu0 %v1428
  %1497 = vmatprep.subr.bf16.mxu0 0
  %1498 = vmatpush2.bf16.msra.mxu0 0
  %1499 = vmatprep.subr.bf16.mxu0 0
  %1500 = vmatpush2.bf16.msra.mxu0 0
  %1501 = vmatprep.subr.bf16.mxu0 0
  %1502 = vmatpush2.bf16.msra.mxu0 0
  %1503 = vmatprep.subr.bf16.mxu0 0
  %1504 = vmatpush2.bf16.msra.mxu0 0
  %1505 = vmatprep.subr.bf16.mxu0 0
  %1506 = vmatpush2.bf16.msra.mxu0 0
  %1507 = vmatprep.subr.bf16.mxu0 0
  %1508 = vmatpush2.bf16.msra.mxu0 0
  %1509 = vmatprep.subr.bf16.mxu0 0
  %1510 = vmatpush2.bf16.msra.mxu0 0
  %1511 = vmatprep.subr.bf16.mxu0 0
  %1512 = vmatpush2.bf16.msra.mxu0 0
  %1513 = vmatprep.mubr.bf16.mxu0 0
  %1514 = vmatmul.mubr.bf16.gmra.mxu0 %v1466
  %v1515 = vpop.f32.mrf.mxu0
  %v1516 = vadd.f32 %v1372, %v1515
  %v1517 = vpop.f32.mrf.mxu0
  %v1518 = vadd.f32 %v1372, %v1517
  %v1519 = vpop.f32.mrf.mxu0
  %v1520 = vpop.f32.mrf.mxu0
  %1521 = vdwg.mxu0
  %1522 = vmatprep.subr.bf16.mxu0 0
  %1523 = vmatpush1.bf16.msra.mxu0 0
  %1524 = vmatprep.subr.bf16.mxu0 0
  %1525 = vmatpush1.bf16.msra.mxu0 0
  %1526 = vmatprep.subr.bf16.mxu0 0
  %1527 = vmatpush1.bf16.msra.mxu0 0
  %1528 = vmatprep.subr.bf16.mxu0 %v1479
  %1529 = vmatpush1.bf16.msra.mxu0 %v1476
  %1530 = vmatprep.subr.bf16.mxu0 %v1443
  %1531 = vmatpush1.bf16.msra.mxu0 %v1442
  %1532 = vmatprep.subr.bf16.mxu0 %v1439
  %1533 = vmatpush1.bf16.msra.mxu0 %v1438
  %1534 = vmatprep.subr.bf16.mxu0 %v1435
  %1535 = vmatpush1.bf16.msra.mxu0 %v1434
  %1536 = vmatprep.subr.bf16.mxu0 %v1431
  %1537 = vmatpush1.bf16.msra.mxu0 %v1430
  %1538 = vmatprep.subr.bf16.mxu0 0
  %1539 = vmatpush2.bf16.msra.mxu0 0
  %1540 = vmatprep.subr.bf16.mxu0 0
  %1541 = vmatpush2.bf16.msra.mxu0 0
  %1542 = vmatprep.subr.bf16.mxu0 0
  %1543 = vmatpush2.bf16.msra.mxu0 0
  %1544 = vmatprep.subr.bf16.mxu0 0
  %1545 = vmatpush2.bf16.msra.mxu0 0
  %1546 = vmatprep.subr.bf16.mxu0 0
  %1547 = vmatpush2.bf16.msra.mxu0 0
  %1548 = vmatprep.subr.bf16.mxu0 0
  %1549 = vmatpush2.bf16.msra.mxu0 0
  %1550 = vmatprep.subr.bf16.mxu0 0
  %1551 = vmatpush2.bf16.msra.mxu0 0
  %1552 = vmatprep.subr.bf16.mxu0 0
  %1553 = vmatpush2.bf16.msra.mxu0 0
  %1554 = vmatprep.mubr.bf16.mxu0 0
  %1555 = vmatmul.mubr.bf16.gmra.mxu0 %v1466
  %v1556 = vpop.f32.mrf.mxu0
  %v1557 = vadd.f32 %v1372, %v1556
  %v1558 = vpop.f32.mrf.mxu0
  %v1559 = vadd.f32 %v1372, %v1558
  %v1560 = vpop.f32.mrf.mxu0
  %v1561 = vpop.f32.mrf.mxu0
  %1562 = vdwg.mxu0
  %v1563 = vadd.f32 %v1516, %v119
  %v1564 = vadd.f32 %v1518, %v121
  %v1565 = vadd.f32 %v1557, %v160
  %v1566 = vadd.f32 %v1559, %v162
  %v1567 = vmax.f32 %v1563, 0.0
  %v1568 = vmax.f32 %v1564, 0.0
  %v1569 = vmax.f32 %v1565, 0.0
  %v1570 = vmax.f32 %v1566, 0.0
  %v1571 = vld [vmem:[%s12] sm:$0x3]
  %v1572 = vpack.c.bf16 %v1567, %v1567
  %v1573 = vpack.c.bf16 %v1568, %v1568
  %v1574 = vpack.c.bf16 %v1569, %v1569
  %v1575 = vpack.c.bf16 %v1570, %v1570
  %v1576 = vld [vmem:[%s13] sm:$0xf]
  %1578 = vset.pattern.permute.xlu0 0
  %1579 = vperm.xlu0 %1578, %v1576
  %v1580 = vpop.permute.xlu0 %1579
  %vm1582 = vcmask 64512
  %v1584 = vsel %vm1582, %v1571, 0
  %v1587 = vsel %vm1468, %v1572, 0
  %v1590 = vsel %vm1468, %v1573, 0
  %v1593 = vsel %vm1468, %v1574, 0
  %v1596 = vsel %vm1468, %v1575, 0
  %1598 = vmatprep.subr.bf16.mxu0 0
  %1599 = vmatpush1.bf16.msra.mxu0 0
  %1600 = vmatprep.subr.bf16.mxu0 0
  %1601 = vmatpush1.bf16.msra.mxu0 0
  %1602 = vmatprep.subr.bf16.mxu0 0
  %1603 = vmatpush1.bf16.msra.mxu0 0
  %1604 = vmatprep.subr.bf16.mxu0 0
  %1605 = vmatpush1.bf16.msra.mxu0 0
  %1606 = vmatprep.subr.bf16.mxu0 0
  %1607 = vmatpush1.bf16.msra.mxu0 0
  %1608 = vmatprep.subr.bf16.mxu0 0
  %1609 = vmatpush1.bf16.msra.mxu0 0
  %1610 = vmatprep.subr.bf16.mxu0 0
  %1611 = vmatpush1.bf16.msra.mxu0 0
  %1612 = vmatprep.subr.bf16.mxu0 %v1590
  %1613 = vmatpush1.bf16.msra.mxu0 %v1587
  %1614 = vmatprep.subr.bf16.mxu0 0
  %1615 = vmatpush2.bf16.msra.mxu0 0
  %1616 = vmatprep.subr.bf16.mxu0 0
  %1617 = vmatpush2.bf16.msra.mxu0 0
  %1618 = vmatprep.subr.bf16.mxu0 0
  %1619 = vmatpush2.bf16.msra.mxu0 0
  %1620 = vmatprep.subr.bf16.mxu0 0
  %1621 = vmatpush2.bf16.msra.mxu0 0
  %1622 = vmatprep.subr.bf16.mxu0 0
  %1623 = vmatpush2.bf16.msra.mxu0 0
  %1624 = vmatprep.subr.bf16.mxu0 0
  %1625 = vmatpush2.bf16.msra.mxu0 0
  %1626 = vmatprep.subr.bf16.mxu0 0
  %1627 = vmatpush2.bf16.msra.mxu0 0
  %1628 = vmatprep.subr.bf16.mxu0 0
  %1629 = vmatpush2.bf16.msra.mxu0 0
  %1630 = vmatprep.mubr.bf16.mxu0 0
  %1631 = vmatmul.mubr.bf16.gmra.mxu0 %v1584
  %v1632 = vpop.f32.mrf.mxu0
  %v1633 = vadd.f32 %v1580, %v1632
  %v1634 = vpop.f32.mrf.mxu0
  %v1635 = vadd.f32 %v1580, %v1634
  %v1636 = vpop.f32.mrf.mxu0
  %v1637 = vpop.f32.mrf.mxu0
  %1638 = vdwg.mxu0
  %1639 = vmatprep.subr.bf16.mxu0 0
  %1640 = vmatpush1.bf16.msra.mxu0 0
  %1641 = vmatprep.subr.bf16.mxu0 0
  %1642 = vmatpush1.bf16.msra.mxu0 0
  %1643 = vmatprep.subr.bf16.mxu0 0
  %1644 = vmatpush1.bf16.msra.mxu0 0
  %1645 = vmatprep.subr.bf16.mxu0 0
  %1646 = vmatpush1.bf16.msra.mxu0 0
  %1647 = vmatprep.subr.bf16.mxu0 0
  %1648 = vmatpush1.bf16.msra.mxu0 0
  %1649 = vmatprep.subr.bf16.mxu0 0
  %1650 = vmatpush1.bf16.msra.mxu0 0
  %1651 = vmatprep.subr.bf16.mxu0 0
  %1652 = vmatpush1.bf16.msra.mxu0 0
  %1653 = vmatprep.subr.bf16.mxu0 %v1596
  %1654 = vmatpush1.bf16.msra.mxu0 %v1593
  %1655 = vmatprep.subr.bf16.mxu0 0
  %1656 = vmatpush2.bf16.msra.mxu0 0
  %1657 = vmatprep.subr.bf16.mxu0 0
  %1658 = vmatpush2.bf16.msra.mxu0 0
  %1659 = vmatprep.subr.bf16.mxu0 0
  %1660 = vmatpush2.bf16.msra.mxu0 0
  %1661 = vmatprep.subr.bf16.mxu0 0
  %1662 = vmatpush2.bf16.msra.mxu0 0
  %1663 = vmatprep.subr.bf16.mxu0 0
  %1664 = vmatpush2.bf16.msra.mxu0 0
  %1665 = vmatprep.subr.bf16.mxu0 0
  %1666 = vmatpush2.bf16.msra.mxu0 0
  %1667 = vmatprep.subr.bf16.mxu0 0
  %1668 = vmatpush2.bf16.msra.mxu0 0
  %1669 = vmatprep.subr.bf16.mxu0 0
  %1670 = vmatpush2.bf16.msra.mxu0 0
  %1671 = vmatprep.mubr.bf16.mxu0 0
  %1672 = vmatmul.mubr.bf16.gmra.mxu0 %v1584
  %v1673 = vpop.f32.mrf.mxu0
  %v1674 = vadd.f32 %v1580, %v1673
  %v1675 = vpop.f32.mrf.mxu0
  %v1676 = vadd.f32 %v1580, %v1675
  %v1677 = vpop.f32.mrf.mxu0
  %v1678 = vpop.f32.mrf.mxu0
  %1679 = vdwg.mxu0
  %1680 = vrot.lane.b32.xlu0 %v1567, 17
  %v1681 = vpop.permute.xlu0 %1680
  %1682 = vrot.lane.b32.xlu0 %v1568, 17
  %v1683 = vpop.permute.xlu0 %1682
  %1684 = vrot.lane.b32.xlu0 %v1569, 17
  %v1685 = vpop.permute.xlu0 %1684
  %1686 = vrot.lane.b32.xlu0 %v1570, 17
  %v1687 = vpop.permute.xlu0 %1686
  %v1688 = vsel %vm176, %v1685, %v1687
  %v1689 = vsel %vm176, %v1683, %v1685
  %v1690 = vsel %vm176, %v1681, %v1683
  %v1691 = vsel %vm176, %v1687, %v1681
  %v1692 = vld [vmem:[%s1] sm:$0xf]
  %v1694 = vlaneseq
  %v1695 = vshrl.u32 %v1694, 7
  %v1696 = vsub.s32 0, %v1695
  %v1697 = vrot.slane %v1692, %v1696
  %v1698 = vlaneseq
  %v1699 = vshrl.u32 %v1698, 7
  %v1700 = vsub.s32 1, %v1699
  %v1701 = vrot.slane %v1692, %v1700
  %v1702 = vlaneseq
  %v1703 = vshrl.u32 %v1702, 7
  %v1704 = vsub.s32 2, %v1703
  %v1705 = vrot.slane %v1692, %v1704
  %v1706 = vlaneseq
  %v1707 = vshrl.u32 %v1706, 7
  %v1708 = vsub.s32 3, %v1707
  %v1709 = vrot.slane %v1692, %v1708
  %v1714 = vmul.f32 %v1691, %v1697
  %v1715 = vmul.f32 %v1690, %v1701
  %v1716 = vmul.f32 %v1689, %v1705
  %v1717 = vmul.f32 %v1688, %v1709
  %v1718 = vpack.c.bf16 %v1714, %v1714
  %v1719 = vpack.c.bf16 %v1715, %v1715
  %v1720 = vpack.c.bf16 %v1716, %v1716
  %v1721 = vpack.c.bf16 %v1717, %v1717
  %v1726 = vunpack.c.l.b16 %v1718
  %v1727 = vunpack.c.l.b16 %v1719
  %v1728 = vunpack.c.l.b16 %v1720
  %v1729 = vunpack.c.l.b16 %v1721
  %v1730 = vpack.c.b16 %v1727, %v1726
  %v1731 = vpack.c.b16 %v1729, %v1728
  %1734 = vst [vmem:[#allocation2] sm:$0xff] %v1730
  %1735 = vst [vmem:[#allocation2 + $0x8] sm:$0xff] %v1731
  %1736 = vrot.lane.b32.xlu0 %v1567, 16
  %v1737 = vpop.permute.xlu0 %1736
  %1738 = vrot.lane.b32.xlu0 %v1568, 16
  %v1739 = vpop.permute.xlu0 %1738
  %1740 = vrot.lane.b32.xlu0 %v1569, 16
  %v1741 = vpop.permute.xlu0 %1740
  %1742 = vrot.lane.b32.xlu0 %v1570, 16
  %v1743 = vpop.permute.xlu0 %1742
  %v1744 = vsel %vm233, %v1741, %v1743
  %v1745 = vsel %vm233, %v1739, %v1741
  %v1746 = vsel %vm233, %v1737, %v1739
  %v1747 = vsel %vm233, %v1743, %v1737
  %v1748 = vld [vmem:[%s238] sm:$0xf]
  %v1750 = vlaneseq
  %v1751 = vshrl.u32 %v1750, 7
  %v1752 = vsub.s32 0, %v1751
  %v1753 = vrot.slane %v1748, %v1752
  %v1754 = vlaneseq
  %v1755 = vshrl.u32 %v1754, 7
  %v1756 = vsub.s32 1, %v1755
  %v1757 = vrot.slane %v1748, %v1756
  %v1758 = vlaneseq
  %v1759 = vshrl.u32 %v1758, 7
  %v1760 = vsub.s32 2, %v1759
  %v1761 = vrot.slane %v1748, %v1760
  %v1762 = vlaneseq
  %v1763 = vshrl.u32 %v1762, 7
  %v1764 = vsub.s32 3, %v1763
  %v1765 = vrot.slane %v1748, %v1764
  %v1770 = vmul.f32 %v1747, %v1753
  %v1771 = vmul.f32 %v1746, %v1757
  %v1772 = vmul.f32 %v1745, %v1761
  %v1773 = vmul.f32 %v1744, %v1765
  %v1774 = vpack.c.bf16 %v1770, %v1770
  %v1775 = vpack.c.bf16 %v1771, %v1771
  %v1776 = vpack.c.bf16 %v1772, %v1772
  %v1777 = vpack.c.bf16 %v1773, %v1773
  %v1782 = vunpack.c.l.b16 %v1774
  %v1783 = vunpack.c.l.b16 %v1775
  %v1784 = vunpack.c.l.b16 %v1776
  %v1785 = vunpack.c.l.b16 %v1777
  %v1786 = vpack.c.b16 %v1783, %v1782
  %v1787 = vpack.c.b16 %v1785, %v1784
  %1790 = vst [vmem:[#allocation2 + $0x10] sm:$0xff] %v1786
  %1791 = vst [vmem:[#allocation2 + $0x18] sm:$0xff] %v1787
  %1792 = vrot.lane.b32.xlu0 %v1567, 15
  %v1793 = vpop.permute.xlu0 %1792
  %1794 = vrot.lane.b32.xlu0 %v1568, 15
  %v1795 = vpop.permute.xlu0 %1794
  %1796 = vrot.lane.b32.xlu0 %v1569, 15
  %v1797 = vpop.permute.xlu0 %1796
  %1798 = vrot.lane.b32.xlu0 %v1570, 15
  %v1799 = vpop.permute.xlu0 %1798
  %v1800 = vsel %vm293, %v1797, %v1799
  %v1801 = vsel %vm293, %v1795, %v1797
  %v1802 = vsel %vm293, %v1793, %v1795
  %v1803 = vsel %vm293, %v1799, %v1793
  %v1804 = vld [vmem:[%s298] sm:$0xf]
  %v1806 = vlaneseq
  %v1807 = vshrl.u32 %v1806, 7
  %v1808 = vsub.s32 0, %v1807
  %v1809 = vrot.slane %v1804, %v1808
  %v1810 = vlaneseq
  %v1811 = vshrl.u32 %v1810, 7
  %v1812 = vsub.s32 1, %v1811
  %v1813 = vrot.slane %v1804, %v1812
  %v1814 = vlaneseq
  %v1815 = vshrl.u32 %v1814, 7
  %v1816 = vsub.s32 2, %v1815
  %v1817 = vrot.slane %v1804, %v1816
  %v1818 = vlaneseq
  %v1819 = vshrl.u32 %v1818, 7
  %v1820 = vsub.s32 3, %v1819
  %v1821 = vrot.slane %v1804, %v1820
  %v1826 = vmul.f32 %v1803, %v1809
  %v1827 = vmul.f32 %v1802, %v1813
  %v1828 = vmul.f32 %v1801, %v1817
  %v1829 = vmul.f32 %v1800, %v1821
  %v1830 = vpack.c.bf16 %v1826, %v1826
  %v1831 = vpack.c.bf16 %v1827, %v1827
  %v1832 = vpack.c.bf16 %v1828, %v1828
  %v1833 = vpack.c.bf16 %v1829, %v1829
  %v1838 = vunpack.c.l.b16 %v1830
  %v1839 = vunpack.c.l.b16 %v1831
  %v1840 = vunpack.c.l.b16 %v1832
  %v1841 = vunpack.c.l.b16 %v1833
  %v1842 = vpack.c.b16 %v1839, %v1838
  %v1843 = vpack.c.b16 %v1841, %v1840
  %1846 = vst [vmem:[#allocation2 + $0x20] sm:$0xff] %v1842
  %1847 = vst [vmem:[#allocation2 + $0x28] sm:$0xff] %v1843
  %1848 = vrot.lane.b32.xlu0 %v1567, 1
  %v1849 = vpop.permute.xlu0 %1848
  %1850 = vrot.lane.b32.xlu0 %v1568, 1
  %v1851 = vpop.permute.xlu0 %1850
  %1852 = vrot.lane.b32.xlu0 %v1569, 1
  %v1853 = vpop.permute.xlu0 %1852
  %1854 = vrot.lane.b32.xlu0 %v1570, 1
  %v1855 = vpop.permute.xlu0 %1854
  %v1856 = vsel %vm351, %v1853, %v1855
  %v1857 = vsel %vm351, %v1851, %v1853
  %v1858 = vsel %vm351, %v1849, %v1851
  %v1859 = vsel %vm351, %v1855, %v1849
  %v1860 = vld [vmem:[%s356] sm:$0xf]
  %v1862 = vlaneseq
  %v1863 = vshrl.u32 %v1862, 7
  %v1864 = vsub.s32 0, %v1863
  %v1865 = vrot.slane %v1860, %v1864
  %v1866 = vlaneseq
  %v1867 = vshrl.u32 %v1866, 7
  %v1868 = vsub.s32 1, %v1867
  %v1869 = vrot.slane %v1860, %v1868
  %v1870 = vlaneseq
  %v1871 = vshrl.u32 %v1870, 7
  %v1872 = vsub.s32 2, %v1871
  %v1873 = vrot.slane %v1860, %v1872
  %v1874 = vlaneseq
  %v1875 = vshrl.u32 %v1874, 7
  %v1876 = vsub.s32 3, %v1875
  %v1877 = vrot.slane %v1860, %v1876
  %v1882 = vmul.f32 %v1859, %v1865
  %v1883 = vmul.f32 %v1858, %v1869
  %v1884 = vmul.f32 %v1857, %v1873
  %v1885 = vmul.f32 %v1856, %v1877
  %v1886 = vpack.c.bf16 %v1882, %v1882
  %v1887 = vpack.c.bf16 %v1883, %v1883
  %v1888 = vpack.c.bf16 %v1884, %v1884
  %v1889 = vpack.c.bf16 %v1885, %v1885
  %v1894 = vunpack.c.l.b16 %v1886
  %v1895 = vunpack.c.l.b16 %v1887
  %v1896 = vunpack.c.l.b16 %v1888
  %v1897 = vunpack.c.l.b16 %v1889
  %v1898 = vpack.c.b16 %v1895, %v1894
  %v1899 = vpack.c.b16 %v1897, %v1896
  %1902 = vst [vmem:[#allocation2 + $0x30] sm:$0xff] %v1898
  %1903 = vst [vmem:[#allocation2 + $0x38] sm:$0xff] %v1899
  %v1904 = vld [vmem:[%s403] sm:$0xf]
  %v1906 = vlaneseq
  %v1907 = vshrl.u32 %v1906, 7
  %v1908 = vsub.s32 0, %v1907
  %v1909 = vrot.slane %v1904, %v1908
  %v1910 = vlaneseq
  %v1911 = vshrl.u32 %v1910, 7
  %v1912 = vsub.s32 1, %v1911
  %v1913 = vrot.slane %v1904, %v1912
  %v1914 = vlaneseq
  %v1915 = vshrl.u32 %v1914, 7
  %v1916 = vsub.s32 2, %v1915
  %v1917 = vrot.slane %v1904, %v1916
  %v1918 = vlaneseq
  %v1919 = vshrl.u32 %v1918, 7
  %v1920 = vsub.s32 3, %v1919
  %v1921 = vrot.slane %v1904, %v1920
  %v1926 = vmul.f32 %v1567, %v1909
  %v1927 = vmul.f32 %v1568, %v1913
  %v1928 = vmul.f32 %v1569, %v1917
  %v1929 = vmul.f32 %v1570, %v1921
  %v1930 = vpack.c.bf16 %v1926, %v1926
  %v1931 = vpack.c.bf16 %v1927, %v1927
  %v1932 = vpack.c.bf16 %v1928, %v1928
  %v1933 = vpack.c.bf16 %v1929, %v1929
  %v1938 = vunpack.c.l.b16 %v1930
  %v1939 = vunpack.c.l.b16 %v1931
  %v1940 = vunpack.c.l.b16 %v1932
  %v1941 = vunpack.c.l.b16 %v1933
  %v1942 = vpack.c.b16 %v1939, %v1938
  %v1943 = vpack.c.b16 %v1941, %v1940
  %1946 = vst [vmem:[#allocation2 + $0x40] sm:$0xff] %v1942
  %1947 = vst [vmem:[#allocation2 + $0x48] sm:$0xff] %v1943
  %1948 = vrot.lane.b32.xlu0 %v1567, 127
  %v1949 = vpop.permute.xlu0 %1948
  %1950 = vrot.lane.b32.xlu0 %v1568, 127
  %v1951 = vpop.permute.xlu0 %1950
  %1952 = vrot.lane.b32.xlu0 %v1569, 127
  %v1953 = vpop.permute.xlu0 %1952
  %1954 = vrot.lane.b32.xlu0 %v1570, 127
  %v1955 = vpop.permute.xlu0 %1954
  %v1956 = vsel %vm460, %v1953, %v1955
  %v1957 = vsel %vm460, %v1951, %v1953
  %v1958 = vsel %vm460, %v1949, %v1951
  %v1959 = vsel %vm460, %v1955, %v1949
  %v1960 = vld [vmem:[%s465] sm:$0xf]
  %v1962 = vlaneseq
  %v1963 = vshrl.u32 %v1962, 7
  %v1964 = vsub.s32 0, %v1963
  %v1965 = vrot.slane %v1960, %v1964
  %v1966 = vlaneseq
  %v1967 = vshrl.u32 %v1966, 7
  %v1968 = vsub.s32 1, %v1967
  %v1969 = vrot.slane %v1960, %v1968
  %v1970 = vlaneseq
  %v1971 = vshrl.u32 %v1970, 7
  %v1972 = vsub.s32 2, %v1971
  %v1973 = vrot.slane %v1960, %v1972
  %v1974 = vlaneseq
  %v1975 = vshrl.u32 %v1974, 7
  %v1976 = vsub.s32 3, %v1975
  %v1977 = vrot.slane %v1960, %v1976
  %v1982 = vmul.f32 %v1958, %v1965
  %v1983 = vmul.f32 %v1957, %v1969
  %v1984 = vmul.f32 %v1956, %v1973
  %v1985 = vmul.f32 %v1959, %v1977
  %v1986 = vpack.c.bf16 %v1982, %v1982
  %v1987 = vpack.c.bf16 %v1983, %v1983
  %v1988 = vpack.c.bf16 %v1984, %v1984
  %v1989 = vpack.c.bf16 %v1985, %v1985
  %v1994 = vunpack.c.l.b16 %v1986
  %v1995 = vunpack.c.l.b16 %v1987
  %v1996 = vunpack.c.l.b16 %v1988
  %v1997 = vunpack.c.l.b16 %v1989
  %v1998 = vpack.c.b16 %v1995, %v1994
  %v1999 = vpack.c.b16 %v1997, %v1996
  %2002 = vst [vmem:[#allocation2 + $0x50] sm:$0xff] %v1998
  %2003 = vst [vmem:[#allocation2 + $0x58] sm:$0xff] %v1999
  %2004 = vrot.lane.b32.xlu0 %v1567, 113
  %v2005 = vpop.permute.xlu0 %2004
  %2006 = vrot.lane.b32.xlu0 %v1568, 113
  %v2007 = vpop.permute.xlu0 %2006
  %2008 = vrot.lane.b32.xlu0 %v1569, 113
  %v2009 = vpop.permute.xlu0 %2008
  %2010 = vrot.lane.b32.xlu0 %v1570, 113
  %v2011 = vpop.permute.xlu0 %2010
  %v2012 = vsel %vm520, %v2009, %v2011
  %v2013 = vsel %vm520, %v2007, %v2009
  %v2014 = vsel %vm520, %v2005, %v2007
  %v2015 = vsel %vm520, %v2011, %v2005
  %v2016 = vld [vmem:[%s525] sm:$0xf]
  %v2018 = vlaneseq
  %v2019 = vshrl.u32 %v2018, 7
  %v2020 = vsub.s32 0, %v2019
  %v2021 = vrot.slane %v2016, %v2020
  %v2022 = vlaneseq
  %v2023 = vshrl.u32 %v2022, 7
  %v2024 = vsub.s32 1, %v2023
  %v2025 = vrot.slane %v2016, %v2024
  %v2026 = vlaneseq
  %v2027 = vshrl.u32 %v2026, 7
  %v2028 = vsub.s32 2, %v2027
  %v2029 = vrot.slane %v2016, %v2028
  %v2030 = vlaneseq
  %v2031 = vshrl.u32 %v2030, 7
  %v2032 = vsub.s32 3, %v2031
  %v2033 = vrot.slane %v2016, %v2032
  %v2038 = vmul.f32 %v2014, %v2021
  %v2039 = vmul.f32 %v2013, %v2025
  %v2040 = vmul.f32 %v2012, %v2029
  %v2041 = vmul.f32 %v2015, %v2033
  %v2042 = vpack.c.bf16 %v2038, %v2038
  %v2043 = vpack.c.bf16 %v2039, %v2039
  %v2044 = vpack.c.bf16 %v2040, %v2040
  %v2045 = vpack.c.bf16 %v2041, %v2041
  %v2050 = vunpack.c.l.b16 %v2042
  %v2051 = vunpack.c.l.b16 %v2043
  %v2052 = vunpack.c.l.b16 %v2044
  %v2053 = vunpack.c.l.b16 %v2045
  %v2054 = vpack.c.b16 %v2051, %v2050
  %v2055 = vpack.c.b16 %v2053, %v2052
  %2058 = vst [vmem:[#allocation2 + $0x60] sm:$0xff] %v2054
  %2059 = vst [vmem:[#allocation2 + $0x68] sm:$0xff] %v2055
  %2060 = vrot.lane.b32.xlu0 %v1567, 112
  %v2061 = vpop.permute.xlu0 %2060
  %2062 = vrot.lane.b32.xlu0 %v1568, 112
  %v2063 = vpop.permute.xlu0 %2062
  %2064 = vrot.lane.b32.xlu0 %v1569, 112
  %v2065 = vpop.permute.xlu0 %2064
  %2066 = vrot.lane.b32.xlu0 %v1570, 112
  %v2067 = vpop.permute.xlu0 %2066
  %v2068 = vsel %vm578, %v2065, %v2067
  %v2069 = vsel %vm578, %v2063, %v2065
  %v2070 = vsel %vm578, %v2061, %v2063
  %v2071 = vsel %vm578, %v2067, %v2061
  %v2072 = vld [vmem:[%s583] sm:$0xf]
  %v2074 = vlaneseq
  %v2075 = vshrl.u32 %v2074, 7
  %v2076 = vsub.s32 0, %v2075
  %v2077 = vrot.slane %v2072, %v2076
  %v2078 = vlaneseq
  %v2079 = vshrl.u32 %v2078, 7
  %v2080 = vsub.s32 1, %v2079
  %v2081 = vrot.slane %v2072, %v2080
  %v2082 = vlaneseq
  %v2083 = vshrl.u32 %v2082, 7
  %v2084 = vsub.s32 2, %v2083
  %v2085 = vrot.slane %v2072, %v2084
  %v2086 = vlaneseq
  %v2087 = vshrl.u32 %v2086, 7
  %v2088 = vsub.s32 3, %v2087
  %v2089 = vrot.slane %v2072, %v2088
  %v2094 = vmul.f32 %v2070, %v2077
  %v2095 = vmul.f32 %v2069, %v2081
  %v2096 = vmul.f32 %v2068, %v2085
  %v2097 = vmul.f32 %v2071, %v2089
  %v2098 = vpack.c.bf16 %v2094, %v2094
  %v2099 = vpack.c.bf16 %v2095, %v2095
  %v2100 = vpack.c.bf16 %v2096, %v2096
  %v2101 = vpack.c.bf16 %v2097, %v2097
  %v2106 = vunpack.c.l.b16 %v2098
  %v2107 = vunpack.c.l.b16 %v2099
  %v2108 = vunpack.c.l.b16 %v2100
  %v2109 = vunpack.c.l.b16 %v2101
  %v2110 = vpack.c.b16 %v2107, %v2106
  %v2111 = vpack.c.b16 %v2109, %v2108
  %2114 = vst [vmem:[#allocation2 + $0x70] sm:$0xff] %v2110
  %2115 = vst [vmem:[#allocation2 + $0x78] sm:$0xff] %v2111
  %2116 = vrot.lane.b32.xlu0 %v1567, 111
  %v2117 = vpop.permute.xlu0 %2116
  %2118 = vrot.lane.b32.xlu0 %v1568, 111
  %v2119 = vpop.permute.xlu0 %2118
  %2120 = vrot.lane.b32.xlu0 %v1569, 111
  %v2121 = vpop.permute.xlu0 %2120
  %2122 = vrot.lane.b32.xlu0 %v1570, 111
  %v2123 = vpop.permute.xlu0 %2122
  %v2124 = vsel %vm638, %v2121, %v2123
  %v2125 = vsel %vm638, %v2119, %v2121
  %v2126 = vsel %vm638, %v2117, %v2119
  %v2127 = vsel %vm638, %v2123, %v2117
  %v2128 = vld [vmem:[%s643] sm:$0xf]
  %v2130 = vlaneseq
  %v2131 = vshrl.u32 %v2130, 7
  %v2132 = vsub.s32 0, %v2131
  %v2133 = vrot.slane %v2128, %v2132
  %v2134 = vlaneseq
  %v2135 = vshrl.u32 %v2134, 7
  %v2136 = vsub.s32 1, %v2135
  %v2137 = vrot.slane %v2128, %v2136
  %v2138 = vlaneseq
  %v2139 = vshrl.u32 %v2138, 7
  %v2140 = vsub.s32 2, %v2139
  %v2141 = vrot.slane %v2128, %v2140
  %v2142 = vlaneseq
  %v2143 = vshrl.u32 %v2142, 7
  %v2144 = vsub.s32 3, %v2143
  %v2145 = vrot.slane %v2128, %v2144
  %v2150 = vmul.f32 %v2126, %v2133
  %v2151 = vmul.f32 %v2125, %v2137
  %v2152 = vmul.f32 %v2124, %v2141
  %v2153 = vmul.f32 %v2127, %v2145
  %v2154 = vpack.c.bf16 %v2150, %v2150
  %v2155 = vpack.c.bf16 %v2151, %v2151
  %v2156 = vpack.c.bf16 %v2152, %v2152
  %v2157 = vpack.c.bf16 %v2153, %v2153
  %v2162 = vunpack.c.l.b16 %v2154
  %v2163 = vunpack.c.l.b16 %v2155
  %v2164 = vunpack.c.l.b16 %v2156
  %v2165 = vunpack.c.l.b16 %v2157
  %v2166 = vpack.c.b16 %v2163, %v2162
  %v2167 = vpack.c.b16 %v2165, %v2164
  %2170 = vst [vmem:[#allocation2 + $0x80] sm:$0xff] %v2166
  %2171 = vst [vmem:[#allocation2 + $0x88] sm:$0xff] %v2167
  %v2172 = vld [vmem:[%s8] sm:$0x3]
  %v2173 = vld [vmem:[#allocation2] sm:$0xff]
  %v2174 = vld [vmem:[#allocation2 + $0x8] sm:$0xff]
  %v2175 = vld [vmem:[#allocation2 + $0x10] sm:$0xff]
  %v2176 = vld [vmem:[#allocation2 + $0x18] sm:$0xff]
  %v2177 = vld [vmem:[#allocation2 + $0x20] sm:$0xff]
  %v2178 = vld [vmem:[#allocation2 + $0x28] sm:$0xff]
  %v2179 = vld [vmem:[#allocation2 + $0x30] sm:$0xff]
  %v2180 = vld [vmem:[#allocation2 + $0x38] sm:$0xff]
  %v2181 = vld [vmem:[#allocation2 + $0x40] sm:$0xff]
  %v2182 = vld [vmem:[#allocation2 + $0x48] sm:$0xff]
  %v2183 = vld [vmem:[#allocation2 + $0x50] sm:$0xff]
  %v2184 = vld [vmem:[#allocation2 + $0x58] sm:$0xff]
  %v2185 = vld [vmem:[#allocation2 + $0x60] sm:$0xff]
  %v2186 = vld [vmem:[#allocation2 + $0x68] sm:$0xff]
  %v2187 = vld [vmem:[#allocation2 + $0x70] sm:$0xff]
  %v2188 = vld [vmem:[#allocation2 + $0x78] sm:$0xff]
  %v2189 = vld [vmem:[#allocation2 + $0x80] sm:$0xff]
  %v2190 = vld [vmem:[#allocation2 + $0x88] sm:$0xff]
  %v2191 = vld [vmem:[%s9] sm:$0xf]
  %2193 = vset.pattern.permute.xlu0 0
  %2194 = vperm.xlu0 %2193, %v2191
  %v2195 = vpop.permute.xlu0 %2194
  %v2215 = vunpack.c.l.b16 %v2173
  %v2216 = vunpack.c.h.b16 %v2173
  %v2217 = vunpack.c.l.b16 %v2174
  %v2218 = vunpack.c.h.b16 %v2174
  %v2219 = vunpack.c.l.b16 %v2175
  %v2220 = vunpack.c.h.b16 %v2175
  %v2221 = vunpack.c.l.b16 %v2176
  %v2222 = vunpack.c.h.b16 %v2176
  %v2223 = vunpack.c.l.b16 %v2177
  %v2224 = vunpack.c.h.b16 %v2177
  %v2225 = vunpack.c.l.b16 %v2178
  %v2226 = vunpack.c.h.b16 %v2178
  %v2227 = vunpack.c.l.b16 %v2179
  %v2228 = vunpack.c.h.b16 %v2179
  %v2229 = vunpack.c.l.b16 %v2180
  %v2230 = vunpack.c.h.b16 %v2180
  %v2231 = vunpack.c.l.b16 %v2181
  %v2232 = vunpack.c.h.b16 %v2181
  %v2233 = vunpack.c.l.b16 %v2182
  %v2234 = vunpack.c.h.b16 %v2182
  %v2235 = vunpack.c.l.b16 %v2183
  %v2236 = vunpack.c.h.b16 %v2183
  %v2237 = vunpack.c.l.b16 %v2184
  %v2238 = vunpack.c.h.b16 %v2184
  %v2239 = vunpack.c.l.b16 %v2185
  %v2240 = vunpack.c.h.b16 %v2185
  %v2241 = vunpack.c.l.b16 %v2186
  %v2242 = vunpack.c.h.b16 %v2186
  %v2243 = vunpack.c.l.b16 %v2187
  %v2244 = vunpack.c.h.b16 %v2187
  %v2245 = vunpack.c.l.b16 %v2188
  %v2246 = vunpack.c.h.b16 %v2188
  %v2247 = vunpack.c.l.b16 %v2189
  %v2248 = vunpack.c.h.b16 %v2189
  %v2249 = vunpack.c.l.b16 %v2190
  %v2250 = vunpack.c.h.b16 %v2190
  %v2251 = vpack.c.b16 %v2219, %v2215
  %v2252 = vpack.c.b16 %v2220, %v2216
  %v2253 = vpack.c.b16 %v2221, %v2217
  %v2254 = vpack.c.b16 %v2222, %v2218
  %v2255 = vpack.c.b16 %v2227, %v2223
  %v2256 = vpack.c.b16 %v2228, %v2224
  %v2257 = vpack.c.b16 %v2229, %v2225
  %v2258 = vpack.c.b16 %v2230, %v2226
  %v2259 = vpack.c.b16 %v2235, %v2231
  %v2260 = vpack.c.b16 %v2236, %v2232
  %v2261 = vpack.c.b16 %v2237, %v2233
  %v2262 = vpack.c.b16 %v2238, %v2234
  %v2263 = vpack.c.b16 %v2243, %v2239
  %v2264 = vpack.c.b16 %v2244, %v2240
  %v2265 = vpack.c.b16 %v2245, %v2241
  %v2266 = vpack.c.b16 %v2246, %v2242
  %v2267 = vpack.c.b16 %v2247, %v2247
  %v2268 = vpack.c.b16 %v2248, %v2248
  %v2269 = vpack.c.b16 %v2249, %v2249
  %v2270 = vpack.c.b16 %v2250, %v2250
  %v2288 = vsel %vm1464, %v2172, 0
  %v2291 = vsel %vm1468, %v2267, 0
  %v2294 = vsel %vm1468, %v2268, 0
  %v2297 = vsel %vm1468, %v2269, 0
  %v2300 = vsel %vm1468, %v2270, 0
  %2302 = vmatprep.subr.bf16.mxu0 0
  %2303 = vmatpush1.bf16.msra.mxu0 0
  %2304 = vmatprep.subr.bf16.mxu0 0
  %2305 = vmatpush1.bf16.msra.mxu0 0
  %2306 = vmatprep.subr.bf16.mxu0 0
  %2307 = vmatpush1.bf16.msra.mxu0 0
  %2308 = vmatprep.subr.bf16.mxu0 %v2294
  %2309 = vmatpush1.bf16.msra.mxu0 %v2291
  %2310 = vmatprep.subr.bf16.mxu0 %v2264
  %2311 = vmatpush1.bf16.msra.mxu0 %v2263
  %2312 = vmatprep.subr.bf16.mxu0 %v2260
  %2313 = vmatpush1.bf16.msra.mxu0 %v2259
  %2314 = vmatprep.subr.bf16.mxu0 %v2256
  %2315 = vmatpush1.bf16.msra.mxu0 %v2255
  %2316 = vmatprep.subr.bf16.mxu0 %v2252
  %2317 = vmatpush1.bf16.msra.mxu0 %v2251
  %2318 = vmatprep.subr.bf16.mxu0 0
  %2319 = vmatpush2.bf16.msra.mxu0 0
  %2320 = vmatprep.subr.bf16.mxu0 0
  %2321 = vmatpush2.bf16.msra.mxu0 0
  %2322 = vmatprep.subr.bf16.mxu0 0
  %2323 = vmatpush2.bf16.msra.mxu0 0
  %2324 = vmatprep.subr.bf16.mxu0 0
  %2325 = vmatpush2.bf16.msra.mxu0 0
  %2326 = vmatprep.subr.bf16.mxu0 0
  %2327 = vmatpush2.bf16.msra.mxu0 0
  %2328 = vmatprep.subr.bf16.mxu0 0
  %2329 = vmatpush2.bf16.msra.mxu0 0
  %2330 = vmatprep.subr.bf16.mxu0 0
  %2331 = vmatpush2.bf16.msra.mxu0 0
  %2332 = vmatprep.subr.bf16.mxu0 0
  %2333 = vmatpush2.bf16.msra.mxu0 0
  %2334 = vmatprep.mubr.bf16.mxu0 0
  %2335 = vmatmul.mubr.bf16.gmra.mxu0 %v2288
  %v2336 = vpop.f32.mrf.mxu0
  %v2337 = vadd.f32 %v2195, %v2336
  %v2338 = vpop.f32.mrf.mxu0
  %v2339 = vadd.f32 %v2195, %v2338
  %v2340 = vpop.f32.mrf.mxu0
  %v2341 = vpop.f32.mrf.mxu0
  %2342 = vdwg.mxu0
  %2343 = vmatprep.subr.bf16.mxu0 0
  %2344 = vmatpush1.bf16.msra.mxu0 0
  %2345 = vmatprep.subr.bf16.mxu0 0
  %2346 = vmatpush1.bf16.msra.mxu0 0
  %2347 = vmatprep.subr.bf16.mxu0 0
  %2348 = vmatpush1.bf16.msra.mxu0 0
  %2349 = vmatprep.subr.bf16.mxu0 %v2300
  %2350 = vmatpush1.bf16.msra.mxu0 %v2297
  %2351 = vmatprep.subr.bf16.mxu0 %v2266
  %2352 = vmatpush1.bf16.msra.mxu0 %v2265
  %2353 = vmatprep.subr.bf16.mxu0 %v2262
  %2354 = vmatpush1.bf16.msra.mxu0 %v2261
  %2355 = vmatprep.subr.bf16.mxu0 %v2258
  %2356 = vmatpush1.bf16.msra.mxu0 %v2257
  %2357 = vmatprep.subr.bf16.mxu0 %v2254
  %2358 = vmatpush1.bf16.msra.mxu0 %v2253
  %2359 = vmatprep.subr.bf16.mxu0 0
  %2360 = vmatpush2.bf16.msra.mxu0 0
  %2361 = vmatprep.subr.bf16.mxu0 0
  %2362 = vmatpush2.bf16.msra.mxu0 0
  %2363 = vmatprep.subr.bf16.mxu0 0
  %2364 = vmatpush2.bf16.msra.mxu0 0
  %2365 = vmatprep.subr.bf16.mxu0 0
  %2366 = vmatpush2.bf16.msra.mxu0 0
  %2367 = vmatprep.subr.bf16.mxu0 0
  %2368 = vmatpush2.bf16.msra.mxu0 0
  %2369 = vmatprep.subr.bf16.mxu0 0
  %2370 = vmatpush2.bf16.msra.mxu0 0
  %2371 = vmatprep.subr.bf16.mxu0 0
  %2372 = vmatpush2.bf16.msra.mxu0 0
  %2373 = vmatprep.subr.bf16.mxu0 0
  %2374 = vmatpush2.bf16.msra.mxu0 0
  %2375 = vmatprep.mubr.bf16.mxu0 0
  %2376 = vmatmul.mubr.bf16.gmra.mxu0 %v2288
  %v2377 = vpop.f32.mrf.mxu0
  %v2378 = vadd.f32 %v2195, %v2377
  %v2379 = vpop.f32.mrf.mxu0
  %v2380 = vadd.f32 %v2195, %v2379
  %v2381 = vpop.f32.mrf.mxu0
  %v2382 = vpop.f32.mrf.mxu0
  %2383 = vdwg.mxu0
  %v2384 = vmax.f32 %v2337, 0.0
  %v2385 = vmax.f32 %v2339, 0.0
  %v2386 = vmax.f32 %v2378, 0.0
  %v2387 = vmax.f32 %v2380, 0.0
  %2388 = vrot.lane.b32.xlu0 %v2384, 17
  %v2389 = vpop.permute.xlu0 %2388
  %2390 = vrot.lane.b32.xlu0 %v2385, 17
  %v2391 = vpop.permute.xlu0 %2390
  %2392 = vrot.lane.b32.xlu0 %v2386, 17
  %v2393 = vpop.permute.xlu0 %2392
  %2394 = vrot.lane.b32.xlu0 %v2387, 17
  %v2395 = vpop.permute.xlu0 %2394
  %v2396 = vsel %vm176, %v2393, %v2395
  %v2397 = vsel %vm176, %v2391, %v2393
  %v2398 = vsel %vm176, %v2389, %v2391
  %v2399 = vsel %vm176, %v2395, %v2389
  %v2400 = vld [vmem:[%s1] sm:$0xf]
  %v2402 = vlaneseq
  %v2403 = vshrl.u32 %v2402, 7
  %v2404 = vsub.s32 0, %v2403
  %v2405 = vrot.slane %v2400, %v2404
  %v2406 = vlaneseq
  %v2407 = vshrl.u32 %v2406, 7
  %v2408 = vsub.s32 1, %v2407
  %v2409 = vrot.slane %v2400, %v2408
  %v2410 = vlaneseq
  %v2411 = vshrl.u32 %v2410, 7
  %v2412 = vsub.s32 2, %v2411
  %v2413 = vrot.slane %v2400, %v2412
  %v2414 = vlaneseq
  %v2415 = vshrl.u32 %v2414, 7
  %v2416 = vsub.s32 3, %v2415
  %v2417 = vrot.slane %v2400, %v2416
  %v2422 = vmul.f32 %v2399, %v2405
  %v2423 = vmul.f32 %v2398, %v2409
  %v2424 = vmul.f32 %v2397, %v2413
  %v2425 = vmul.f32 %v2396, %v2417
  %v2426 = vpack.c.bf16 %v2422, %v2422
  %v2427 = vpack.c.bf16 %v2423, %v2423
  %v2428 = vpack.c.bf16 %v2424, %v2424
  %v2429 = vpack.c.bf16 %v2425, %v2425
  %v2434 = vunpack.c.l.b16 %v2426
  %v2435 = vunpack.c.l.b16 %v2427
  %v2436 = vunpack.c.l.b16 %v2428
  %v2437 = vunpack.c.l.b16 %v2429
  %v2438 = vpack.c.b16 %v2435, %v2434
  %v2439 = vpack.c.b16 %v2437, %v2436
  %2442 = vst [vmem:[#allocation2] sm:$0x33] %v2438
  %2443 = vst [vmem:[#allocation2 + $0x8] sm:$0x33] %v2439
  %2444 = vrot.lane.b32.xlu0 %v2384, 16
  %v2445 = vpop.permute.xlu0 %2444
  %2446 = vrot.lane.b32.xlu0 %v2385, 16
  %v2447 = vpop.permute.xlu0 %2446
  %2448 = vrot.lane.b32.xlu0 %v2386, 16
  %v2449 = vpop.permute.xlu0 %2448
  %2450 = vrot.lane.b32.xlu0 %v2387, 16
  %v2451 = vpop.permute.xlu0 %2450
  %v2452 = vsel %vm233, %v2449, %v2451
  %v2453 = vsel %vm233, %v2447, %v2449
  %v2454 = vsel %vm233, %v2445, %v2447
  %v2455 = vsel %vm233, %v2451, %v2445
  %v2456 = vld [vmem:[%s238] sm:$0xf]
  %v2458 = vlaneseq
  %v2459 = vshrl.u32 %v2458, 7
  %v2460 = vsub.s32 0, %v2459
  %v2461 = vrot.slane %v2456, %v2460
  %v2462 = vlaneseq
  %v2463 = vshrl.u32 %v2462, 7
  %v2464 = vsub.s32 1, %v2463
  %v2465 = vrot.slane %v2456, %v2464
  %v2466 = vlaneseq
  %v2467 = vshrl.u32 %v2466, 7
  %v2468 = vsub.s32 2, %v2467
  %v2469 = vrot.slane %v2456, %v2468
  %v2470 = vlaneseq
  %v2471 = vshrl.u32 %v2470, 7
  %v2472 = vsub.s32 3, %v2471
  %v2473 = vrot.slane %v2456, %v2472
  %v2478 = vmul.f32 %v2455, %v2461
  %v2479 = vmul.f32 %v2454, %v2465
  %v2480 = vmul.f32 %v2453, %v2469
  %v2481 = vmul.f32 %v2452, %v2473
  %v2482 = vpack.c.bf16 %v2478, %v2478
  %v2483 = vpack.c.bf16 %v2479, %v2479
  %v2484 = vpack.c.bf16 %v2480, %v2480
  %v2485 = vpack.c.bf16 %v2481, %v2481
  %v2490 = vunpack.c.l.b16 %v2482
  %v2491 = vunpack.c.l.b16 %v2483
  %v2492 = vunpack.c.l.b16 %v2484
  %v2493 = vunpack.c.l.b16 %v2485
  %v2494 = vpack.c.b16 %v2491, %v2490
  %v2495 = vpack.c.b16 %v2493, %v2492
  %v2496 = vrot.slane %v2494, 6
  %v2497 = vrot.slane %v2495, 6
  %2500 = vst [vmem:[#allocation2] sm:$0xcc] %v2496
  %2501 = vst [vmem:[#allocation2 + $0x8] sm:$0xcc] %v2497
  %2502 = vrot.lane.b32.xlu0 %v2384, 15
  %v2503 = vpop.permute.xlu0 %2502
  %2504 = vrot.lane.b32.xlu0 %v2385, 15
  %v2505 = vpop.permute.xlu0 %2504
  %2506 = vrot.lane.b32.xlu0 %v2386, 15
  %v2507 = vpop.permute.xlu0 %2506
  %2508 = vrot.lane.b32.xlu0 %v2387, 15
  %v2509 = vpop.permute.xlu0 %2508
  %v2510 = vsel %vm293, %v2507, %v2509
  %v2511 = vsel %vm293, %v2505, %v2507
  %v2512 = vsel %vm293, %v2503, %v2505
  %v2513 = vsel %vm293, %v2509, %v2503
  %v2514 = vld [vmem:[%s298] sm:$0xf]
  %v2516 = vlaneseq
  %v2517 = vshrl.u32 %v2516, 7
  %v2518 = vsub.s32 0, %v2517
  %v2519 = vrot.slane %v2514, %v2518
  %v2520 = vlaneseq
  %v2521 = vshrl.u32 %v2520, 7
  %v2522 = vsub.s32 1, %v2521
  %v2523 = vrot.slane %v2514, %v2522
  %v2524 = vlaneseq
  %v2525 = vshrl.u32 %v2524, 7
  %v2526 = vsub.s32 2, %v2525
  %v2527 = vrot.slane %v2514, %v2526
  %v2528 = vlaneseq
  %v2529 = vshrl.u32 %v2528, 7
  %v2530 = vsub.s32 3, %v2529
  %v2531 = vrot.slane %v2514, %v2530
  %v2536 = vmul.f32 %v2513, %v2519
  %v2537 = vmul.f32 %v2512, %v2523
  %v2538 = vmul.f32 %v2511, %v2527
  %v2539 = vmul.f32 %v2510, %v2531
  %v2540 = vpack.c.bf16 %v2536, %v2536
  %v2541 = vpack.c.bf16 %v2537, %v2537
  %v2542 = vpack.c.bf16 %v2538, %v2538
  %v2543 = vpack.c.bf16 %v2539, %v2539
  %v2548 = vunpack.c.l.b16 %v2540
  %v2549 = vunpack.c.l.b16 %v2541
  %v2550 = vunpack.c.l.b16 %v2542
  %v2551 = vunpack.c.l.b16 %v2543
  %v2552 = vpack.c.b16 %v2549, %v2548
  %v2553 = vpack.c.b16 %v2551, %v2550
  %2556 = vst [vmem:[#allocation2 + $0x10] sm:$0x33] %v2552
  %2557 = vst [vmem:[#allocation2 + $0x18] sm:$0x33] %v2553
  %2558 = vrot.lane.b32.xlu0 %v2384, 1
  %v2559 = vpop.permute.xlu0 %2558
  %2560 = vrot.lane.b32.xlu0 %v2385, 1
  %v2561 = vpop.permute.xlu0 %2560
  %2562 = vrot.lane.b32.xlu0 %v2386, 1
  %v2563 = vpop.permute.xlu0 %2562
  %2564 = vrot.lane.b32.xlu0 %v2387, 1
  %v2565 = vpop.permute.xlu0 %2564
  %v2566 = vsel %vm351, %v2563, %v2565
  %v2567 = vsel %vm351, %v2561, %v2563
  %v2568 = vsel %vm351, %v2559, %v2561
  %v2569 = vsel %vm351, %v2565, %v2559
  %v2570 = vld [vmem:[%s356] sm:$0xf]
  %v2572 = vlaneseq
  %v2573 = vshrl.u32 %v2572, 7
  %v2574 = vsub.s32 0, %v2573
  %v2575 = vrot.slane %v2570, %v2574
  %v2576 = vlaneseq
  %v2577 = vshrl.u32 %v2576, 7
  %v2578 = vsub.s32 1, %v2577
  %v2579 = vrot.slane %v2570, %v2578
  %v2580 = vlaneseq
  %v2581 = vshrl.u32 %v2580, 7
  %v2582 = vsub.s32 2, %v2581
  %v2583 = vrot.slane %v2570, %v2582
  %v2584 = vlaneseq
  %v2585 = vshrl.u32 %v2584, 7
  %v2586 = vsub.s32 3, %v2585
  %v2587 = vrot.slane %v2570, %v2586
  %v2592 = vmul.f32 %v2569, %v2575
  %v2593 = vmul.f32 %v2568, %v2579
  %v2594 = vmul.f32 %v2567, %v2583
  %v2595 = vmul.f32 %v2566, %v2587
  %v2596 = vpack.c.bf16 %v2592, %v2592
  %v2597 = vpack.c.bf16 %v2593, %v2593
  %v2598 = vpack.c.bf16 %v2594, %v2594
  %v2599 = vpack.c.bf16 %v2595, %v2595
  %v2604 = vunpack.c.l.b16 %v2596
  %v2605 = vunpack.c.l.b16 %v2597
  %v2606 = vunpack.c.l.b16 %v2598
  %v2607 = vunpack.c.l.b16 %v2599
  %v2608 = vpack.c.b16 %v2605, %v2604
  %v2609 = vpack.c.b16 %v2607, %v2606
  %v2610 = vrot.slane %v2608, 6
  %v2611 = vrot.slane %v2609, 6
  %2614 = vst [vmem:[#allocation2 + $0x10] sm:$0xcc] %v2610
  %2615 = vst [vmem:[#allocation2 + $0x18] sm:$0xcc] %v2611
  %v2616 = vld [vmem:[%s403] sm:$0xf]
  %v2618 = vlaneseq
  %v2619 = vshrl.u32 %v2618, 7
  %v2620 = vsub.s32 0, %v2619
  %v2621 = vrot.slane %v2616, %v2620
  %v2622 = vlaneseq
  %v2623 = vshrl.u32 %v2622, 7
  %v2624 = vsub.s32 1, %v2623
  %v2625 = vrot.slane %v2616, %v2624
  %v2626 = vlaneseq
  %v2627 = vshrl.u32 %v2626, 7
  %v2628 = vsub.s32 2, %v2627
  %v2629 = vrot.slane %v2616, %v2628
  %v2630 = vlaneseq
  %v2631 = vshrl.u32 %v2630, 7
  %v2632 = vsub.s32 3, %v2631
  %v2633 = vrot.slane %v2616, %v2632
  %v2638 = vmul.f32 %v2384, %v2621
  %v2639 = vmul.f32 %v2385, %v2625
  %v2640 = vmul.f32 %v2386, %v2629
  %v2641 = vmul.f32 %v2387, %v2633
  %v2642 = vpack.c.bf16 %v2638, %v2638
  %v2643 = vpack.c.bf16 %v2639, %v2639
  %v2644 = vpack.c.bf16 %v2640, %v2640
  %v2645 = vpack.c.bf16 %v2641, %v2641
  %v2650 = vunpack.c.l.b16 %v2642
  %v2651 = vunpack.c.l.b16 %v2643
  %v2652 = vunpack.c.l.b16 %v2644
  %v2653 = vunpack.c.l.b16 %v2645
  %v2654 = vpack.c.b16 %v2651, %v2650
  %v2655 = vpack.c.b16 %v2653, %v2652
  %2658 = vst [vmem:[#allocation2 + $0x20] sm:$0x33] %v2654
  %2659 = vst [vmem:[#allocation2 + $0x28] sm:$0x33] %v2655
  %2660 = vrot.lane.b32.xlu0 %v2384, 127
  %v2661 = vpop.permute.xlu0 %2660
  %2662 = vrot.lane.b32.xlu0 %v2385, 127
  %v2663 = vpop.permute.xlu0 %2662
  %2664 = vrot.lane.b32.xlu0 %v2386, 127
  %v2665 = vpop.permute.xlu0 %2664
  %2666 = vrot.lane.b32.xlu0 %v2387, 127
  %v2667 = vpop.permute.xlu0 %2666
  %v2668 = vsel %vm460, %v2665, %v2667
  %v2669 = vsel %vm460, %v2663, %v2665
  %v2670 = vsel %vm460, %v2661, %v2663
  %v2671 = vsel %vm460, %v2667, %v2661
  %v2672 = vld [vmem:[%s465] sm:$0xf]
  %v2674 = vlaneseq
  %v2675 = vshrl.u32 %v2674, 7
  %v2676 = vsub.s32 0, %v2675
  %v2677 = vrot.slane %v2672, %v2676
  %v2678 = vlaneseq
  %v2679 = vshrl.u32 %v2678, 7
  %v2680 = vsub.s32 1, %v2679
  %v2681 = vrot.slane %v2672, %v2680
  %v2682 = vlaneseq
  %v2683 = vshrl.u32 %v2682, 7
  %v2684 = vsub.s32 2, %v2683
  %v2685 = vrot.slane %v2672, %v2684
  %v2686 = vlaneseq
  %v2687 = vshrl.u32 %v2686, 7
  %v2688 = vsub.s32 3, %v2687
  %v2689 = vrot.slane %v2672, %v2688
  %v2694 = vmul.f32 %v2670, %v2677
  %v2695 = vmul.f32 %v2669, %v2681
  %v2696 = vmul.f32 %v2668, %v2685
  %v2697 = vmul.f32 %v2671, %v2689
  %v2698 = vpack.c.bf16 %v2694, %v2694
  %v2699 = vpack.c.bf16 %v2695, %v2695
  %v2700 = vpack.c.bf16 %v2696, %v2696
  %v2701 = vpack.c.bf16 %v2697, %v2697
  %v2706 = vunpack.c.l.b16 %v2698
  %v2707 = vunpack.c.l.b16 %v2699
  %v2708 = vunpack.c.l.b16 %v2700
  %v2709 = vunpack.c.l.b16 %v2701
  %v2710 = vpack.c.b16 %v2707, %v2706
  %v2711 = vpack.c.b16 %v2709, %v2708
  %v2712 = vrot.slane %v2710, 6
  %v2713 = vrot.slane %v2711, 6
  %2716 = vst [vmem:[#allocation2 + $0x20] sm:$0xcc] %v2712
  %2717 = vst [vmem:[#allocation2 + $0x28] sm:$0xcc] %v2713
  %2718 = vrot.lane.b32.xlu0 %v2384, 113
  %v2719 = vpop.permute.xlu0 %2718
  %2720 = vrot.lane.b32.xlu0 %v2385, 113
  %v2721 = vpop.permute.xlu0 %2720
  %2722 = vrot.lane.b32.xlu0 %v2386, 113
  %v2723 = vpop.permute.xlu0 %2722
  %2724 = vrot.lane.b32.xlu0 %v2387, 113
  %v2725 = vpop.permute.xlu0 %2724
  %v2726 = vsel %vm520, %v2723, %v2725
  %v2727 = vsel %vm520, %v2721, %v2723
  %v2728 = vsel %vm520, %v2719, %v2721
  %v2729 = vsel %vm520, %v2725, %v2719
  %v2730 = vld [vmem:[%s525] sm:$0xf]
  %v2732 = vlaneseq
  %v2733 = vshrl.u32 %v2732, 7
  %v2734 = vsub.s32 0, %v2733
  %v2735 = vrot.slane %v2730, %v2734
  %v2736 = vlaneseq
  %v2737 = vshrl.u32 %v2736, 7
  %v2738 = vsub.s32 1, %v2737
  %v2739 = vrot.slane %v2730, %v2738
  %v2740 = vlaneseq
  %v2741 = vshrl.u32 %v2740, 7
  %v2742 = vsub.s32 2, %v2741
  %v2743 = vrot.slane %v2730, %v2742
  %v2744 = vlaneseq
  %v2745 = vshrl.u32 %v2744, 7
  %v2746 = vsub.s32 3, %v2745
  %v2747 = vrot.slane %v2730, %v2746
  %v2752 = vmul.f32 %v2728, %v2735
  %v2753 = vmul.f32 %v2727, %v2739
  %v2754 = vmul.f32 %v2726, %v2743
  %v2755 = vmul.f32 %v2729, %v2747
  %v2756 = vpack.c.bf16 %v2752, %v2752
  %v2757 = vpack.c.bf16 %v2753, %v2753
  %v2758 = vpack.c.bf16 %v2754, %v2754
  %v2759 = vpack.c.bf16 %v2755, %v2755
  %v2764 = vunpack.c.l.b16 %v2756
  %v2765 = vunpack.c.l.b16 %v2757
  %v2766 = vunpack.c.l.b16 %v2758
  %v2767 = vunpack.c.l.b16 %v2759
  %v2768 = vpack.c.b16 %v2765, %v2764
  %v2769 = vpack.c.b16 %v2767, %v2766
  %2772 = vst [vmem:[#allocation2 + $0x30] sm:$0x33] %v2768
  %2773 = vst [vmem:[#allocation2 + $0x38] sm:$0x33] %v2769
  %2774 = vrot.lane.b32.xlu0 %v2384, 112
  %v2775 = vpop.permute.xlu0 %2774
  %2776 = vrot.lane.b32.xlu0 %v2385, 112
  %v2777 = vpop.permute.xlu0 %2776
  %2778 = vrot.lane.b32.xlu0 %v2386, 112
  %v2779 = vpop.permute.xlu0 %2778
  %2780 = vrot.lane.b32.xlu0 %v2387, 112
  %v2781 = vpop.permute.xlu0 %2780
  %v2782 = vsel %vm578, %v2779, %v2781
  %v2783 = vsel %vm578, %v2777, %v2779
  %v2784 = vsel %vm578, %v2775, %v2777
  %v2785 = vsel %vm578, %v2781, %v2775
  %v2786 = vld [vmem:[%s583] sm:$0xf]
  %v2788 = vlaneseq
  %v2789 = vshrl.u32 %v2788, 7
  %v2790 = vsub.s32 0, %v2789
  %v2791 = vrot.slane %v2786, %v2790
  %v2792 = vlaneseq
  %v2793 = vshrl.u32 %v2792, 7
  %v2794 = vsub.s32 1, %v2793
  %v2795 = vrot.slane %v2786, %v2794
  %v2796 = vlaneseq
  %v2797 = vshrl.u32 %v2796, 7
  %v2798 = vsub.s32 2, %v2797
  %v2799 = vrot.slane %v2786, %v2798
  %v2800 = vlaneseq
  %v2801 = vshrl.u32 %v2800, 7
  %v2802 = vsub.s32 3, %v2801
  %v2803 = vrot.slane %v2786, %v2802
  %v2808 = vmul.f32 %v2784, %v2791
  %v2809 = vmul.f32 %v2783, %v2795
  %v2810 = vmul.f32 %v2782, %v2799
  %v2811 = vmul.f32 %v2785, %v2803
  %v2812 = vpack.c.bf16 %v2808, %v2808
  %v2813 = vpack.c.bf16 %v2809, %v2809
  %v2814 = vpack.c.bf16 %v2810, %v2810
  %v2815 = vpack.c.bf16 %v2811, %v2811
  %v2820 = vunpack.c.l.b16 %v2812
  %v2821 = vunpack.c.l.b16 %v2813
  %v2822 = vunpack.c.l.b16 %v2814
  %v2823 = vunpack.c.l.b16 %v2815
  %v2824 = vpack.c.b16 %v2821, %v2820
  %v2825 = vpack.c.b16 %v2823, %v2822
  %v2826 = vrot.slane %v2824, 6
  %v2827 = vrot.slane %v2825, 6
  %2830 = vst [vmem:[#allocation2 + $0x30] sm:$0xcc] %v2826
  %2831 = vst [vmem:[#allocation2 + $0x38] sm:$0xcc] %v2827
  %2832 = vrot.lane.b32.xlu0 %v2384, 111
  %v2833 = vpop.permute.xlu0 %2832
  %2834 = vrot.lane.b32.xlu0 %v2385, 111
  %v2835 = vpop.permute.xlu0 %2834
  %2836 = vrot.lane.b32.xlu0 %v2386, 111
  %v2837 = vpop.permute.xlu0 %2836
  %2838 = vrot.lane.b32.xlu0 %v2387, 111
  %v2839 = vpop.permute.xlu0 %2838
  %v2840 = vsel %vm638, %v2837, %v2839
  %v2841 = vsel %vm638, %v2835, %v2837
  %v2842 = vsel %vm638, %v2833, %v2835
  %v2843 = vsel %vm638, %v2839, %v2833
  %v2844 = vld [vmem:[%s643] sm:$0xf]
  %v2846 = vlaneseq
  %v2847 = vshrl.u32 %v2846, 7
  %v2848 = vsub.s32 0, %v2847
  %v2849 = vrot.slane %v2844, %v2848
  %v2850 = vlaneseq
  %v2851 = vshrl.u32 %v2850, 7
  %v2852 = vsub.s32 1, %v2851
  %v2853 = vrot.slane %v2844, %v2852
  %v2854 = vlaneseq
  %v2855 = vshrl.u32 %v2854, 7
  %v2856 = vsub.s32 2, %v2855
  %v2857 = vrot.slane %v2844, %v2856
  %v2858 = vlaneseq
  %v2859 = vshrl.u32 %v2858, 7
  %v2860 = vsub.s32 3, %v2859
  %v2861 = vrot.slane %v2844, %v2860
  %v2866 = vmul.f32 %v2842, %v2849
  %v2867 = vmul.f32 %v2841, %v2853
  %v2868 = vmul.f32 %v2840, %v2857
  %v2869 = vmul.f32 %v2843, %v2861
  %v2870 = vpack.c.bf16 %v2866, %v2866
  %v2871 = vpack.c.bf16 %v2867, %v2867
  %v2872 = vpack.c.bf16 %v2868, %v2868
  %v2873 = vpack.c.bf16 %v2869, %v2869
  %v2878 = vunpack.c.l.b16 %v2870
  %v2879 = vunpack.c.l.b16 %v2871
  %v2880 = vunpack.c.l.b16 %v2872
  %v2881 = vunpack.c.l.b16 %v2873
  %v2882 = vpack.c.b16 %v2879, %v2878
  %v2883 = vpack.c.b16 %v2881, %v2880
  %2886 = vst [vmem:[#allocation2 + $0x40] sm:$0x33] %v2882
  %2887 = vst [vmem:[#allocation2 + $0x48] sm:$0x33] %v2883
  %v2888 = vld [vmem:[%s10] sm:$0x3]
  %v2889 = vld [vmem:[#allocation2] sm:$0xff]
  %v2890 = vld [vmem:[#allocation2 + $0x8] sm:$0xff]
  %v2891 = vld [vmem:[#allocation2 + $0x10] sm:$0xff]
  %v2892 = vld [vmem:[#allocation2 + $0x18] sm:$0xff]
  %v2893 = vld [vmem:[#allocation2 + $0x20] sm:$0xff]
  %v2894 = vld [vmem:[#allocation2 + $0x28] sm:$0xff]
  %v2895 = vld [vmem:[#allocation2 + $0x30] sm:$0xff]
  %v2896 = vld [vmem:[#allocation2 + $0x38] sm:$0xff]
  %v2897 = vld [vmem:[#allocation2 + $0x40] sm:$0x33]
  %v2898 = vld [vmem:[#allocation2 + $0x48] sm:$0x33]
  %v2899 = vld [vmem:[%s11] sm:$0xf]
  %2901 = vset.pattern.permute.xlu0 0
  %2902 = vperm.xlu0 %2901, %v2899
  %v2903 = vpop.permute.xlu0 %2902
  %v2915 = vunpack.c.l.b16 %v2889
  %v2916 = vunpack.c.h.b16 %v2889
  %v2917 = vunpack.c.l.b16 %v2890
  %v2918 = vunpack.c.h.b16 %v2890
  %v2919 = vunpack.c.l.b16 %v2891
  %v2920 = vunpack.c.h.b16 %v2891
  %v2921 = vunpack.c.l.b16 %v2892
  %v2922 = vunpack.c.h.b16 %v2892
  %v2923 = vunpack.c.l.b16 %v2893
  %v2924 = vunpack.c.h.b16 %v2893
  %v2925 = vunpack.c.l.b16 %v2894
  %v2926 = vunpack.c.h.b16 %v2894
  %v2927 = vunpack.c.l.b16 %v2895
  %v2928 = vunpack.c.h.b16 %v2895
  %v2929 = vunpack.c.l.b16 %v2896
  %v2930 = vunpack.c.h.b16 %v2896
  %v2931 = vunpack.c.l.b16 %v2897
  %v2932 = vunpack.c.h.b16 %v2897
  %v2933 = vunpack.c.l.b16 %v2898
  %v2934 = vunpack.c.h.b16 %v2898
  %v2935 = vpack.c.b16 %v2919, %v2915
  %v2936 = vpack.c.b16 %v2920, %v2916
  %v2937 = vpack.c.b16 %v2921, %v2917
  %v2938 = vpack.c.b16 %v2922, %v2918
  %v2939 = vpack.c.b16 %v2927, %v2923
  %v2940 = vpack.c.b16 %v2928, %v2924
  %v2941 = vpack.c.b16 %v2929, %v2925
  %v2942 = vpack.c.b16 %v2930, %v2926
  %v2943 = vpack.c.b16 %v2931, %v2931
  %v2944 = vpack.c.b16 %v2932, %v2932
  %v2945 = vpack.c.b16 %v2933, %v2933
  %v2946 = vpack.c.b16 %v2934, %v2934
  %v2956 = vsel %vm755, %v2888, 0
  %v2959 = vsel %vm71, %v2943, 0
  %v2962 = vsel %vm71, %v2944, 0
  %v2965 = vsel %vm71, %v2945, 0
  %v2968 = vsel %vm71, %v2946, 0
  %2970 = vmatprep.subr.bf16.mxu0 0
  %2971 = vmatpush1.bf16.msra.mxu0 0
  %2972 = vmatprep.subr.bf16.mxu0 0
  %2973 = vmatpush1.bf16.msra.mxu0 0
  %2974 = vmatprep.subr.bf16.mxu0 0
  %2975 = vmatpush1.bf16.msra.mxu0 0
  %2976 = vmatprep.subr.bf16.mxu0 0
  %2977 = vmatpush1.bf16.msra.mxu0 0
  %2978 = vmatprep.subr.bf16.mxu0 0
  %2979 = vmatpush1.bf16.msra.mxu0 0
  %2980 = vmatprep.subr.bf16.mxu0 %v2962
  %2981 = vmatpush1.bf16.msra.mxu0 %v2959
  %2982 = vmatprep.subr.bf16.mxu0 %v2940
  %2983 = vmatpush1.bf16.msra.mxu0 %v2939
  %2984 = vmatprep.subr.bf16.mxu0 %v2936
  %2985 = vmatpush1.bf16.msra.mxu0 %v2935
  %2986 = vmatprep.subr.bf16.mxu0 0
  %2987 = vmatpush2.bf16.msra.mxu0 0
  %2988 = vmatprep.subr.bf16.mxu0 0
  %2989 = vmatpush2.bf16.msra.mxu0 0
  %2990 = vmatprep.subr.bf16.mxu0 0
  %2991 = vmatpush2.bf16.msra.mxu0 0
  %2992 = vmatprep.subr.bf16.mxu0 0
  %2993 = vmatpush2.bf16.msra.mxu0 0
  %2994 = vmatprep.subr.bf16.mxu0 0
  %2995 = vmatpush2.bf16.msra.mxu0 0
  %2996 = vmatprep.subr.bf16.mxu0 0
  %2997 = vmatpush2.bf16.msra.mxu0 0
  %2998 = vmatprep.subr.bf16.mxu0 0
  %2999 = vmatpush2.bf16.msra.mxu0 0
  %3000 = vmatprep.subr.bf16.mxu0 0
  %3001 = vmatpush2.bf16.msra.mxu0 0
  %3002 = vmatprep.mubr.bf16.mxu0 0
  %3003 = vmatmul.mubr.bf16.gmra.mxu0 %v2956
  %v3004 = vpop.f32.mrf.mxu0
  %v3005 = vadd.f32 %v2903, %v3004
  %v3006 = vpop.f32.mrf.mxu0
  %v3007 = vadd.f32 %v2903, %v3006
  %v3008 = vpop.f32.mrf.mxu0
  %v3009 = vpop.f32.mrf.mxu0
  %3010 = vdwg.mxu0
  %3011 = vmatprep.subr.bf16.mxu0 0
  %3012 = vmatpush1.bf16.msra.mxu0 0
  %3013 = vmatprep.subr.bf16.mxu0 0
  %3014 = vmatpush1.bf16.msra.mxu0 0
  %3015 = vmatprep.subr.bf16.mxu0 0
  %3016 = vmatpush1.bf16.msra.mxu0 0
  %3017 = vmatprep.subr.bf16.mxu0 0
  %3018 = vmatpush1.bf16.msra.mxu0 0
  %3019 = vmatprep.subr.bf16.mxu0 0
  %3020 = vmatpush1.bf16.msra.mxu0 0
  %3021 = vmatprep.subr.bf16.mxu0 %v2968
  %3022 = vmatpush1.bf16.msra.mxu0 %v2965
  %3023 = vmatprep.subr.bf16.mxu0 %v2942
  %3024 = vmatpush1.bf16.msra.mxu0 %v2941
  %3025 = vmatprep.subr.bf16.mxu0 %v2938
  %3026 = vmatpush1.bf16.msra.mxu0 %v2937
  %3027 = vmatprep.subr.bf16.mxu0 0
  %3028 = vmatpush2.bf16.msra.mxu0 0
  %3029 = vmatprep.subr.bf16.mxu0 0
  %3030 = vmatpush2.bf16.msra.mxu0 0
  %3031 = vmatprep.subr.bf16.mxu0 0
  %3032 = vmatpush2.bf16.msra.mxu0 0
  %3033 = vmatprep.subr.bf16.mxu0 0
  %3034 = vmatpush2.bf16.msra.mxu0 0
  %3035 = vmatprep.subr.bf16.mxu0 0
  %3036 = vmatpush2.bf16.msra.mxu0 0
  %3037 = vmatprep.subr.bf16.mxu0 0
  %3038 = vmatpush2.bf16.msra.mxu0 0
  %3039 = vmatprep.subr.bf16.mxu0 0
  %3040 = vmatpush2.bf16.msra.mxu0 0
  %3041 = vmatprep.subr.bf16.mxu0 0
  %3042 = vmatpush2.bf16.msra.mxu0 0
  %3043 = vmatprep.mubr.bf16.mxu0 0
  %3044 = vmatmul.mubr.bf16.gmra.mxu0 %v2956
  %v3045 = vpop.f32.mrf.mxu0
  %v3046 = vadd.f32 %v2903, %v3045
  %v3047 = vpop.f32.mrf.mxu0
  %v3048 = vadd.f32 %v2903, %v3047
  %v3049 = vpop.f32.mrf.mxu0
  %v3050 = vpop.f32.mrf.mxu0
  %3051 = vdwg.mxu0
  %v3052 = vadd.f32 %v3005, %v1633
  %v3053 = vadd.f32 %v3007, %v1635
  %v3054 = vadd.f32 %v3046, %v1674
  %v3055 = vadd.f32 %v3048, %v1676
  %v3056 = vmax.f32 %v3052, 0.0
  %v3057 = vmax.f32 %v3053, 0.0
  %v3058 = vmax.f32 %v3054, 0.0
  %v3059 = vmax.f32 %v3055, 0.0
  %v3060 = vsel %vm1468, %v3056, -inf
  %v3061 = vrot.slane %v3060, 4
  %v3062 = vmax.f32 %v3060, %v3061
  %v3063 = vrot.slane %v3062, 2
  %v3064 = vmax.f32 %v3062, %v3063
  %v3065 = vrot.slane %v3064, 1
  %v3066 = vmax.f32 %v3064, %v3065
  %v3067 = vsel %vm1468, %v3057, -inf
  %v3068 = vrot.slane %v3067, 4
  %v3069 = vmax.f32 %v3067, %v3068
  %v3070 = vrot.slane %v3069, 2
  %v3071 = vmax.f32 %v3069, %v3070
  %v3072 = vrot.slane %v3071, 1
  %v3073 = vmax.f32 %v3071, %v3072
  %v3074 = vsel %vm1468, %v3058, -inf
  %v3075 = vrot.slane %v3074, 4
  %v3076 = vmax.f32 %v3074, %v3075
  %v3077 = vrot.slane %v3076, 2
  %v3078 = vmax.f32 %v3076, %v3077
  %v3079 = vrot.slane %v3078, 1
  %v3080 = vmax.f32 %v3078, %v3079
  %v3081 = vsel %vm1468, %v3059, -inf
  %v3082 = vrot.slane %v3081, 4
  %v3083 = vmax.f32 %v3081, %v3082
  %v3084 = vrot.slane %v3083, 2
  %v3085 = vmax.f32 %v3083, %v3084
  %v3086 = vrot.slane %v3085, 1
  %v3087 = vmax.f32 %v3085, %v3086
  %v3088 = vsub.f32 %v3056, %v3066
  %v3089 = vsub.f32 %v3057, %v3073
  %v3090 = vsub.f32 %v3058, %v3080
  %v3091 = vsub.f32 %v3059, %v3087
  %v3092 = vmul.f32 %v3088, 1.442695
  %v3093 = vpow.pop %v3092
  %v3094 = vmul.f32 %v3089, 1.442695
  %v3095 = vpow.pop %v3094
  %v3096 = vmul.f32 %v3090, 1.442695
  %v3097 = vpow.pop %v3096
  %v3098 = vmul.f32 %v3091, 1.442695
  %v3099 = vpow.pop %v3098
  %v3100 = vsel %vm1468, %v3093, 0.0
  %v3101 = vrot.slane %v3100, 4
  %v3102 = vadd.f32 %v3100, %v3101
  %v3103 = vrot.slane %v3102, 2
  %v3104 = vadd.f32 %v3102, %v3103
  %v3105 = vrot.slane %v3104, 1
  %v3106 = vadd.f32 %v3104, %v3105
  %v3107 = vsel %vm1468, %v3095, 0.0
  %v3108 = vrot.slane %v3107, 4
  %v3109 = vadd.f32 %v3107, %v3108
  %v3110 = vrot.slane %v3109, 2
  %v3111 = vadd.f32 %v3109, %v3110
  %v3112 = vrot.slane %v3111, 1
  %v3113 = vadd.f32 %v3111, %v3112
  %v3114 = vsel %vm1468, %v3097, 0.0
  %v3115 = vrot.slane %v3114, 4
  %v3116 = vadd.f32 %v3114, %v3115
  %v3117 = vrot.slane %v3116, 2
  %v3118 = vadd.f32 %v3116, %v3117
  %v3119 = vrot.slane %v3118, 1
  %v3120 = vadd.f32 %v3118, %v3119
  %v3121 = vsel %vm1468, %v3099, 0.0
  %v3122 = vrot.slane %v3121, 4
  %v3123 = vadd.f32 %v3121, %v3122
  %v3124 = vrot.slane %v3123, 2
  %v3125 = vadd.f32 %v3123, %v3124
  %v3126 = vrot.slane %v3125, 1
  %v3127 = vadd.f32 %v3125, %v3126
  %v3128 = vrcp.pop %v3106
  %v3129 = vmul.f32 %v3093, %v3128
  %v3130 = vrcp.pop %v3113
  %v3131 = vmul.f32 %v3095, %v3130
  %v3132 = vrcp.pop %v3120
  %v3133 = vmul.f32 %v3097, %v3132
  %v3134 = vrcp.pop %v3127
  %v3135 = vmul.f32 %v3099, %v3134
  %v3140 = vcombine.low %v3129, %v3131
  %v3141 = vcombine.low %v3133, %v3135
  %3144 = vst [vmem:[%s14] sm:$0xff] %v3140
  %3145 = vst [vmem:[%s14 + $0x8] sm:$0xff] %v3141
  // Predicated region
  $region58: #{masking1_forward.1} parent=0 // pred_check
    _
  $region59: #{masking1_forward.1} parent=0 // pred_check_branch
    %3147 = sbr.rel (0) target = $region61
  $region60: #{masking1_forward.1} parent=0 // pred_region
    _
  $region61: #{masking1_forward.1} parent=0 // pred_fallthru
    _
  // Predicated region
  $region62: #{masking1_forward.1} parent=0 // pred_check
    _
  $region63: #{masking1_forward.1} parent=0 // pred_check_branch
    %3149 = sbr.rel (0) target = $region65
  $region64: #{masking1_forward.1} parent=0 // pred_region
    _
  $region65: #{masking1_forward.1} parent=0 // pred_fallthru
    _

</llo_original>
